<compile_context>
chip_gen: v7x
topology: tpu7x:2x2x1
jax: 0.10.0
libtpu: 0.0.40
codegen_flags: <defaults>
</compile_context>

<pallas_src>
import jax
import jax.numpy as jnp
import numpy as np
from jax import lax
from jax.experimental import pallas as pl
from jax.experimental.pallas import tpu as pltpu

EPS = 1e-5
LANE = 128          # pad channel axes to multiples of 128 (lane-dense stores)
ROW_TARGET = 256    # aim for >=256 spatial rows per matmul (MXU utilisation)


# ----------------------------------------------------------------------------
# helpers (plain JAX glue)
# ----------------------------------------------------------------------------
def _ceil_to(v, m):
    return ((v + m - 1) // m) * m


def _pad_channels(a, cp):
    c = a.shape[-1]
    if c == cp:
        return a
    return jnp.pad(a, [(0, 0)] * (a.ndim - 1) + [(0, cp - c)])


def _pick_group(n, rows, target=ROW_TARGET):
    """Images per block: smallest divisor of n with >= target rows per matmul."""
    for d in range(1, n + 1):
        if n % d == 0 and d * rows >= target:
            return d
    return n


def _prep_weight_3x3(w_oihw, cin_p, cout_p):
    """(O, I, 3, 3) -> (9, cin_p, cout_p) bf16, tap index t = dy*3 + dx."""
    o, i = w_oihw.shape[0], w_oihw.shape[1]
    w = jnp.transpose(w_oihw, (2, 3, 1, 0)).reshape(9, i, o)
    w = jnp.pad(w, ((0, 0), (0, cin_p - i), (0, cout_p - o)))
    return w.astype(jnp.bfloat16)


def _prep_weight_1x1(w_oihw, cin_p, cout_p):
    o, i = w_oihw.shape[0], w_oihw.shape[1]
    w = w_oihw[:, :, 0, 0].T.reshape(1, i, o)
    w = jnp.pad(w, ((0, 0), (0, cin_p - i), (0, cout_p - o)))
    return w.astype(jnp.bfloat16)


def _phase_split(x, s, ho, wo):
    """Zero-pad (pad=1) and split NHWC x into s*s phase grids (unit-stride taps).

    One cheap XLA strided-slice copy replaces the 9x im2col blow-up.
    TODO(synk): could be folded into the kernel via strided DMA index maps.
    """
    n, h, w, c = x.shape
    hq = -(-(s * (ho - 1) + 3) // s)
    wq = -(-(s * (wo - 1) + 3) // s)
    xp = jnp.pad(x, ((0, 0), (1, s * hq - h - 1), (1, s * wq - w - 1), (0, 0)))
    return [xp[:, py::s, px::s, :] for py in range(s) for px in range(s)]


def _bn_scale_shift(sums, ssqs, gamma, beta, count, cp):
    """Finalize BN affine from fused per-group sums.  Tiny (C-sized) math.

    TODO(synk): per-channel finalization kept in plain-JAX glue (it touches
    only O(C) values); the heavy per-element reductions run inside the convs.
    """
    s = jnp.sum(sums, axis=(0, 1))
    q = jnp.sum(ssqs, axis=(0, 1))
    mean = s / count
    var = jnp.maximum(q / count - mean * mean, 0.0)   # f32, clamped (no cancellation blow-up)
    g = _pad_channels(gamma.reshape(1, -1).astype(jnp.float32), cp)[0]
    b = _pad_channels(beta.reshape(1, -1).astype(jnp.float32), cp)[0]
    scale = g * lax.rsqrt(var + EPS)
    shift = b - mean * scale
    return scale, shift


# ----------------------------------------------------------------------------
# Pallas kernels
# ----------------------------------------------------------------------------
def _make_conv_kernel(*, G, Ho, Wo, Cin, Cout, taps, use_pad_scratch,
                      apply_affine_relu, n_inputs):
    """Fused conv kernel: optional input affine+ReLU (previous BN), in-VMEM
    zero padding, `len(taps)` shifted-window matmuls (bf16 operands, f32
    accumulate), and per-channel sum / sum^2 side outputs for BN statistics."""

    def kernel(*refs):
        i = 0
        x_refs = refs[i:i + n_inputs]
        i += n_inputs
        if apply_affine_relu:
            s_ref, b_ref = refs[i], refs[i + 1]
            i += 2
        w_ref = refs[i]
        i += 1
        y_ref, sum_ref, ssq_ref = refs[i:i + 3]
        i += 3
        pad_ref = refs[i] if use_pad_scratch else None

        if use_pad_scratch:
            # Build the zero-padded (pad=1) image band in VMEM.  Applying the
            # previous BN affine + ReLU *before* writing keeps the halo zeros
            # correct, so no standalone elementwise pass is needed.
            x = x_refs[0][...]                                   # (G, Hi, Wi, Cin) f32
            hi, wi = x.shape[1], x.shape[2]
            if apply_affine_relu:
                x = jnp.maximum(x * s_ref[...] + b_ref[...], 0.0)
            pad_ref[...] = jnp.zeros_like(pad_ref)
            pad_ref[:, 1:hi + 1, 1:wi + 1, :] = x.astype(pad_ref.dtype)

        acc = jnp.zeros((G * Ho * Wo, Cout), jnp.float32)
        for (src, dy, dx, wi_idx) in taps:
            if src == "pad":
                win = pad_ref[:, dy:dy + Ho, dx:dx + Wo, :]       # bf16 already
            else:
                win = x_refs[src][:, dy:dy + Ho, dx:dx + Wo, :]
                if apply_affine_relu:
                    win = jnp.maximum(win * s_ref[...] + b_ref[...], 0.0)
                win = win.astype(jnp.bfloat16)
            win = win.reshape(G * Ho * Wo, Cin)
            acc = acc + jnp.dot(win, w_ref[wi_idx],
                                preferred_element_type=jnp.float32)

        y_ref[...] = acc.reshape(G, Ho, Wo, Cout)
        sum_ref[...] = jnp.sum(acc, axis=0).reshape(1, 1, Cout)
        ssq_ref[...] = jnp.sum(acc * acc, axis=0).reshape(1, 1, Cout)

    return kernel


def _bn_add_relu_kernel(y_ref, ys_ref, yb_ref, r_ref, rs_ref, rb_ref, o_ref):
    """o = relu( bn2(y) + bn_shortcut(r) ) — fused final epilogue."""
    y = y_ref[...] * ys_ref[...] + yb_ref[...]
    r = r_ref[...] * rs_ref[...] + rb_ref[...]
    o_ref[...] = jnp.maximum(y + r, 0.0)


# ----------------------------------------------------------------------------
# pallas_call wrappers
# ----------------------------------------------------------------------------
def conv_block(inputs, w, *, Ho, Wo, taps, use_pad_scratch=False,
               scale=None, shift=None):
    """Run the fused conv kernel.  Returns (y, channel_sums, channel_sumsq)."""
    N = inputs[0].shape[0]
    T, Cin, Cout = w.shape
    apply_affine = scale is not None
    G = _pick_group(N, Ho * Wo)
    groups = N // G

    args, in_specs = [], []
    for a in inputs:
        _, hi, wi, ca = a.shape
        args.append(a)
        in_specs.append(pl.BlockSpec((G, hi, wi, ca), lambda n: (n, 0, 0, 0)))
    if apply_affine:
        args += [scale.reshape(1, Cin).astype(jnp.float32),
                 shift.reshape(1, Cin).astype(jnp.float32)]
        in_specs += [pl.BlockSpec((1, Cin), lambda n: (0, 0))] * 2
    args.append(w)
    in_specs.append(pl.BlockSpec((T, Cin, Cout), lambda n: (0, 0, 0)))

    out_shape = (jax.ShapeDtypeStruct((N, Ho, Wo, Cout), jnp.float32),
                 jax.ShapeDtypeStruct((groups, 1, Cout), jnp.float32),
                 jax.ShapeDtypeStruct((groups, 1, Cout), jnp.float32))
    out_specs = (pl.BlockSpec((G, Ho, Wo, Cout), lambda n: (n, 0, 0, 0)),
                 pl.BlockSpec((1, 1, Cout), lambda n: (n, 0, 0)),
                 pl.BlockSpec((1, 1, Cout), lambda n: (n, 0, 0)))

    scratch_shapes = []
    if use_pad_scratch:
        hi, wi = inputs[0].shape[1], inputs[0].shape[2]
        # bf16 scratch halves VMEM pressure; matmul operand is already cast.
        scratch_shapes.append(pltpu.VMEM((G, hi + 2, wi + 2, Cin), jnp.bfloat16))

    kernel = _make_conv_kernel(G=G, Ho=Ho, Wo=Wo, Cin=Cin, Cout=Cout, taps=taps,
                               use_pad_scratch=use_pad_scratch,
                               apply_affine_relu=apply_affine,
                               n_inputs=len(inputs))

    rows = N * Ho * Wo
    bytes_in = sum(int(np.prod(a.shape)) * a.dtype.itemsize for a in args)
    cost = pl.CostEstimate(flops=2 * rows * Cin * Cout * len(taps),
                           transcendentals=0,
                           bytes_accessed=bytes_in + rows * Cout * 4)

    # NOTE: per-image/group blocks keep the working set small (f32 in + bf16
    # padded scratch + f32 out) so the default scoped VMEM limit is enough even
    # on v7x's 64 MiB; for production spatial sizes tile rows further or set
    # pltpu.CompilerParams(vmem_limit_bytes=...).
    return pl.pallas_call(
        kernel,
        out_shape=out_shape,
        grid=(groups,),
        in_specs=in_specs,
        out_specs=out_specs,
        scratch_shapes=scratch_shapes,
        compiler_params=pltpu.CompilerParams(dimension_semantics=("parallel",)),
        cost_estimate=cost,
    )(*args)


def bn_add_relu(y, ys, yb, r, rs, rb):
    N, Ho, Wo, C = y.shape
    vec = lambda v: v.reshape(1, C).astype(jnp.float32)
    vspec = pl.BlockSpec((1, C), lambda n: (0, 0))
    bspec = pl.BlockSpec((1, Ho, Wo, C), lambda n: (n, 0, 0, 0))
    return pl.pallas_call(
        _bn_add_relu_kernel,
        out_shape=jax.ShapeDtypeStruct((N, Ho, Wo, C), jnp.float32),
        grid=(N,),
        in_specs=[bspec, vspec, vspec, bspec, vspec, vspec],
        out_specs=bspec,
        compiler_params=pltpu.CompilerParams(dimension_semantics=("parallel",)),
    )(y, vec(ys), vec(yb), r, vec(rs), vec(rb))


# ----------------------------------------------------------------------------
# BasicBlock forward
# ----------------------------------------------------------------------------
def basicblock_forward(x_nchw, params, stride):
    """x_nchw: (N, Cin, H, W) f32.  Returns (N, planes, Ho, Wo) f32."""
    N, Cin, H, W = x_nchw.shape
    planes = params["w1"].shape[0]
    proj = (stride != 1) or (Cin != planes)
    cin_p = _ceil_to(Cin, LANE)
    cpl = _ceil_to(planes, LANE)

    Ho = (H + 2 - 3) // stride + 1
    Wo = (W + 2 - 3) // stride + 1
    count = float(N * Ho * Wo)

    # NCHW -> NHWC with channels padded to 128 lanes (stripped at the end).
    # TODO(synk): when chaining blocks, keep NHWC end-to-end to drop these.
    x = _pad_channels(jnp.transpose(x_nchw, (0, 2, 3, 1)), cin_p)

    w1 = _prep_weight_3x3(params["w1"], cin_p, cpl)
    w2 = _prep_weight_3x3(params["w2"], cpl, cpl)

    taps_s1 = [("pad", dy, dx, dy * 3 + dx) for dy in range(3) for dx in range(3)]

    # ---- conv1 (3x3, stride, pad=1) -----------------------------------------
    phases = None
    if stride == 1:
        y1, sum1, ssq1 = conv_block([x], w1, Ho=Ho, Wo=Wo, taps=taps_s1,
                                    use_pad_scratch=True)
    else:
        phases = _phase_split(x, stride, Ho, Wo)
        taps = [((dy % stride) * stride + (dx % stride), dy // stride,
                 dx // stride, dy * 3 + dx)
                for dy in range(3) for dx in range(3)]
        y1, sum1, ssq1 = conv_block(phases, w1, Ho=Ho, Wo=Wo, taps=taps)
    s1, b1 = _bn_scale_shift(sum1, ssq1, params["g1"], params["b1"], count, cpl)

    # ---- conv2 (3x3, stride 1): bn1 + ReLU folded into its input affine -----
    y2, sum2, ssq2 = conv_block([y1], w2, Ho=Ho, Wo=Wo, taps=taps_s1,
                                use_pad_scratch=True, scale=s1, shift=b1)
    s2, b2 = _bn_scale_shift(sum2, ssq2, params["g2"], params["b2"], count, cpl)

    # ---- shortcut -------------------------------------------------------------
    if proj:
        wsc = _prep_weight_1x1(params["wsc"], cin_p, cpl)
        if stride == 1:
            sc_in = x
        else:
            # x[:, ::s, ::s, :] is exactly phase (1, 1) of the padded input,
            # so the strided gather is folded into the kernel's window slice.
            sc_in = phases[1 * stride + 1]
        ysc, sumsc, ssqsc = conv_block([sc_in], wsc, Ho=Ho, Wo=Wo,
                                       taps=[(0, 0, 0, 0)])
        ss, bs = _bn_scale_shift(sumsc, ssqsc, params["gsc"], params["bsc"],
                                 count, cpl)
    else:
        # identity shortcut: proj == False implies stride == 1 and Cin == planes
        ysc = x
        ss = jnp.ones((cpl,), jnp.float32)
        bs = jnp.zeros((cpl,), jnp.float32)

    # ---- bn2 + residual add + ReLU (fused epilogue) ---------------------------
    out = bn_add_relu(y2, s2, b2, ysc, ss, bs)
    out = out[..., :planes]
    return jnp.transpose(out, (0, 3, 1, 2))


# ----------------------------------------------------------------------------
# Pure-JAX reference (lax.conv) for a numerical sanity check
# ----------------------------------------------------------------------------
def ref_forward(x, params, stride):
    def conv(a, w, s, pad):
        return lax.conv_general_dilated(
            a, w, (s, s), pad, dimension_numbers=("NCHW", "OIHW", "NCHW"))

    def bn(a, g, b):
        m = a.mean(axis=(0, 2, 3), keepdims=True)
        v = ((a - m) ** 2).mean(axis=(0, 2, 3), keepdims=True)
        return ((a - m) / jnp.sqrt(v + EPS) * g.reshape(1, -1, 1, 1)
                + b.reshape(1, -1, 1, 1))

    out = jax.nn.relu(bn(conv(x, params["w1"], stride, [(1, 1), (1, 1)]),
                         params["g1"], params["b1"]))
    out = bn(conv(out, params["w2"], 1, [(1, 1), (1, 1)]),
             params["g2"], params["b2"])
    in_planes, planes = x.shape[1], params["w1"].shape[0]
    if stride != 1 or in_planes != planes:
        sc = bn(conv(x, params["wsc"], stride, "VALID"),
                params["gsc"], params["bsc"])
    else:
        sc = x
    return jax.nn.relu(out + sc)


def make_params(key, in_planes, planes, stride):
    ks = jax.random.split(key, 3)

    def conv_w(k, out_c, in_c, kh, kw):
        bound = 1.0 / np.sqrt(in_c * kh * kw)
        return jax.random.uniform(k, (out_c, in_c, kh, kw), jnp.float32,
                                  -bound, bound)

    p = {
        "w1": conv_w(ks[0], planes, in_planes, 3, 3),
        "w2": conv_w(ks[1], planes, planes, 3, 3),
        "g1": jnp.ones((planes,), jnp.float32),
        "b1": jnp.zeros((planes,), jnp.float32),
        "g2": jnp.ones((planes,), jnp.float32),
        "b2": jnp.zeros((planes,), jnp.float32),
    }
    if stride != 1 or in_planes != planes:
        p["wsc"] = conv_w(ks[2], planes, in_planes, 1, 1)
        p["gsc"] = jnp.ones((planes,), jnp.float32)
        p["bsc"] = jnp.zeros((planes,), jnp.float32)
    return p


if __name__ == "__main__":
    key = jax.random.PRNGKey(0)
    # (N, in_planes, planes, H, W, stride): exercises projection-by-channels,
    # projection-by-stride (phase path), and the identity shortcut.
    cases = [
        (2, 16, 32, 16, 16, 1),
        (2, 16, 16, 16, 16, 2),
        (2, 16, 16, 16, 16, 1),
    ]
    for idx, (N, cin, planes, H, W, stride) in enumerate(cases):
        kx, kp, key = jax.random.split(key, 3)
        x = jax.random.normal(kx, (N, cin, H, W), jnp.float32)
        params = make_params(kp, cin, planes, stride)

        out = jax.block_until_ready(basicblock_forward(x, params, stride))
        ref = jax.block_until_ready(ref_forward(x, params, stride))
        assert out.shape == ref.shape, (out.shape, ref.shape)

        # bf16 MXU operands (f32 accumulate / f32 BN math) => allow a few e-2
        # of slack on O(1)-magnitude outputs; structural bugs would be O(1).
        if not np.allclose(np.asarray(out), np.asarray(ref),
                           rtol=5e-2, atol=5e-2):
            err = float(jnp.max(jnp.abs(out - ref)))
            raise AssertionError(f"case {idx}: mismatch, max abs err {err}")
    print("KERNEL_OK")
</pallas_src>

<mosaic_0001>
module attributes {stable_mosaic.version = 11 : i64} {
  func.func @kernel(%arg0: i32, %arg1: memref<1x16x16x128xf32, #tpu.memory_space<vmem>>, %arg2: memref<9x128x128xbf16, #tpu.memory_space<vmem>>, %arg3: memref<1x16x16x128xf32, #tpu.memory_space<vmem>>, %arg4: memref<1x1x128xf32, #tpu.memory_space<vmem>>, %arg5: memref<1x1x128xf32, #tpu.memory_space<vmem>>, %arg6: memref<1x18x18x128xbf16, #tpu.memory_space<vmem>>) attributes {dimension_semantics = [#tpu.dimension_semantics<parallel>], iteration_bounds = array<i64: 2>, scalar_prefetch = 0 : i64, scratch_operands = 1 : i64, tpu.core_type = #tpu.core_type<tc>, window_params = [{transform_indices = @transform_0, window_bounds = array<i64: 1, 16, 16, 128>}, {pipeline_mode = #tpu.pipeline_mode<synchronous>, transform_indices = @transform_1, window_bounds = array<i64: 9, 128, 128>}, {transform_indices = @transform_2, window_bounds = array<i64: 1, 16, 16, 128>}, {transform_indices = @transform_3, window_bounds = array<i64: 1, 1, 128>}, {transform_indices = @transform_4, window_bounds = array<i64: 1, 1, 128>}]} {
    %c0 = arith.constant 0 : index
    %c0_0 = arith.constant 0 : index
    %c0_1 = arith.constant 0 : index
    %c0_2 = arith.constant 0 : index
    %0 = vector.load %arg1[%c0, %c0_0, %c0_1, %c0_2] : memref<1x16x16x128xf32, #tpu.memory_space<vmem>>, vector<1x16x16x128xf32>
    %cst = arith.constant 0.000000e+00 : bf16
    %1 = vector.broadcast %cst : bf16 to vector<1x18x18x128xbf16>
    %c0_3 = arith.constant 0 : index
    %c0_4 = arith.constant 0 : index
    %c0_5 = arith.constant 0 : index
    %c0_6 = arith.constant 0 : index
    %2 = vector.load %arg6[%c0_3, %c0_4, %c0_5, %c0_6] : memref<1x18x18x128xbf16, #tpu.memory_space<vmem>>, vector<1x18x18x128xbf16>
    tpu.vector_store %arg6[%c0_3, %c0_4, %c0_5, %c0_6], %1 {strides = array<i32>} : memref<1x18x18x128xbf16, #tpu.memory_space<vmem>>, vector<1x18x18x128xbf16>,
    %3 = arith.truncf %0 : vector<1x16x16x128xf32> to vector<1x16x16x128xbf16>
    %c0_7 = arith.constant 0 : index
    %c1 = arith.constant 1 : index
    %c1_8 = arith.constant 1 : index
    %c0_9 = arith.constant 0 : index
    %4 = vector.load %arg6[%c0_7, %c1, %c1_8, %c0_9] : memref<1x18x18x128xbf16, #tpu.memory_space<vmem>>, vector<1x16x16x128xbf16>
    tpu.vector_store %arg6[%c0_7, %c1, %c1_8, %c0_9], %3 {strides = array<i32>} : memref<1x18x18x128xbf16, #tpu.memory_space<vmem>>, vector<1x16x16x128xbf16>,
    %cst_10 = arith.constant 0.000000e+00 : f32
    %5 = vector.broadcast %cst_10 : f32 to vector<256x128xf32>
    %c0_11 = arith.constant 0 : index
    %c0_12 = arith.constant 0 : index
    %c0_13 = arith.constant 0 : index
    %c0_14 = arith.constant 0 : index
    %6 = vector.load %arg6[%c0_11, %c0_12, %c0_13, %c0_14] : memref<1x18x18x128xbf16, #tpu.memory_space<vmem>>, vector<1x16x16x128xbf16>
    %7 = vector.shape_cast %6 : vector<1x16x16x128xbf16> to vector<256x128xbf16>
    %c0_15 = arith.constant 0 : index
    %c0_16 = arith.constant 0 : index
    %c0_17 = arith.constant 0 : index
    %8 = vector.load %arg2[%c0_15, %c0_16, %c0_17] : memref<9x128x128xbf16, #tpu.memory_space<vmem>>, vector<1x128x128xbf16>
    %9 = vector.shape_cast %8 : vector<1x128x128xbf16> to vector<128x128xbf16>
    %cst_18 = arith.constant dense<0.000000e+00> : vector<256x128xf32>
    %10 = tpu.matmul %7, %9, %cst_18 {dimension_numbers = #tpu.dot_dimension_numbers<[1], [0], [0], [1], [0, 0, 1, 1], [], []>} : vector<256x128xbf16>, vector<128x128xbf16>, vector<256x128xf32> -> vector<256x128xf32>
    %11 = arith.addf %5, %10 : vector<256x128xf32>
    %c0_19 = arith.constant 0 : index
    %c0_20 = arith.constant 0 : index
    %c1_21 = arith.constant 1 : index
    %c0_22 = arith.constant 0 : index
    %12 = vector.load %arg6[%c0_19, %c0_20, %c1_21, %c0_22] : memref<1x18x18x128xbf16, #tpu.memory_space<vmem>>, vector<1x16x16x128xbf16>
    %13 = vector.shape_cast %12 : vector<1x16x16x128xbf16> to vector<256x128xbf16>
    %c1_23 = arith.constant 1 : index
    %c0_24 = arith.constant 0 : index
    %c0_25 = arith.constant 0 : index
    %14 = vector.load %arg2[%c1_23, %c0_24, %c0_25] : memref<9x128x128xbf16, #tpu.memory_space<vmem>>, vector<1x128x128xbf16>
    %15 = vector.shape_cast %14 : vector<1x128x128xbf16> to vector<128x128xbf16>
    %cst_26 = arith.constant dense<0.000000e+00> : vector<256x128xf32>
    %16 = tpu.matmul %13, %15, %cst_26 {dimension_numbers = #tpu.dot_dimension_numbers<[1], [0], [0], [1], [0, 0, 1, 1], [], []>} : vector<256x128xbf16>, vector<128x128xbf16>, vector<256x128xf32> -> vector<256x128xf32>
    %17 = arith.addf %11, %16 : vector<256x128xf32>
    %c0_27 = arith.constant 0 : index
    %c0_28 = arith.constant 0 : index
    %c2 = arith.constant 2 : index
    %c0_29 = arith.constant 0 : index
    %18 = vector.load %arg6[%c0_27, %c0_28, %c2, %c0_29] : memref<1x18x18x128xbf16, #tpu.memory_space<vmem>>, vector<1x16x16x128xbf16>
    %19 = vector.shape_cast %18 : vector<1x16x16x128xbf16> to vector<256x128xbf16>
    %c2_30 = arith.constant 2 : index
    %c0_31 = arith.constant 0 : index
    %c0_32 = arith.constant 0 : index
    %20 = vector.load %arg2[%c2_30, %c0_31, %c0_32] : memref<9x128x128xbf16, #tpu.memory_space<vmem>>, vector<1x128x128xbf16>
    %21 = vector.shape_cast %20 : vector<1x128x128xbf16> to vector<128x128xbf16>
    %cst_33 = arith.constant dense<0.000000e+00> : vector<256x128xf32>
    %22 = tpu.matmul %19, %21, %cst_33 {dimension_numbers = #tpu.dot_dimension_numbers<[1], [0], [0], [1], [0, 0, 1, 1], [], []>} : vector<256x128xbf16>, vector<128x128xbf16>, vector<256x128xf32> -> vector<256x128xf32>
    %23 = arith.addf %17, %22 : vector<256x128xf32>
    %c0_34 = arith.constant 0 : index
    %c1_35 = arith.constant 1 : index
    %c0_36 = arith.constant 0 : index
    %c0_37 = arith.constant 0 : index
    %24 = vector.load %arg6[%c0_34, %c1_35, %c0_36, %c0_37] : memref<1x18x18x128xbf16, #tpu.memory_space<vmem>>, vector<1x16x16x128xbf16>
    %25 = vector.shape_cast %24 : vector<1x16x16x128xbf16> to vector<256x128xbf16>
    %c3 = arith.constant 3 : index
    %c0_38 = arith.constant 0 : index
    %c0_39 = arith.constant 0 : index
    %26 = vector.load %arg2[%c3, %c0_38, %c0_39] : memref<9x128x128xbf16, #tpu.memory_space<vmem>>, vector<1x128x128xbf16>
    %27 = vector.shape_cast %26 : vector<1x128x128xbf16> to vector<128x128xbf16>
    %cst_40 = arith.constant dense<0.000000e+00> : vector<256x128xf32>
    %28 = tpu.matmul %25, %27, %cst_40 {dimension_numbers = #tpu.dot_dimension_numbers<[1], [0], [0], [1], [0, 0, 1, 1], [], []>} : vector<256x128xbf16>, vector<128x128xbf16>, vector<256x128xf32> -> vector<256x128xf32>
    %29 = arith.addf %23, %28 : vector<256x128xf32>
    %c0_41 = arith.constant 0 : index
    %c1_42 = arith.constant 1 : index
    %c1_43 = arith.constant 1 : index
    %c0_44 = arith.constant 0 : index
    %30 = vector.load %arg6[%c0_41, %c1_42, %c1_43, %c0_44] : memref<1x18x18x128xbf16, #tpu.memory_space<vmem>>, vector<1x16x16x128xbf16>
    %31 = vector.shape_cast %30 : vector<1x16x16x128xbf16> to vector<256x128xbf16>
    %c4 = arith.constant 4 : index
    %c0_45 = arith.constant 0 : index
    %c0_46 = arith.constant 0 : index
    %32 = vector.load %arg2[%c4, %c0_45, %c0_46] : memref<9x128x128xbf16, #tpu.memory_space<vmem>>, vector<1x128x128xbf16>
    %33 = vector.shape_cast %32 : vector<1x128x128xbf16> to vector<128x128xbf16>
    %cst_47 = arith.constant dense<0.000000e+00> : vector<256x128xf32>
    %34 = tpu.matmul %31, %33, %cst_47 {dimension_numbers = #tpu.dot_dimension_numbers<[1], [0], [0], [1], [0, 0, 1, 1], [], []>} : vector<256x128xbf16>, vector<128x128xbf16>, vector<256x128xf32> -> vector<256x128xf32>
    %35 = arith.addf %29, %34 : vector<256x128xf32>
    %c0_48 = arith.constant 0 : index
    %c1_49 = arith.constant 1 : index
    %c2_50 = arith.constant 2 : index
    %c0_51 = arith.constant 0 : index
    %36 = vector.load %arg6[%c0_48, %c1_49, %c2_50, %c0_51] : memref<1x18x18x128xbf16, #tpu.memory_space<vmem>>, vector<1x16x16x128xbf16>
    %37 = vector.shape_cast %36 : vector<1x16x16x128xbf16> to vector<256x128xbf16>
    %c5 = arith.constant 5 : index
    %c0_52 = arith.constant 0 : index
    %c0_53 = arith.constant 0 : index
    %38 = vector.load %arg2[%c5, %c0_52, %c0_53] : memref<9x128x128xbf16, #tpu.memory_space<vmem>>, vector<1x128x128xbf16>
    %39 = vector.shape_cast %38 : vector<1x128x128xbf16> to vector<128x128xbf16>
    %cst_54 = arith.constant dense<0.000000e+00> : vector<256x128xf32>
    %40 = tpu.matmul %37, %39, %cst_54 {dimension_numbers = #tpu.dot_dimension_numbers<[1], [0], [0], [1], [0, 0, 1, 1], [], []>} : vector<256x128xbf16>, vector<128x128xbf16>, vector<256x128xf32> -> vector<256x128xf32>
    %41 = arith.addf %35, %40 : vector<256x128xf32>
    %c0_55 = arith.constant 0 : index
    %c2_56 = arith.constant 2 : index
    %c0_57 = arith.constant 0 : index
    %c0_58 = arith.constant 0 : index
    %42 = vector.load %arg6[%c0_55, %c2_56, %c0_57, %c0_58] : memref<1x18x18x128xbf16, #tpu.memory_space<vmem>>, vector<1x16x16x128xbf16>
    %43 = vector.shape_cast %42 : vector<1x16x16x128xbf16> to vector<256x128xbf16>
    %c6 = arith.constant 6 : index
    %c0_59 = arith.constant 0 : index
    %c0_60 = arith.constant 0 : index
    %44 = vector.load %arg2[%c6, %c0_59, %c0_60] : memref<9x128x128xbf16, #tpu.memory_space<vmem>>, vector<1x128x128xbf16>
    %45 = vector.shape_cast %44 : vector<1x128x128xbf16> to vector<128x128xbf16>
    %cst_61 = arith.constant dense<0.000000e+00> : vector<256x128xf32>
    %46 = tpu.matmul %43, %45, %cst_61 {dimension_numbers = #tpu.dot_dimension_numbers<[1], [0], [0], [1], [0, 0, 1, 1], [], []>} : vector<256x128xbf16>, vector<128x128xbf16>, vector<256x128xf32> -> vector<256x128xf32>
    %47 = arith.addf %41, %46 : vector<256x128xf32>
    %c0_62 = arith.constant 0 : index
    %c2_63 = arith.constant 2 : index
    %c1_64 = arith.constant 1 : index
    %c0_65 = arith.constant 0 : index
    %48 = vector.load %arg6[%c0_62, %c2_63, %c1_64, %c0_65] : memref<1x18x18x128xbf16, #tpu.memory_space<vmem>>, vector<1x16x16x128xbf16>
    %49 = vector.shape_cast %48 : vector<1x16x16x128xbf16> to vector<256x128xbf16>
    %c7 = arith.constant 7 : index
    %c0_66 = arith.constant 0 : index
    %c0_67 = arith.constant 0 : index
    %50 = vector.load %arg2[%c7, %c0_66, %c0_67] : memref<9x128x128xbf16, #tpu.memory_space<vmem>>, vector<1x128x128xbf16>
    %51 = vector.shape_cast %50 : vector<1x128x128xbf16> to vector<128x128xbf16>
    %cst_68 = arith.constant dense<0.000000e+00> : vector<256x128xf32>
    %52 = tpu.matmul %49, %51, %cst_68 {dimension_numbers = #tpu.dot_dimension_numbers<[1], [0], [0], [1], [0, 0, 1, 1], [], []>} : vector<256x128xbf16>, vector<128x128xbf16>, vector<256x128xf32> -> vector<256x128xf32>
    %53 = arith.addf %47, %52 : vector<256x128xf32>
    %c0_69 = arith.constant 0 : index
    %c2_70 = arith.constant 2 : index
    %c2_71 = arith.constant 2 : index
    %c0_72 = arith.constant 0 : index
    %54 = vector.load %arg6[%c0_69, %c2_70, %c2_71, %c0_72] : memref<1x18x18x128xbf16, #tpu.memory_space<vmem>>, vector<1x16x16x128xbf16>
    %55 = vector.shape_cast %54 : vector<1x16x16x128xbf16> to vector<256x128xbf16>
    %c8 = arith.constant 8 : index
    %c0_73 = arith.constant 0 : index
    %c0_74 = arith.constant 0 : index
    %56 = vector.load %arg2[%c8, %c0_73, %c0_74] : memref<9x128x128xbf16, #tpu.memory_space<vmem>>, vector<1x128x128xbf16>
    %57 = vector.shape_cast %56 : vector<1x128x128xbf16> to vector<128x128xbf16>
    %cst_75 = arith.constant dense<0.000000e+00> : vector<256x128xf32>
    %58 = tpu.matmul %55, %57, %cst_75 {dimension_numbers = #tpu.dot_dimension_numbers<[1], [0], [0], [1], [0, 0, 1, 1], [], []>} : vector<256x128xbf16>, vector<128x128xbf16>, vector<256x128xf32> -> vector<256x128xf32>
    %59 = arith.addf %53, %58 : vector<256x128xf32>
    %60 = vector.shape_cast %59 : vector<256x128xf32> to vector<1x16x16x128xf32>
    %c0_76 = arith.constant 0 : index
    %c0_77 = arith.constant 0 : index
    %c0_78 = arith.constant 0 : index
    %c0_79 = arith.constant 0 : index
    %61 = vector.load %arg3[%c0_76, %c0_77, %c0_78, %c0_79] : memref<1x16x16x128xf32, #tpu.memory_space<vmem>>, vector<1x16x16x128xf32>
    tpu.vector_store %arg3[%c0_76, %c0_77, %c0_78, %c0_79], %60 {strides = array<i32>} : memref<1x16x16x128xf32, #tpu.memory_space<vmem>>, vector<1x16x16x128xf32>,
    %cst_80 = arith.constant dense<0.000000e+00> : vector<128xf32>
    %62 = vector.multi_reduction <add>, %59, %cst_80 [0] : vector<256x128xf32> to vector<128xf32>
    %63 = vector.shape_cast %62 : vector<128xf32> to vector<1x1x128xf32>
    %c0_81 = arith.constant 0 : index
    %c0_82 = arith.constant 0 : index
    %c0_83 = arith.constant 0 : index
    %64 = vector.load %arg4[%c0_81, %c0_82, %c0_83] : memref<1x1x128xf32, #tpu.memory_space<vmem>>, vector<1x1x128xf32>
    tpu.vector_store %arg4[%c0_81, %c0_82, %c0_83], %63 {strides = array<i32>} : memref<1x1x128xf32, #tpu.memory_space<vmem>>, vector<1x1x128xf32>,
    %65 = arith.mulf %59, %59 : vector<256x128xf32>
    %cst_84 = arith.constant dense<0.000000e+00> : vector<128xf32>
    %66 = vector.multi_reduction <add>, %65, %cst_84 [0] : vector<256x128xf32> to vector<128xf32>
    %67 = vector.shape_cast %66 : vector<128xf32> to vector<1x1x128xf32>
    %c0_85 = arith.constant 0 : index
    %c0_86 = arith.constant 0 : index
    %c0_87 = arith.constant 0 : index
    %68 = vector.load %arg5[%c0_85, %c0_86, %c0_87] : memref<1x1x128xf32, #tpu.memory_space<vmem>>, vector<1x1x128xf32>
    tpu.vector_store %arg5[%c0_85, %c0_86, %c0_87], %67 {strides = array<i32>} : memref<1x1x128xf32, #tpu.memory_space<vmem>>, vector<1x1x128xf32>,
    return
  }
  func.func @transform_0(%arg0: i32) -> (i32, i32, i32, i32) {
    %c0_i32 = arith.constant 0 : i32
    %c0_i32_0 = arith.constant 0 : i32
    %c0_i32_1 = arith.constant 0 : i32
    %c0_i32_2 = arith.constant 0 : i32
    return %arg0, %c0_i32, %c0_i32_0, %c0_i32_1 : i32, i32, i32, i32
  }
  func.func @transform_1(%arg0: i32) -> (i32, i32, i32) {
    %c0_i32 = arith.constant 0 : i32
    %c0_i32_0 = arith.constant 0 : i32
    %c0_i32_1 = arith.constant 0 : i32
    %c0_i32_2 = arith.constant 0 : i32
    return %c0_i32, %c0_i32_0, %c0_i32_1 : i32, i32, i32
  }
  func.func @transform_2(%arg0: i32) -> (i32, i32, i32, i32) {
    %c0_i32 = arith.constant 0 : i32
    %c0_i32_0 = arith.constant 0 : i32
    %c0_i32_1 = arith.constant 0 : i32
    %c0_i32_2 = arith.constant 0 : i32
    return %arg0, %c0_i32, %c0_i32_0, %c0_i32_1 : i32, i32, i32, i32
  }
  func.func @transform_3(%arg0: i32) -> (i32, i32, i32) {
    %c0_i32 = arith.constant 0 : i32
    %c0_i32_0 = arith.constant 0 : i32
    %c0_i32_1 = arith.constant 0 : i32
    return %arg0, %c0_i32, %c0_i32_0 : i32, i32, i32
  }
  func.func @transform_4(%arg0: i32) -> (i32, i32, i32) {
    %c0_i32 = arith.constant 0 : i32
    %c0_i32_0 = arith.constant 0 : i32
    %c0_i32_1 = arith.constant 0 : i32
    return %arg0, %c0_i32, %c0_i32_0 : i32, i32, i32
  }
}

</mosaic_0001>

<llo_original>
// kernel: tpu_custom_call.1
$region0: #{tpu_custom_call.1}
  #allocation0 [shape = 'u32[]', space=smem, size = 0x4, offset = 0x4, fixed_abs, tag = 'smem constant byte address 0x4 - core index']
  #allocation1 [shape = 'u32[144,128]{1,0:T(1,128)}', space=vmem, size = 0x12000, scoped, tag = 'internal scratch']
  #allocation2 [shape = 'bf16[1,18,18,128]{3,2,1,0:T(8,128)(2,1)}', space=vmem, size = 0x1b000, scoped, tag = 'scratch operand']
  %s0 = inlined_call_operand.hbm [shape: f32[2,16,16,128], index: 0, kind: input, shape index: {}]
  %s1 = inlined_call_operand.hbm [shape: bf16[9,128,128], index: 1, kind: input, shape index: {}]
  %s2 = inlined_call_operand.hbm [shape: f32[2,16,16,128], index: 2, kind: output, shape index: {0}]
  %s3 = inlined_call_operand.hbm [shape: f32[2,1,128], index: 3, kind: output, shape index: {1}]
  %s4 = inlined_call_operand.hbm [shape: f32[2,1,128], index: 4, kind: output, shape index: {2}]
  %5 = xla_tuple %s2, %s3, %s4
  %s6 = sld [smem:[#allocation0]]
  $region65: #{tpu_custom_call.1} parent=0
    _
  %s8 = ssub.s32 1, %s6
  %s9 = scalar_select 0, %s8, %s6
  $region1: #{tpu_custom_call.1} parent=0
    #allocation3 [shape = 'u8[262144]{0}', space=vmem, size = 0x40000, scoped, tag = 'input window, operand 0']
    #allocation4 [shape = 's32[2]{0}', space=sflag, size = 0x8, scoped, tag = 'scoped memory for tpu_custom_call.1']
    #allocation5 [shape = 's32[2]{0}', space=sflag, size = 0x8, scoped, tag = 'scoped memory for tpu_custom_call.1']
    #allocation6 [shape = 'u8[294912]{0}', space=vmem, size = 0x48000, scoped, tag = 'input window, operand 1, single buffered']
    #allocation7 [shape = 's32[1]{0}', space=sflag, size = 0x4, scoped, tag = 'scoped memory for tpu_custom_call.1']
    #allocation8 [shape = 'u8[262144]{0}', space=vmem, size = 0x40000, scoped, tag = 'output window, operand 0']
    #allocation9 [shape = 'u8[1024]{0}', space=vmem, size = 0x400, scoped, tag = 'output window, operand 1']
    #allocation10 [shape = 's32[2]{0}', space=sflag, size = 0x8, scoped, tag = 'scoped memory for tpu_custom_call.1']
    #allocation11 [shape = 'u8[1024]{0}', space=vmem, size = 0x400, scoped, tag = 'output window, operand 2']
    %10 = vsyncpa [#allocation4], 0
    %s11 = scalar_lea.sflag [#allocation4], 1
    %12 = vsyncpa %s11, 0
    %13 = vsyncpa [#allocation7], 0
    %14 = vsyncpa [#allocation5], 0
    %s15 = scalar_lea.sflag [#allocation5], 1
    %16 = vsyncpa %s15, 0
    %17 = vsyncpa [#allocation10], 0
    %s18 = scalar_lea.sflag [#allocation10], 1
    %19 = vsyncpa %s18, 0
    loop: start=0, step=1, limit=4
    $region2: #{tpu_custom_call.1} parent=1 // loop_pre_header
      _
    $region3: #{tpu_custom_call.1} parent=1 // loop_header
      %s21 = sphi 0, %s25
      %p22 = scmp.ge.s32.totalorder %s21, 4
      %s31 = sphi 0, %s33
      %s34 = sphi 0, %s31
      %s35 = sphi 0, %s34
      %s51 = sphi 0, %s35
      %s55 = sphi 0, %s55
      %s57 = sphi 0, %s55
      %s58 = sphi 0, %s57
      %s72 = sphi 0, %s58
      %s78 = sphi 0, %s80
      %s81 = sphi 0, %s78
      %s82 = sphi 0, %s81
      %s98 = sphi 0, %s82
      %s104 = sphi 0, %s106
      %s107 = sphi 0, %s104
      %s108 = sphi 0, %s107
      %s124 = sphi 0, %s108
      %s130 = sphi 0, %s132
      %s133 = sphi 0, %s130
      %s134 = sphi 0, %s133
      %s150 = sphi 0, %s134
    $region4: #{tpu_custom_call.1} parent=1 // loop_header_branch
      %24 = sbr.rel (%p22) target = $region8
    $region5: #{tpu_custom_call.1} parent=1 // loop_body
      %s26 = ssub.s32 %s21, 1
      %s27 = ssub.s32 %s21, 2
      %s28 = sadd.s32 %s21, 1
      %s29 = ssub.s32 %s21, %s28
      %p30 = scmp.eq.s32.totalorder %s29, 0
      %s32 = sadd.s32 %s31, 1
      %s33 = scalar_select %p30, %s31, %s32
      %p36 = pneg %p30
      %p37 = scmp.eq.s32.totalorder %s21, 1
      %p38 = por %p36, %p37
      %p39 = scmp.ne.s32.totalorder %s31, %s34
      %p40 = scmp.eq.s32.totalorder %s21, 0
      %p41 = por %p39, %p40
      %p42 = scmp.ne.s32.totalorder %s31, %s34
      %p43 = scmp.eq.s32.totalorder %s26, 1
      %p44 = por %p42, %p43
      %p45 = scmp.ne.s32.totalorder %s34, %s35
      %p46 = scmp.eq.s32.totalorder %s26, 0
      %p47 = por %p45, %p46
      %p48 = scmp.ne.s32.totalorder %s34, %s35
      %p49 = scmp.eq.s32.totalorder %s27, 1
      %p50 = por %p48, %p49
      %p52 = scmp.ne.s32.totalorder %s35, %s51
      %p53 = scmp.eq.s32.totalorder %s27, 0
      %p54 = por %p52, %p53
      %s56 = sadd.s32 %s55, 1
      %p59 = scmp.eq.s32.totalorder %s21, 1
      %p60 = scmp.ne.s32.totalorder %s55, %s57
      %p61 = scmp.eq.s32.totalorder %s21, 0
      %p62 = por %p60, %p61
      %p63 = scmp.ne.s32.totalorder %s55, %s57
      %p64 = scmp.eq.s32.totalorder %s26, 1
      %p65 = por %p63, %p64
      %p66 = scmp.ne.s32.totalorder %s57, %s58
      %p67 = scmp.eq.s32.totalorder %s26, 0
      %p68 = por %p66, %p67
      %p69 = scmp.ne.s32.totalorder %s57, %s58
      %p70 = scmp.eq.s32.totalorder %s27, 1
      %p71 = por %p69, %p70
      %p73 = scmp.ne.s32.totalorder %s58, %s72
      %p74 = scmp.eq.s32.totalorder %s27, 0
      %p75 = por %p73, %p74
      %s76 = ssub.s32 %s21, %s28
      %p77 = scmp.eq.s32.totalorder %s76, 0
      %s79 = sadd.s32 %s78, 1
      %s80 = scalar_select %p77, %s78, %s79
      %p83 = pneg %p77
      %p84 = scmp.eq.s32.totalorder %s21, 1
      %p85 = por %p83, %p84
      %p86 = scmp.ne.s32.totalorder %s78, %s81
      %p87 = scmp.eq.s32.totalorder %s21, 0
      %p88 = por %p86, %p87
      %p89 = scmp.ne.s32.totalorder %s78, %s81
      %p90 = scmp.eq.s32.totalorder %s26, 1
      %p91 = por %p89, %p90
      %p92 = scmp.ne.s32.totalorder %s81, %s82
      %p93 = scmp.eq.s32.totalorder %s26, 0
      %p94 = por %p92, %p93
      %p95 = scmp.ne.s32.totalorder %s81, %s82
      %p96 = scmp.eq.s32.totalorder %s27, 1
      %p97 = por %p95, %p96
      %p99 = scmp.ne.s32.totalorder %s82, %s98
      %p100 = scmp.eq.s32.totalorder %s27, 0
      %p101 = por %p99, %p100
      %s102 = ssub.s32 %s21, %s28
      %p103 = scmp.eq.s32.totalorder %s102, 0
      %s105 = sadd.s32 %s104, 1
      %s106 = scalar_select %p103, %s104, %s105
      %p109 = pneg %p103
      %p110 = scmp.eq.s32.totalorder %s21, 1
      %p111 = por %p109, %p110
      %p112 = scmp.ne.s32.totalorder %s104, %s107
      %p113 = scmp.eq.s32.totalorder %s21, 0
      %p114 = por %p112, %p113
      %p115 = scmp.ne.s32.totalorder %s104, %s107
      %p116 = scmp.eq.s32.totalorder %s26, 1
      %p117 = por %p115, %p116
      %p118 = scmp.ne.s32.totalorder %s107, %s108
      %p119 = scmp.eq.s32.totalorder %s26, 0
      %p120 = por %p118, %p119
      %p121 = scmp.ne.s32.totalorder %s107, %s108
      %p122 = scmp.eq.s32.totalorder %s27, 1
      %p123 = por %p121, %p122
      %p125 = scmp.ne.s32.totalorder %s108, %s124
      %p126 = scmp.eq.s32.totalorder %s27, 0
      %p127 = por %p125, %p126
      %s128 = ssub.s32 %s21, %s28
      %p129 = scmp.eq.s32.totalorder %s128, 0
      %s131 = sadd.s32 %s130, 1
      %s132 = scalar_select %p129, %s130, %s131
      %p135 = pneg %p129
      %p136 = scmp.eq.s32.totalorder %s21, 1
      %p137 = por %p135, %p136
      %p138 = scmp.ne.s32.totalorder %s130, %s133
      %p139 = scmp.eq.s32.totalorder %s21, 0
      %p140 = por %p138, %p139
      %p141 = scmp.ne.s32.totalorder %s130, %s133
      %p142 = scmp.eq.s32.totalorder %s26, 1
      %p143 = por %p141, %p142
      %p144 = scmp.ne.s32.totalorder %s133, %s134
      %p145 = scmp.eq.s32.totalorder %s26, 0
      %p146 = por %p144, %p145
      %p147 = scmp.ne.s32.totalorder %s133, %s134
      %p148 = scmp.eq.s32.totalorder %s27, 1
      %p149 = por %p147, %p148
      %p151 = scmp.ne.s32.totalorder %s134, %s150
      %p152 = scmp.eq.s32.totalorder %s27, 0
      %p153 = por %p151, %p152
      %p154 = scmp.le.s32.totalorder 1, %s21
      %p155 = scmp.lt.s32.totalorder %s21, 3
      %p156 = pnand %p154, %p155
      %p157 = pneg %p156
      // Predicated region
      $region9: #{tpu_custom_call.1} parent=5 // pred_check
        _
      $region10: #{tpu_custom_call.1} parent=5 // pred_check_branch
        %159 = sbr.rel (%p156) target = $region12
      $region11: #{tpu_custom_call.1} parent=5 // pred_region
        %s160 = ssub.s32 %s21, 1
        // Predicated region
        $region13: #{tpu_custom_call.1} parent=11 // pred_check
          %p161 = pneg %p68
        $region14: #{tpu_custom_call.1} parent=11 // pred_check_branch
          %163 = sbr.rel (%p161) target = $region16
        $region15: #{tpu_custom_call.1} parent=11 // pred_region
          %s165 = ssub.s32 9216, 9216
          %166 = vsyncadd [#allocation7], %s165
          %s167 = sshll.u32 [#allocation6], 4
          %s168 = int_to_ptr.vmem [resolvable:$true] %s167
          %173 = dma.hbm_to_vmem [thread:$0]  %s1, 9216, %s168, [#allocation7], 64, 64, 4
        $region16: #{tpu_custom_call.1} parent=11 // pred_fallthru
          _
      $region12: #{tpu_custom_call.1} parent=5 // pred_fallthru
        _
      %p174 = scmp.lt.s32.totalorder %s21, 2
      // Predicated region
      $region17: #{tpu_custom_call.1} parent=5 // pred_check
        %p175 = pneg %p174
      $region18: #{tpu_custom_call.1} parent=5 // pred_check_branch
        %177 = sbr.rel (%p175) target = $region20
      $region19: #{tpu_custom_call.1} parent=5 // pred_region
        // Predicated region
        $region21: #{tpu_custom_call.1} parent=19 // pred_check
          %p178 = pneg %p41
        $region22: #{tpu_custom_call.1} parent=19 // pred_check_branch
          %180 = sbr.rel (%p178) target = $region24
        $region23: #{tpu_custom_call.1} parent=19 // pred_region
          %s181 = sand.u32 %s31, 1
          %s182 = scalar_lea.sflag [#allocation4], %s181
          %s183 = sand.u32 %s31, 1
          %s184 = smul.addr %s183, 256
          %s185 = scalar_lea.vmem [#allocation3], %s184
          %s187 = ssub.s32 4096, 4096
          %188 = vsyncadd %s182, %s187
          %s189 = smul.addr %s21, 32
          %s190 = smul.addr %s189, 128
          %s191 = scalar_lea.hbm %s0, %s190
          %s192 = sshll.u32 %s185, 4
          %s193 = int_to_ptr.vmem [resolvable:$true] %s192
          %198 = dma.hbm_to_vmem [thread:$0]  %s191, 4096, %s193, %s182, 128, 128, 8
        $region24: #{tpu_custom_call.1} parent=19 // pred_fallthru
          _
      $region20: #{tpu_custom_call.1} parent=5 // pred_fallthru
        _
      %p199 = scmp.le.s32.totalorder 1, %s21
      %p200 = scmp.lt.s32.totalorder %s21, 3
      %p201 = pnand %p199, %p200
      %p202 = pneg %p201
      // Predicated region
      $region25: #{tpu_custom_call.1} parent=5 // pred_check
        _
      $region26: #{tpu_custom_call.1} parent=5 // pred_check_branch
        %204 = sbr.rel (%p201) target = $region28
      $region27: #{tpu_custom_call.1} parent=5 // pred_region
        %s205 = ssub.s32 %s21, 1
        %s206 = sand.u32 %s34, 1
        %s207 = scalar_lea.sflag [#allocation4], %s206
        %s208 = sand.u32 %s34, 1
        %s209 = smul.addr %s208, 256
        %s210 = scalar_lea.vmem [#allocation3], %s209
        // Predicated region
        $region29: #{tpu_custom_call.1} parent=27 // pred_check
          %p211 = pneg %p47
        $region30: #{tpu_custom_call.1} parent=27 // pred_check_branch
          %213 = sbr.rel (%p211) target = $region32
        $region31: #{tpu_custom_call.1} parent=27 // pred_region
          %214 = dma.done %s207, 4096
        $region32: #{tpu_custom_call.1} parent=27 // pred_fallthru
          _
        // Predicated region
        $region33: #{tpu_custom_call.1} parent=27 // pred_check
          %p215 = pneg %p68
        $region34: #{tpu_custom_call.1} parent=27 // pred_check_branch
          %217 = sbr.rel (%p215) target = $region36
        $region35: #{tpu_custom_call.1} parent=27 // pred_region
          %218 = dma.done [#allocation7], 9216
        $region36: #{tpu_custom_call.1} parent=27 // pred_fallthru
          _
        %s219 = sand.u32 %s34, 1
        %s220 = scalar_lea.sflag [#allocation4], %s219
        %s221 = sand.u32 %s34, 1
        %s222 = smul.addr %s221, 256
        %s223 = scalar_lea.vmem [#allocation3], %s222
        %p224 = pneg %p47
        %p225 = pneg %p44
        %p226 = pneg %p68
        %p227 = pneg %p65
        %p228 = pneg %p94
        %p229 = pneg %p91
        %s230 = sand.u32 %s81, 1
        %s231 = scalar_lea.sflag [#allocation5], %s230
        %s232 = sand.u32 %s81, 1
        %s233 = smul.addr %s232, 256
        %s234 = scalar_lea.vmem [#allocation8], %s233
        %p235 = pneg %p120
        %p236 = pneg %p117
        %s237 = sand.u32 %s26, 1
        %s238 = scalar_lea.sflag [#allocation10], %s237
        %s239 = sand.u32 %s107, 1
        %s240 = scalar_lea.vmem [#allocation9], %s239
        %p241 = pneg %p146
        %p242 = pneg %p143
        %s243 = sand.u32 %s26, 1
        %s244 = scalar_lea.sflag [#allocation10], %s243
        %s245 = sand.u32 %s133, 1
        %s246 = scalar_lea.vmem [#allocation11], %s245
        %v248 = vld [vmem:[%s210] sm:$0xff]
        %v249 = vld [vmem:[%s210 + $0x8] sm:$0xff]
        %v250 = vld [vmem:[%s210 + $0x10] sm:$0xff]
        %v251 = vld [vmem:[%s210 + $0x18] sm:$0xff]
        %v252 = vld [vmem:[%s210 + $0x20] sm:$0xff]
        %v253 = vld [vmem:[%s210 + $0x28] sm:$0xff]
        %v254 = vld [vmem:[%s210 + $0x30] sm:$0xff]
        %v255 = vld [vmem:[%s210 + $0x38] sm:$0xff]
        %v256 = vld [vmem:[%s210 + $0x40] sm:$0xff]
        %v257 = vld [vmem:[%s210 + $0x48] sm:$0xff]
        %v258 = vld [vmem:[%s210 + $0x50] sm:$0xff]
        %v259 = vld [vmem:[%s210 + $0x58] sm:$0xff]
        %v260 = vld [vmem:[%s210 + $0x60] sm:$0xff]
        %v261 = vld [vmem:[%s210 + $0x68] sm:$0xff]
        %v262 = vld [vmem:[%s210 + $0x70] sm:$0xff]
        %v263 = vld [vmem:[%s210 + $0x78] sm:$0xff]
        %v264 = vld [vmem:[%s210 + $0x80] sm:$0xff]
        %v265 = vld [vmem:[%s210 + $0x88] sm:$0xff]
        %v266 = vld [vmem:[%s210 + $0x90] sm:$0xff]
        %v267 = vld [vmem:[%s210 + $0x98] sm:$0xff]
        %v268 = vld [vmem:[%s210 + $0xa0] sm:$0xff]
        %v269 = vld [vmem:[%s210 + $0xa8] sm:$0xff]
        %v270 = vld [vmem:[%s210 + $0xb0] sm:$0xff]
        %v271 = vld [vmem:[%s210 + $0xb8] sm:$0xff]
        %v272 = vld [vmem:[%s210 + $0xc0] sm:$0xff]
        %v273 = vld [vmem:[%s210 + $0xc8] sm:$0xff]
        %v274 = vld [vmem:[%s210 + $0xd0] sm:$0xff]
        %v275 = vld [vmem:[%s210 + $0xd8] sm:$0xff]
        %v276 = vld [vmem:[%s210 + $0xe0] sm:$0xff]
        %v277 = vld [vmem:[%s210 + $0xe8] sm:$0xff]
        %v278 = vld [vmem:[%s210 + $0xf0] sm:$0xff]
        %v279 = vld [vmem:[%s210 + $0xf8] sm:$0xff]
        %280 = vst [vmem:[#allocation2] sm:$0xf] 0
        %281 = vst [vmem:[#allocation2 + $0x4] sm:$0xf] 0
        %282 = vst [vmem:[#allocation2 + $0x8] sm:$0x1] 0
        %283 = vst [vmem:[#allocation2 + $0xc] sm:$0xf] 0
        %284 = vst [vmem:[#allocation2 + $0x10] sm:$0xf] 0
        %285 = vst [vmem:[#allocation2 + $0x14] sm:$0x1] 0
        %286 = vst [vmem:[#allocation2 + $0x18] sm:$0xf] 0
        %287 = vst [vmem:[#allocation2 + $0x1c] sm:$0xf] 0
        %288 = vst [vmem:[#allocation2 + $0x20] sm:$0x1] 0
        %289 = vst [vmem:[#allocation2 + $0x24] sm:$0xf] 0
        %290 = vst [vmem:[#allocation2 + $0x28] sm:$0xf] 0
        %291 = vst [vmem:[#allocation2 + $0x2c] sm:$0x1] 0
        %292 = vst [vmem:[#allocation2 + $0x30] sm:$0xf] 0
        %293 = vst [vmem:[#allocation2 + $0x34] sm:$0xf] 0
        %294 = vst [vmem:[#allocation2 + $0x38] sm:$0x1] 0
        %295 = vst [vmem:[#allocation2 + $0x3c] sm:$0xf] 0
        %296 = vst [vmem:[#allocation2 + $0x40] sm:$0xf] 0
        %297 = vst [vmem:[#allocation2 + $0x44] sm:$0x1] 0
        %298 = vst [vmem:[#allocation2 + $0x48] sm:$0xf] 0
        %299 = vst [vmem:[#allocation2 + $0x4c] sm:$0xf] 0
        %300 = vst [vmem:[#allocation2 + $0x50] sm:$0x1] 0
        %301 = vst [vmem:[#allocation2 + $0x54] sm:$0xf] 0
        %302 = vst [vmem:[#allocation2 + $0x58] sm:$0xf] 0
        %303 = vst [vmem:[#allocation2 + $0x5c] sm:$0x1] 0
        %304 = vst [vmem:[#allocation2 + $0x60] sm:$0xf] 0
        %305 = vst [vmem:[#allocation2 + $0x64] sm:$0xf] 0
        %306 = vst [vmem:[#allocation2 + $0x68] sm:$0x1] 0
        %307 = vst [vmem:[#allocation2 + $0x6c] sm:$0xf] 0
        %308 = vst [vmem:[#allocation2 + $0x70] sm:$0xf] 0
        %309 = vst [vmem:[#allocation2 + $0x74] sm:$0x1] 0
        %310 = vst [vmem:[#allocation2 + $0x78] sm:$0xf] 0
        %311 = vst [vmem:[#allocation2 + $0x7c] sm:$0xf] 0
        %312 = vst [vmem:[#allocation2 + $0x80] sm:$0x1] 0
        %313 = vst [vmem:[#allocation2 + $0x84] sm:$0xf] 0
        %314 = vst [vmem:[#allocation2 + $0x88] sm:$0xf] 0
        %315 = vst [vmem:[#allocation2 + $0x8c] sm:$0x1] 0
        %316 = vst [vmem:[#allocation2 + $0x90] sm:$0xf] 0
        %317 = vst [vmem:[#allocation2 + $0x94] sm:$0xf] 0
        %318 = vst [vmem:[#allocation2 + $0x98] sm:$0x1] 0
        %319 = vst [vmem:[#allocation2 + $0x9c] sm:$0xf] 0
        %320 = vst [vmem:[#allocation2 + $0xa0] sm:$0xf] 0
        %321 = vst [vmem:[#allocation2 + $0xa4] sm:$0x1] 0
        %322 = vst [vmem:[#allocation2 + $0xa8] sm:$0xf] 0
        %323 = vst [vmem:[#allocation2 + $0xac] sm:$0xf] 0
        %324 = vst [vmem:[#allocation2 + $0xb0] sm:$0x1] 0
        %325 = vst [vmem:[#allocation2 + $0xb4] sm:$0xf] 0
        %326 = vst [vmem:[#allocation2 + $0xb8] sm:$0xf] 0
        %327 = vst [vmem:[#allocation2 + $0xbc] sm:$0x1] 0
        %328 = vst [vmem:[#allocation2 + $0xc0] sm:$0xf] 0
        %329 = vst [vmem:[#allocation2 + $0xc4] sm:$0xf] 0
        %330 = vst [vmem:[#allocation2 + $0xc8] sm:$0x1] 0
        %331 = vst [vmem:[#allocation2 + $0xcc] sm:$0xf] 0
        %332 = vst [vmem:[#allocation2 + $0xd0] sm:$0xf] 0
        %333 = vst [vmem:[#allocation2 + $0xd4] sm:$0x1] 0
        %v334 = vpack.c.bf16 %v249, %v248
        %v335 = vpack.c.bf16 %v251, %v250
        %v336 = vpack.c.bf16 %v253, %v252
        %v337 = vpack.c.bf16 %v255, %v254
        %v338 = vpack.c.bf16 %v257, %v256
        %v339 = vpack.c.bf16 %v259, %v258
        %v340 = vpack.c.bf16 %v261, %v260
        %v341 = vpack.c.bf16 %v263, %v262
        %v342 = vpack.c.bf16 %v265, %v264
        %v343 = vpack.c.bf16 %v267, %v266
        %v344 = vpack.c.bf16 %v269, %v268
        %v345 = vpack.c.bf16 %v271, %v270
        %v346 = vpack.c.bf16 %v273, %v272
        %v347 = vpack.c.bf16 %v275, %v274
        %v348 = vpack.c.bf16 %v277, %v276
        %v349 = vpack.c.bf16 %v279, %v278
        %v366 = vunpack.c.l.b16 %v334
        %v367 = vunpack.c.h.b16 %v334
        %v368 = vunpack.c.l.b16 %v335
        %v369 = vunpack.c.h.b16 %v335
        %v370 = vunpack.c.l.b16 %v336
        %v371 = vunpack.c.h.b16 %v336
        %v372 = vunpack.c.l.b16 %v337
        %v373 = vunpack.c.h.b16 %v337
        %v374 = vunpack.c.l.b16 %v338
        %v375 = vunpack.c.h.b16 %v338
        %v376 = vunpack.c.l.b16 %v339
        %v377 = vunpack.c.h.b16 %v339
        %v378 = vunpack.c.l.b16 %v340
        %v379 = vunpack.c.h.b16 %v340
        %v380 = vunpack.c.l.b16 %v341
        %v381 = vunpack.c.h.b16 %v341
        %v382 = vunpack.c.l.b16 %v342
        %v383 = vunpack.c.h.b16 %v342
        %v384 = vunpack.c.l.b16 %v343
        %v385 = vunpack.c.h.b16 %v343
        %v386 = vunpack.c.l.b16 %v344
        %v387 = vunpack.c.h.b16 %v344
        %v388 = vunpack.c.l.b16 %v345
        %v389 = vunpack.c.h.b16 %v345
        %v390 = vunpack.c.l.b16 %v346
        %v391 = vunpack.c.h.b16 %v346
        %v392 = vunpack.c.l.b16 %v347
        %v393 = vunpack.c.h.b16 %v347
        %v394 = vunpack.c.l.b16 %v348
        %v395 = vunpack.c.h.b16 %v348
        %v396 = vunpack.c.l.b16 %v349
        %v397 = vunpack.c.h.b16 %v349
        %v398 = vpack.c.b16 %v366, %v366
        %v399 = vpack.c.b16 %v367, %v367
        %v400 = vpack.c.b16 %v368, %v368
        %v401 = vpack.c.b16 %v369, %v369
        %v402 = vpack.c.b16 %v370, %v370
        %v403 = vpack.c.b16 %v371, %v371
        %v404 = vpack.c.b16 %v372, %v372
        %v405 = vpack.c.b16 %v373, %v373
        %v406 = vpack.c.b16 %v374, %v374
        %v407 = vpack.c.b16 %v375, %v375
        %v408 = vpack.c.b16 %v376, %v376
        %v409 = vpack.c.b16 %v377, %v377
        %v410 = vpack.c.b16 %v378, %v378
        %v411 = vpack.c.b16 %v379, %v379
        %v412 = vpack.c.b16 %v380, %v380
        %v413 = vpack.c.b16 %v381, %v381
        %v414 = vpack.c.b16 %v382, %v382
        %v415 = vpack.c.b16 %v383, %v383
        %v416 = vpack.c.b16 %v384, %v384
        %v417 = vpack.c.b16 %v385, %v385
        %v418 = vpack.c.b16 %v386, %v386
        %v419 = vpack.c.b16 %v387, %v387
        %v420 = vpack.c.b16 %v388, %v388
        %v421 = vpack.c.b16 %v389, %v389
        %v422 = vpack.c.b16 %v390, %v390
        %v423 = vpack.c.b16 %v391, %v391
        %v424 = vpack.c.b16 %v392, %v392
        %v425 = vpack.c.b16 %v393, %v393
        %v426 = vpack.c.b16 %v394, %v394
        %v427 = vpack.c.b16 %v395, %v395
        %v428 = vpack.c.b16 %v396, %v396
        %v429 = vpack.c.b16 %v397, %v397
        %vm430 = vsmask.f32 256
        %vm431 = vsmask.f32 4368
        %vm432 = vmor %vm430, %vm431
        %v434 = vshrl.u32 %v398, 16
        %v436 = vrot.slane %v434, 7
        %v437 = vshll.u32 %v398, 16
        %v439 = vor.u32 %v436, %v437
        %v440 = vrot.slane %v436, 4
        %v442 = vshrl.u32 %v399, 16
        %v444 = vrot.slane %v442, 7
        %v445 = vshll.u32 %v399, 16
        %v447 = vor.u32 %v444, %v445
        %v448 = vsel %vm432, %v440, %v447
        %v449 = vrot.slane %v444, 4
        %v451 = vshrl.u32 %v400, 16
        %v453 = vrot.slane %v451, 7
        %v454 = vshll.u32 %v400, 16
        %v456 = vor.u32 %v453, %v454
        %v457 = vrot.slane %v453, 4
        %v459 = vshrl.u32 %v401, 16
        %v461 = vrot.slane %v459, 7
        %v462 = vshll.u32 %v401, 16
        %v464 = vor.u32 %v461, %v462
        %v465 = vsel %vm432, %v457, %v464
        %v466 = vrot.slane %v461, 4
        %v468 = vshrl.u32 %v402, 16
        %v470 = vrot.slane %v468, 7
        %v471 = vshll.u32 %v402, 16
        %v473 = vor.u32 %v470, %v471
        %v474 = vrot.slane %v470, 4
        %v476 = vshrl.u32 %v403, 16
        %v478 = vrot.slane %v476, 7
        %v479 = vshll.u32 %v403, 16
        %v481 = vor.u32 %v478, %v479
        %v482 = vsel %vm432, %v474, %v481
        %v483 = vrot.slane %v478, 4
        %v485 = vshrl.u32 %v404, 16
        %v487 = vrot.slane %v485, 7
        %v488 = vshll.u32 %v404, 16
        %v490 = vor.u32 %v487, %v488
        %v491 = vrot.slane %v487, 4
        %v493 = vshrl.u32 %v405, 16
        %v495 = vrot.slane %v493, 7
        %v496 = vshll.u32 %v405, 16
        %v498 = vor.u32 %v495, %v496
        %v499 = vsel %vm432, %v491, %v498
        %v500 = vrot.slane %v495, 4
        %v502 = vshrl.u32 %v406, 16
        %v504 = vrot.slane %v502, 7
        %v505 = vshll.u32 %v406, 16
        %v507 = vor.u32 %v504, %v505
        %v508 = vrot.slane %v504, 4
        %v510 = vshrl.u32 %v407, 16
        %v512 = vrot.slane %v510, 7
        %v513 = vshll.u32 %v407, 16
        %v515 = vor.u32 %v512, %v513
        %v516 = vsel %vm432, %v508, %v515
        %v517 = vrot.slane %v512, 4
        %v519 = vshrl.u32 %v408, 16
        %v521 = vrot.slane %v519, 7
        %v522 = vshll.u32 %v408, 16
        %v524 = vor.u32 %v521, %v522
        %v525 = vrot.slane %v521, 4
        %v527 = vshrl.u32 %v409, 16
        %v529 = vrot.slane %v527, 7
        %v530 = vshll.u32 %v409, 16
        %v532 = vor.u32 %v529, %v530
        %v533 = vsel %vm432, %v525, %v532
        %v534 = vrot.slane %v529, 4
        %v536 = vshrl.u32 %v410, 16
        %v538 = vrot.slane %v536, 7
        %v539 = vshll.u32 %v410, 16
        %v541 = vor.u32 %v538, %v539
        %v542 = vrot.slane %v538, 4
        %v544 = vshrl.u32 %v411, 16
        %v546 = vrot.slane %v544, 7
        %v547 = vshll.u32 %v411, 16
        %v549 = vor.u32 %v546, %v547
        %v550 = vsel %vm432, %v542, %v549
        %v551 = vrot.slane %v546, 4
        %v553 = vshrl.u32 %v412, 16
        %v555 = vrot.slane %v553, 7
        %v556 = vshll.u32 %v412, 16
        %v558 = vor.u32 %v555, %v556
        %v559 = vrot.slane %v555, 4
        %v561 = vshrl.u32 %v413, 16
        %v563 = vrot.slane %v561, 7
        %v564 = vshll.u32 %v413, 16
        %v566 = vor.u32 %v563, %v564
        %v567 = vsel %vm432, %v559, %v566
        %v568 = vrot.slane %v563, 4
        %v570 = vshrl.u32 %v414, 16
        %v572 = vrot.slane %v570, 7
        %v573 = vshll.u32 %v414, 16
        %v575 = vor.u32 %v572, %v573
        %v576 = vrot.slane %v572, 4
        %v578 = vshrl.u32 %v415, 16
        %v580 = vrot.slane %v578, 7
        %v581 = vshll.u32 %v415, 16
        %v583 = vor.u32 %v580, %v581
        %v584 = vsel %vm432, %v576, %v583
        %v585 = vrot.slane %v580, 4
        %v587 = vshrl.u32 %v416, 16
        %v589 = vrot.slane %v587, 7
        %v590 = vshll.u32 %v416, 16
        %v592 = vor.u32 %v589, %v590
        %v593 = vrot.slane %v589, 4
        %v595 = vshrl.u32 %v417, 16
        %v597 = vrot.slane %v595, 7
        %v598 = vshll.u32 %v417, 16
        %v600 = vor.u32 %v597, %v598
        %v601 = vsel %vm432, %v593, %v600
        %v602 = vrot.slane %v597, 4
        %v604 = vshrl.u32 %v418, 16
        %v606 = vrot.slane %v604, 7
        %v607 = vshll.u32 %v418, 16
        %v609 = vor.u32 %v606, %v607
        %v610 = vrot.slane %v606, 4
        %v612 = vshrl.u32 %v419, 16
        %v614 = vrot.slane %v612, 7
        %v615 = vshll.u32 %v419, 16
        %v617 = vor.u32 %v614, %v615
        %v618 = vsel %vm432, %v610, %v617
        %v619 = vrot.slane %v614, 4
        %v621 = vshrl.u32 %v420, 16
        %v623 = vrot.slane %v621, 7
        %v624 = vshll.u32 %v420, 16
        %v626 = vor.u32 %v623, %v624
        %v627 = vrot.slane %v623, 4
        %v629 = vshrl.u32 %v421, 16
        %v631 = vrot.slane %v629, 7
        %v632 = vshll.u32 %v421, 16
        %v634 = vor.u32 %v631, %v632
        %v635 = vsel %vm432, %v627, %v634
        %v636 = vrot.slane %v631, 4
        %v638 = vshrl.u32 %v422, 16
        %v640 = vrot.slane %v638, 7
        %v641 = vshll.u32 %v422, 16
        %v643 = vor.u32 %v640, %v641
        %v644 = vrot.slane %v640, 4
        %v646 = vshrl.u32 %v423, 16
        %v648 = vrot.slane %v646, 7
        %v649 = vshll.u32 %v423, 16
        %v651 = vor.u32 %v648, %v649
        %v652 = vsel %vm432, %v644, %v651
        %v653 = vrot.slane %v648, 4
        %v655 = vshrl.u32 %v424, 16
        %v657 = vrot.slane %v655, 7
        %v658 = vshll.u32 %v424, 16
        %v660 = vor.u32 %v657, %v658
        %v661 = vrot.slane %v657, 4
        %v663 = vshrl.u32 %v425, 16
        %v665 = vrot.slane %v663, 7
        %v666 = vshll.u32 %v425, 16
        %v668 = vor.u32 %v665, %v666
        %v669 = vsel %vm432, %v661, %v668
        %v670 = vrot.slane %v665, 4
        %v672 = vshrl.u32 %v426, 16
        %v674 = vrot.slane %v672, 7
        %v675 = vshll.u32 %v426, 16
        %v677 = vor.u32 %v674, %v675
        %v678 = vrot.slane %v674, 4
        %v680 = vshrl.u32 %v427, 16
        %v682 = vrot.slane %v680, 7
        %v683 = vshll.u32 %v427, 16
        %v685 = vor.u32 %v682, %v683
        %v686 = vsel %vm432, %v678, %v685
        %v687 = vrot.slane %v682, 4
        %v689 = vshrl.u32 %v428, 16
        %v691 = vrot.slane %v689, 7
        %v692 = vshll.u32 %v428, 16
        %v694 = vor.u32 %v691, %v692
        %v695 = vrot.slane %v691, 4
        %v697 = vshrl.u32 %v429, 16
        %v699 = vrot.slane %v697, 7
        %v700 = vshll.u32 %v429, 16
        %v702 = vor.u32 %v699, %v700
        %v703 = vsel %vm432, %v695, %v702
        %v704 = vrot.slane %v699, 4
        %s753 = scalar_lea.vmem [#allocation2], 12
        %vm754 = vcmask 1043456
        %vm755 = vsmask.f32 7938
        %vm756 = vmand %vm754, %vm755
        %v757 = vld [vmem:[%s753] sm:$0xf]
        %v758 = vsel %vm756, %v439, %v757
        %759 = vst [vmem:[%s753] sm:$0xf] %v758
        %760 = vst [vmem:[%s753 + $0x4] sm:$0xf] %v448
        %vm761 = vcmask 1040384
        %vm762 = vmand %vm761, %vm430
        %v763 = vld [vmem:[%s753 + $0x8] sm:$0x1]
        %v764 = vsel %vm762, %v449, %v763
        %765 = vst [vmem:[%s753 + $0x8] sm:$0x1] %v764
        %v766 = vld [vmem:[%s753 + $0xc] sm:$0xf]
        %v767 = vsel %vm756, %v456, %v766
        %768 = vst [vmem:[%s753 + $0xc] sm:$0xf] %v767
        %769 = vst [vmem:[%s753 + $0x10] sm:$0xf] %v465
        %v770 = vld [vmem:[%s753 + $0x14] sm:$0x1]
        %v771 = vsel %vm762, %v466, %v770
        %772 = vst [vmem:[%s753 + $0x14] sm:$0x1] %v771
        %v773 = vld [vmem:[%s753 + $0x18] sm:$0xf]
        %v774 = vsel %vm756, %v473, %v773
        %775 = vst [vmem:[%s753 + $0x18] sm:$0xf] %v774
        %776 = vst [vmem:[%s753 + $0x1c] sm:$0xf] %v482
        %v777 = vld [vmem:[%s753 + $0x20] sm:$0x1]
        %v778 = vsel %vm762, %v483, %v777
        %779 = vst [vmem:[%s753 + $0x20] sm:$0x1] %v778
        %v780 = vld [vmem:[%s753 + $0x24] sm:$0xf]
        %v781 = vsel %vm756, %v490, %v780
        %782 = vst [vmem:[%s753 + $0x24] sm:$0xf] %v781
        %783 = vst [vmem:[%s753 + $0x28] sm:$0xf] %v499
        %v784 = vld [vmem:[%s753 + $0x2c] sm:$0x1]
        %v785 = vsel %vm762, %v500, %v784
        %786 = vst [vmem:[%s753 + $0x2c] sm:$0x1] %v785
        %v787 = vld [vmem:[%s753 + $0x30] sm:$0xf]
        %v788 = vsel %vm756, %v507, %v787
        %789 = vst [vmem:[%s753 + $0x30] sm:$0xf] %v788
        %790 = vst [vmem:[%s753 + $0x34] sm:$0xf] %v516
        %v791 = vld [vmem:[%s753 + $0x38] sm:$0x1]
        %v792 = vsel %vm762, %v517, %v791
        %793 = vst [vmem:[%s753 + $0x38] sm:$0x1] %v792
        %v794 = vld [vmem:[%s753 + $0x3c] sm:$0xf]
        %v795 = vsel %vm756, %v524, %v794
        %796 = vst [vmem:[%s753 + $0x3c] sm:$0xf] %v795
        %797 = vst [vmem:[%s753 + $0x40] sm:$0xf] %v533
        %v798 = vld [vmem:[%s753 + $0x44] sm:$0x1]
        %v799 = vsel %vm762, %v534, %v798
        %800 = vst [vmem:[%s753 + $0x44] sm:$0x1] %v799
        %v801 = vld [vmem:[%s753 + $0x48] sm:$0xf]
        %v802 = vsel %vm756, %v541, %v801
        %803 = vst [vmem:[%s753 + $0x48] sm:$0xf] %v802
        %804 = vst [vmem:[%s753 + $0x4c] sm:$0xf] %v550
        %v805 = vld [vmem:[%s753 + $0x50] sm:$0x1]
        %v806 = vsel %vm762, %v551, %v805
        %807 = vst [vmem:[%s753 + $0x50] sm:$0x1] %v806
        %v808 = vld [vmem:[%s753 + $0x54] sm:$0xf]
        %v809 = vsel %vm756, %v558, %v808
        %810 = vst [vmem:[%s753 + $0x54] sm:$0xf] %v809
        %811 = vst [vmem:[%s753 + $0x58] sm:$0xf] %v567
        %v812 = vld [vmem:[%s753 + $0x5c] sm:$0x1]
        %v813 = vsel %vm762, %v568, %v812
        %814 = vst [vmem:[%s753 + $0x5c] sm:$0x1] %v813
        %v815 = vld [vmem:[%s753 + $0x60] sm:$0xf]
        %v816 = vsel %vm756, %v575, %v815
        %817 = vst [vmem:[%s753 + $0x60] sm:$0xf] %v816
        %818 = vst [vmem:[%s753 + $0x64] sm:$0xf] %v584
        %v819 = vld [vmem:[%s753 + $0x68] sm:$0x1]
        %v820 = vsel %vm762, %v585, %v819
        %821 = vst [vmem:[%s753 + $0x68] sm:$0x1] %v820
        %v822 = vld [vmem:[%s753 + $0x6c] sm:$0xf]
        %v823 = vsel %vm756, %v592, %v822
        %824 = vst [vmem:[%s753 + $0x6c] sm:$0xf] %v823
        %825 = vst [vmem:[%s753 + $0x70] sm:$0xf] %v601
        %v826 = vld [vmem:[%s753 + $0x74] sm:$0x1]
        %v827 = vsel %vm762, %v602, %v826
        %828 = vst [vmem:[%s753 + $0x74] sm:$0x1] %v827
        %v829 = vld [vmem:[%s753 + $0x78] sm:$0xf]
        %v830 = vsel %vm756, %v609, %v829
        %831 = vst [vmem:[%s753 + $0x78] sm:$0xf] %v830
        %832 = vst [vmem:[%s753 + $0x7c] sm:$0xf] %v618
        %v833 = vld [vmem:[%s753 + $0x80] sm:$0x1]
        %v834 = vsel %vm762, %v619, %v833
        %835 = vst [vmem:[%s753 + $0x80] sm:$0x1] %v834
        %v836 = vld [vmem:[%s753 + $0x84] sm:$0xf]
        %v837 = vsel %vm756, %v626, %v836
        %838 = vst [vmem:[%s753 + $0x84] sm:$0xf] %v837
        %839 = vst [vmem:[%s753 + $0x88] sm:$0xf] %v635
        %v840 = vld [vmem:[%s753 + $0x8c] sm:$0x1]
        %v841 = vsel %vm762, %v636, %v840
        %842 = vst [vmem:[%s753 + $0x8c] sm:$0x1] %v841
        %v843 = vld [vmem:[%s753 + $0x90] sm:$0xf]
        %v844 = vsel %vm756, %v643, %v843
        %845 = vst [vmem:[%s753 + $0x90] sm:$0xf] %v844
        %846 = vst [vmem:[%s753 + $0x94] sm:$0xf] %v652
        %v847 = vld [vmem:[%s753 + $0x98] sm:$0x1]
        %v848 = vsel %vm762, %v653, %v847
        %849 = vst [vmem:[%s753 + $0x98] sm:$0x1] %v848
        %v850 = vld [vmem:[%s753 + $0x9c] sm:$0xf]
        %v851 = vsel %vm756, %v660, %v850
        %852 = vst [vmem:[%s753 + $0x9c] sm:$0xf] %v851
        %853 = vst [vmem:[%s753 + $0xa0] sm:$0xf] %v669
        %v854 = vld [vmem:[%s753 + $0xa4] sm:$0x1]
        %v855 = vsel %vm762, %v670, %v854
        %856 = vst [vmem:[%s753 + $0xa4] sm:$0x1] %v855
        %v857 = vld [vmem:[%s753 + $0xa8] sm:$0xf]
        %v858 = vsel %vm756, %v677, %v857
        %859 = vst [vmem:[%s753 + $0xa8] sm:$0xf] %v858
        %860 = vst [vmem:[%s753 + $0xac] sm:$0xf] %v686
        %v861 = vld [vmem:[%s753 + $0xb0] sm:$0x1]
        %v862 = vsel %vm762, %v687, %v861
        %863 = vst [vmem:[%s753 + $0xb0] sm:$0x1] %v862
        %v864 = vld [vmem:[%s753 + $0xb4] sm:$0xf]
        %v865 = vsel %vm756, %v694, %v864
        %866 = vst [vmem:[%s753 + $0xb4] sm:$0xf] %v865
        %867 = vst [vmem:[%s753 + $0xb8] sm:$0xf] %v703
        %v868 = vld [vmem:[%s753 + $0xbc] sm:$0x1]
        %v869 = vsel %vm762, %v704, %v868
        %870 = vst [vmem:[%s753 + $0xbc] sm:$0x1] %v869
        %v871 = vld [vmem:[#allocation2] sm:$0xf]
        %v872 = vld [vmem:[#allocation2 + $0x4] sm:$0xf]
        %v873 = vld [vmem:[#allocation2 + $0xc] sm:$0xf]
        %v874 = vld [vmem:[#allocation2 + $0x10] sm:$0xf]
        %v875 = vld [vmem:[#allocation2 + $0x18] sm:$0xf]
        %v876 = vld [vmem:[#allocation2 + $0x1c] sm:$0xf]
        %v877 = vld [vmem:[#allocation2 + $0x24] sm:$0xf]
        %v878 = vld [vmem:[#allocation2 + $0x28] sm:$0xf]
        %v879 = vld [vmem:[#allocation2 + $0x30] sm:$0xf]
        %v880 = vld [vmem:[#allocation2 + $0x34] sm:$0xf]
        %v881 = vld [vmem:[#allocation2 + $0x3c] sm:$0xf]
        %v882 = vld [vmem:[#allocation2 + $0x40] sm:$0xf]
        %v883 = vld [vmem:[#allocation2 + $0x48] sm:$0xf]
        %v884 = vld [vmem:[#allocation2 + $0x4c] sm:$0xf]
        %v885 = vld [vmem:[#allocation2 + $0x54] sm:$0xf]
        %v886 = vld [vmem:[#allocation2 + $0x58] sm:$0xf]
        %v887 = vld [vmem:[#allocation2 + $0x60] sm:$0xf]
        %v888 = vld [vmem:[#allocation2 + $0x64] sm:$0xf]
        %v889 = vld [vmem:[#allocation2 + $0x6c] sm:$0xf]
        %v890 = vld [vmem:[#allocation2 + $0x70] sm:$0xf]
        %v891 = vld [vmem:[#allocation2 + $0x78] sm:$0xf]
        %v892 = vld [vmem:[#allocation2 + $0x7c] sm:$0xf]
        %v893 = vld [vmem:[#allocation2 + $0x84] sm:$0xf]
        %v894 = vld [vmem:[#allocation2 + $0x88] sm:$0xf]
        %v895 = vld [vmem:[#allocation2 + $0x90] sm:$0xf]
        %v896 = vld [vmem:[#allocation2 + $0x94] sm:$0xf]
        %v897 = vld [vmem:[#allocation2 + $0x9c] sm:$0xf]
        %v898 = vld [vmem:[#allocation2 + $0xa0] sm:$0xf]
        %v899 = vld [vmem:[#allocation2 + $0xa8] sm:$0xf]
        %v900 = vld [vmem:[#allocation2 + $0xac] sm:$0xf]
        %v901 = vld [vmem:[#allocation2 + $0xb4] sm:$0xf]
        %v902 = vld [vmem:[#allocation2 + $0xb8] sm:$0xf]
        %v903 = vld [vmem:[#allocation6] sm:$0xf]
        %v904 = vld [vmem:[#allocation6 + $0x4] sm:$0xf]
        %v905 = vld [vmem:[#allocation6 + $0x8] sm:$0xf]
        %v906 = vld [vmem:[#allocation6 + $0xc] sm:$0xf]
        %v907 = vld [vmem:[#allocation6 + $0x10] sm:$0xf]
        %v908 = vld [vmem:[#allocation6 + $0x14] sm:$0xf]
        %v909 = vld [vmem:[#allocation6 + $0x18] sm:$0xf]
        %v910 = vld [vmem:[#allocation6 + $0x1c] sm:$0xf]
        %v911 = vld [vmem:[#allocation6 + $0x20] sm:$0xf]
        %v912 = vld [vmem:[#allocation6 + $0x24] sm:$0xf]
        %v913 = vld [vmem:[#allocation6 + $0x28] sm:$0xf]
        %v914 = vld [vmem:[#allocation6 + $0x2c] sm:$0xf]
        %v915 = vld [vmem:[#allocation6 + $0x30] sm:$0xf]
        %v916 = vld [vmem:[#allocation6 + $0x34] sm:$0xf]
        %v917 = vld [vmem:[#allocation6 + $0x38] sm:$0xf]
        %v918 = vld [vmem:[#allocation6 + $0x3c] sm:$0xf]
        %v919 = vld [vmem:[#allocation2 + $0x8] sm:$0x1]
        %v920 = vld [vmem:[#allocation2 + $0x14] sm:$0x1]
        %v921 = vld [vmem:[#allocation2 + $0x20] sm:$0x1]
        %v922 = vld [vmem:[#allocation2 + $0x2c] sm:$0x1]
        %v923 = vld [vmem:[#allocation2 + $0x38] sm:$0x1]
        %v924 = vld [vmem:[#allocation2 + $0x44] sm:$0x1]
        %v925 = vld [vmem:[#allocation2 + $0x50] sm:$0x1]
        %v926 = vld [vmem:[#allocation2 + $0x5c] sm:$0x1]
        %v927 = vld [vmem:[#allocation2 + $0x68] sm:$0x1]
        %v928 = vld [vmem:[#allocation2 + $0x74] sm:$0x1]
        %v929 = vld [vmem:[#allocation2 + $0x80] sm:$0x1]
        %v930 = vld [vmem:[#allocation2 + $0x8c] sm:$0x1]
        %v931 = vld [vmem:[#allocation2 + $0x98] sm:$0x1]
        %v932 = vld [vmem:[#allocation2 + $0xa4] sm:$0x1]
        %v933 = vld [vmem:[#allocation2 + $0xb0] sm:$0x1]
        %v934 = vld [vmem:[#allocation2 + $0xbc] sm:$0x1]
        %vm935 = vsmask.f32 3328
        %vm936 = vsmask.f32 7440
        %vm937 = vmor %vm935, %vm936
        %v939 = vshrl.u32 %v871, 16
        %v941 = vrot.slane %v939, 4
        %v942 = vshll.u32 %v871, 16
        %v944 = vrot.slane %v942, 5
        %v945 = vor.u32 %v941, %v944
        %v946 = vrot.slane %v945, 4
        %v948 = vshll.u32 %v872, 16
        %v950 = vrot.slane %v948, 5
        %v951 = vsel %vm937, %v946, %v950
        %v952 = vshrl.u32 %v872, 16
        %v954 = vrot.slane %v952, 4
        %v955 = vor.u32 %v954, %v950
        %v956 = vrot.slane %v955, 4
        %v958 = vshll.u32 %v919, 16
        %v960 = vrot.slane %v958, 5
        %v961 = vsel %vm937, %v956, %v960
        %v963 = vshrl.u32 %v873, 16
        %v965 = vrot.slane %v963, 4
        %v966 = vshll.u32 %v873, 16
        %v968 = vrot.slane %v966, 5
        %v969 = vor.u32 %v965, %v968
        %v970 = vrot.slane %v969, 4
        %v972 = vshll.u32 %v874, 16
        %v974 = vrot.slane %v972, 5
        %v975 = vsel %vm937, %v970, %v974
        %v976 = vshrl.u32 %v874, 16
        %v978 = vrot.slane %v976, 4
        %v979 = vor.u32 %v978, %v974
        %v980 = vrot.slane %v979, 4
        %v982 = vshll.u32 %v920, 16
        %v984 = vrot.slane %v982, 5
        %v985 = vsel %vm937, %v980, %v984
        %v987 = vshrl.u32 %v875, 16
        %v989 = vrot.slane %v987, 4
        %v990 = vshll.u32 %v875, 16
        %v992 = vrot.slane %v990, 5
        %v993 = vor.u32 %v989, %v992
        %v994 = vrot.slane %v993, 4
        %v996 = vshll.u32 %v876, 16
        %v998 = vrot.slane %v996, 5
        %v999 = vsel %vm937, %v994, %v998
        %v1000 = vshrl.u32 %v876, 16
        %v1002 = vrot.slane %v1000, 4
        %v1003 = vor.u32 %v1002, %v998
        %v1004 = vrot.slane %v1003, 4
        %v1006 = vshll.u32 %v921, 16
        %v1008 = vrot.slane %v1006, 5
        %v1009 = vsel %vm937, %v1004, %v1008
        %v1011 = vshrl.u32 %v877, 16
        %v1013 = vrot.slane %v1011, 4
        %v1014 = vshll.u32 %v877, 16
        %v1016 = vrot.slane %v1014, 5
        %v1017 = vor.u32 %v1013, %v1016
        %v1018 = vrot.slane %v1017, 4
        %v1020 = vshll.u32 %v878, 16
        %v1022 = vrot.slane %v1020, 5
        %v1023 = vsel %vm937, %v1018, %v1022
        %v1024 = vshrl.u32 %v878, 16
        %v1026 = vrot.slane %v1024, 4
        %v1027 = vor.u32 %v1026, %v1022
        %v1028 = vrot.slane %v1027, 4
        %v1030 = vshll.u32 %v922, 16
        %v1032 = vrot.slane %v1030, 5
        %v1033 = vsel %vm937, %v1028, %v1032
        %v1035 = vshrl.u32 %v879, 16
        %v1037 = vrot.slane %v1035, 4
        %v1038 = vshll.u32 %v879, 16
        %v1040 = vrot.slane %v1038, 5
        %v1041 = vor.u32 %v1037, %v1040
        %v1042 = vrot.slane %v1041, 4
        %v1044 = vshll.u32 %v880, 16
        %v1046 = vrot.slane %v1044, 5
        %v1047 = vsel %vm937, %v1042, %v1046
        %v1048 = vshrl.u32 %v880, 16
        %v1050 = vrot.slane %v1048, 4
        %v1051 = vor.u32 %v1050, %v1046
        %v1052 = vrot.slane %v1051, 4
        %v1054 = vshll.u32 %v923, 16
        %v1056 = vrot.slane %v1054, 5
        %v1057 = vsel %vm937, %v1052, %v1056
        %v1059 = vshrl.u32 %v881, 16
        %v1061 = vrot.slane %v1059, 4
        %v1062 = vshll.u32 %v881, 16
        %v1064 = vrot.slane %v1062, 5
        %v1065 = vor.u32 %v1061, %v1064
        %v1066 = vrot.slane %v1065, 4
        %v1068 = vshll.u32 %v882, 16
        %v1070 = vrot.slane %v1068, 5
        %v1071 = vsel %vm937, %v1066, %v1070
        %v1072 = vshrl.u32 %v882, 16
        %v1074 = vrot.slane %v1072, 4
        %v1075 = vor.u32 %v1074, %v1070
        %v1076 = vrot.slane %v1075, 4
        %v1078 = vshll.u32 %v924, 16
        %v1080 = vrot.slane %v1078, 5
        %v1081 = vsel %vm937, %v1076, %v1080
        %v1083 = vshrl.u32 %v883, 16
        %v1085 = vrot.slane %v1083, 4
        %v1086 = vshll.u32 %v883, 16
        %v1088 = vrot.slane %v1086, 5
        %v1089 = vor.u32 %v1085, %v1088
        %v1090 = vrot.slane %v1089, 4
        %v1092 = vshll.u32 %v884, 16
        %v1094 = vrot.slane %v1092, 5
        %v1095 = vsel %vm937, %v1090, %v1094
        %v1096 = vshrl.u32 %v884, 16
        %v1098 = vrot.slane %v1096, 4
        %v1099 = vor.u32 %v1098, %v1094
        %v1100 = vrot.slane %v1099, 4
        %v1102 = vshll.u32 %v925, 16
        %v1104 = vrot.slane %v1102, 5
        %v1105 = vsel %vm937, %v1100, %v1104
        %v1107 = vshrl.u32 %v885, 16
        %v1109 = vrot.slane %v1107, 4
        %v1110 = vshll.u32 %v885, 16
        %v1112 = vrot.slane %v1110, 5
        %v1113 = vor.u32 %v1109, %v1112
        %v1114 = vrot.slane %v1113, 4
        %v1116 = vshll.u32 %v886, 16
        %v1118 = vrot.slane %v1116, 5
        %v1119 = vsel %vm937, %v1114, %v1118
        %v1120 = vshrl.u32 %v886, 16
        %v1122 = vrot.slane %v1120, 4
        %v1123 = vor.u32 %v1122, %v1118
        %v1124 = vrot.slane %v1123, 4
        %v1126 = vshll.u32 %v926, 16
        %v1128 = vrot.slane %v1126, 5
        %v1129 = vsel %vm937, %v1124, %v1128
        %v1131 = vshrl.u32 %v887, 16
        %v1133 = vrot.slane %v1131, 4
        %v1134 = vshll.u32 %v887, 16
        %v1136 = vrot.slane %v1134, 5
        %v1137 = vor.u32 %v1133, %v1136
        %v1138 = vrot.slane %v1137, 4
        %v1140 = vshll.u32 %v888, 16
        %v1142 = vrot.slane %v1140, 5
        %v1143 = vsel %vm937, %v1138, %v1142
        %v1144 = vshrl.u32 %v888, 16
        %v1146 = vrot.slane %v1144, 4
        %v1147 = vor.u32 %v1146, %v1142
        %v1148 = vrot.slane %v1147, 4
        %v1150 = vshll.u32 %v927, 16
        %v1152 = vrot.slane %v1150, 5
        %v1153 = vsel %vm937, %v1148, %v1152
        %v1155 = vshrl.u32 %v889, 16
        %v1157 = vrot.slane %v1155, 4
        %v1158 = vshll.u32 %v889, 16
        %v1160 = vrot.slane %v1158, 5
        %v1161 = vor.u32 %v1157, %v1160
        %v1162 = vrot.slane %v1161, 4
        %v1164 = vshll.u32 %v890, 16
        %v1166 = vrot.slane %v1164, 5
        %v1167 = vsel %vm937, %v1162, %v1166
        %v1168 = vshrl.u32 %v890, 16
        %v1170 = vrot.slane %v1168, 4
        %v1171 = vor.u32 %v1170, %v1166
        %v1172 = vrot.slane %v1171, 4
        %v1174 = vshll.u32 %v928, 16
        %v1176 = vrot.slane %v1174, 5
        %v1177 = vsel %vm937, %v1172, %v1176
        %v1179 = vshrl.u32 %v891, 16
        %v1181 = vrot.slane %v1179, 4
        %v1182 = vshll.u32 %v891, 16
        %v1184 = vrot.slane %v1182, 5
        %v1185 = vor.u32 %v1181, %v1184
        %v1186 = vrot.slane %v1185, 4
        %v1188 = vshll.u32 %v892, 16
        %v1190 = vrot.slane %v1188, 5
        %v1191 = vsel %vm937, %v1186, %v1190
        %v1192 = vshrl.u32 %v892, 16
        %v1194 = vrot.slane %v1192, 4
        %v1195 = vor.u32 %v1194, %v1190
        %v1196 = vrot.slane %v1195, 4
        %v1198 = vshll.u32 %v929, 16
        %v1200 = vrot.slane %v1198, 5
        %v1201 = vsel %vm937, %v1196, %v1200
        %v1203 = vshrl.u32 %v893, 16
        %v1205 = vrot.slane %v1203, 4
        %v1206 = vshll.u32 %v893, 16
        %v1208 = vrot.slane %v1206, 5
        %v1209 = vor.u32 %v1205, %v1208
        %v1210 = vrot.slane %v1209, 4
        %v1212 = vshll.u32 %v894, 16
        %v1214 = vrot.slane %v1212, 5
        %v1215 = vsel %vm937, %v1210, %v1214
        %v1216 = vshrl.u32 %v894, 16
        %v1218 = vrot.slane %v1216, 4
        %v1219 = vor.u32 %v1218, %v1214
        %v1220 = vrot.slane %v1219, 4
        %v1222 = vshll.u32 %v930, 16
        %v1224 = vrot.slane %v1222, 5
        %v1225 = vsel %vm937, %v1220, %v1224
        %v1227 = vshrl.u32 %v895, 16
        %v1229 = vrot.slane %v1227, 4
        %v1230 = vshll.u32 %v895, 16
        %v1232 = vrot.slane %v1230, 5
        %v1233 = vor.u32 %v1229, %v1232
        %v1234 = vrot.slane %v1233, 4
        %v1236 = vshll.u32 %v896, 16
        %v1238 = vrot.slane %v1236, 5
        %v1239 = vsel %vm937, %v1234, %v1238
        %v1240 = vshrl.u32 %v896, 16
        %v1242 = vrot.slane %v1240, 4
        %v1243 = vor.u32 %v1242, %v1238
        %v1244 = vrot.slane %v1243, 4
        %v1246 = vshll.u32 %v931, 16
        %v1248 = vrot.slane %v1246, 5
        %v1249 = vsel %vm937, %v1244, %v1248
        %v1251 = vshrl.u32 %v897, 16
        %v1253 = vrot.slane %v1251, 4
        %v1254 = vshll.u32 %v897, 16
        %v1256 = vrot.slane %v1254, 5
        %v1257 = vor.u32 %v1253, %v1256
        %v1258 = vrot.slane %v1257, 4
        %v1260 = vshll.u32 %v898, 16
        %v1262 = vrot.slane %v1260, 5
        %v1263 = vsel %vm937, %v1258, %v1262
        %v1264 = vshrl.u32 %v898, 16
        %v1266 = vrot.slane %v1264, 4
        %v1267 = vor.u32 %v1266, %v1262
        %v1268 = vrot.slane %v1267, 4
        %v1270 = vshll.u32 %v932, 16
        %v1272 = vrot.slane %v1270, 5
        %v1273 = vsel %vm937, %v1268, %v1272
        %v1275 = vshrl.u32 %v899, 16
        %v1277 = vrot.slane %v1275, 4
        %v1278 = vshll.u32 %v899, 16
        %v1280 = vrot.slane %v1278, 5
        %v1281 = vor.u32 %v1277, %v1280
        %v1282 = vrot.slane %v1281, 4
        %v1284 = vshll.u32 %v900, 16
        %v1286 = vrot.slane %v1284, 5
        %v1287 = vsel %vm937, %v1282, %v1286
        %v1288 = vshrl.u32 %v900, 16
        %v1290 = vrot.slane %v1288, 4
        %v1291 = vor.u32 %v1290, %v1286
        %v1292 = vrot.slane %v1291, 4
        %v1294 = vshll.u32 %v933, 16
        %v1296 = vrot.slane %v1294, 5
        %v1297 = vsel %vm937, %v1292, %v1296
        %v1299 = vshrl.u32 %v901, 16
        %v1301 = vrot.slane %v1299, 4
        %v1302 = vshll.u32 %v901, 16
        %v1304 = vrot.slane %v1302, 5
        %v1305 = vor.u32 %v1301, %v1304
        %v1306 = vrot.slane %v1305, 4
        %v1308 = vshll.u32 %v902, 16
        %v1310 = vrot.slane %v1308, 5
        %v1311 = vsel %vm937, %v1306, %v1310
        %v1312 = vshrl.u32 %v902, 16
        %v1314 = vrot.slane %v1312, 4
        %v1315 = vor.u32 %v1314, %v1310
        %v1316 = vrot.slane %v1315, 4
        %v1318 = vshll.u32 %v934, 16
        %v1320 = vrot.slane %v1318, 5
        %v1321 = vsel %vm937, %v1316, %v1320
        %s1322 = scalar_lea.vmem [#allocation6], 64
        %v1323 = vld [vmem:[%s1322] sm:$0xf]
        %v1324 = vld [vmem:[%s1322 + $0x4] sm:$0xf]
        %v1325 = vld [vmem:[%s1322 + $0x8] sm:$0xf]
        %v1326 = vld [vmem:[%s1322 + $0xc] sm:$0xf]
        %v1327 = vld [vmem:[%s1322 + $0x10] sm:$0xf]
        %v1328 = vld [vmem:[%s1322 + $0x14] sm:$0xf]
        %v1329 = vld [vmem:[%s1322 + $0x18] sm:$0xf]
        %v1330 = vld [vmem:[%s1322 + $0x1c] sm:$0xf]
        %v1331 = vld [vmem:[%s1322 + $0x20] sm:$0xf]
        %v1332 = vld [vmem:[%s1322 + $0x24] sm:$0xf]
        %v1333 = vld [vmem:[%s1322 + $0x28] sm:$0xf]
        %v1334 = vld [vmem:[%s1322 + $0x2c] sm:$0xf]
        %v1335 = vld [vmem:[%s1322 + $0x30] sm:$0xf]
        %v1336 = vld [vmem:[%s1322 + $0x34] sm:$0xf]
        %v1337 = vld [vmem:[%s1322 + $0x38] sm:$0xf]
        %v1338 = vld [vmem:[%s1322 + $0x3c] sm:$0xf]
        %v1339 = vunpack.c.l.b16 %v951
        %v1340 = vunpack.c.l.b16 %v961
        %v1341 = vunpack.c.l.b16 %v975
        %v1342 = vunpack.c.l.b16 %v985
        %v1343 = vunpack.c.l.b16 %v999
        %v1344 = vunpack.c.l.b16 %v1009
        %v1345 = vunpack.c.l.b16 %v1023
        %v1346 = vunpack.c.l.b16 %v1033
        %v1347 = vunpack.c.l.b16 %v1047
        %v1348 = vunpack.c.l.b16 %v1057
        %v1349 = vunpack.c.l.b16 %v1071
        %v1350 = vunpack.c.l.b16 %v1081
        %v1351 = vunpack.c.l.b16 %v1095
        %v1352 = vunpack.c.l.b16 %v1105
        %v1353 = vunpack.c.l.b16 %v1119
        %v1354 = vunpack.c.l.b16 %v1129
        %v1355 = vunpack.c.l.b16 %v1143
        %v1356 = vunpack.c.l.b16 %v1153
        %v1357 = vunpack.c.l.b16 %v1167
        %v1358 = vunpack.c.l.b16 %v1177
        %v1359 = vunpack.c.l.b16 %v1191
        %v1360 = vunpack.c.l.b16 %v1201
        %v1361 = vunpack.c.l.b16 %v1215
        %v1362 = vunpack.c.l.b16 %v1225
        %v1363 = vunpack.c.l.b16 %v1239
        %v1364 = vunpack.c.l.b16 %v1249
        %v1365 = vunpack.c.l.b16 %v1263
        %v1366 = vunpack.c.l.b16 %v1273
        %v1367 = vunpack.c.l.b16 %v1287
        %v1368 = vunpack.c.l.b16 %v1297
        %v1369 = vunpack.c.l.b16 %v1311
        %v1370 = vunpack.c.l.b16 %v1321
        %v1371 = vpack.c.b16 %v1340, %v1339
        %v1372 = vpack.c.b16 %v1342, %v1341
        %v1373 = vpack.c.b16 %v1344, %v1343
        %v1374 = vpack.c.b16 %v1346, %v1345
        %v1375 = vpack.c.b16 %v1348, %v1347
        %v1376 = vpack.c.b16 %v1350, %v1349
        %v1377 = vpack.c.b16 %v1352, %v1351
        %v1378 = vpack.c.b16 %v1354, %v1353
        %v1379 = vpack.c.b16 %v1356, %v1355
        %v1380 = vpack.c.b16 %v1358, %v1357
        %v1381 = vpack.c.b16 %v1360, %v1359
        %v1382 = vpack.c.b16 %v1362, %v1361
        %v1383 = vpack.c.b16 %v1364, %v1363
        %v1384 = vpack.c.b16 %v1366, %v1365
        %v1385 = vpack.c.b16 %v1368, %v1367
        %v1386 = vpack.c.b16 %v1370, %v1369
        %v1419 = vunpack.c.l.b16 %v1323
        %v1420 = vunpack.c.l.b16 %v1324
        %v1421 = vunpack.c.l.b16 %v1325
        %v1422 = vunpack.c.l.b16 %v1326
        %v1423 = vunpack.c.l.b16 %v1327
        %v1424 = vunpack.c.l.b16 %v1328
        %v1425 = vunpack.c.l.b16 %v1329
        %v1426 = vunpack.c.l.b16 %v1330
        %v1427 = vunpack.c.l.b16 %v1331
        %v1428 = vunpack.c.l.b16 %v1332
        %v1429 = vunpack.c.l.b16 %v1333
        %v1430 = vunpack.c.l.b16 %v1334
        %v1431 = vunpack.c.l.b16 %v1335
        %v1432 = vunpack.c.l.b16 %v1336
        %v1433 = vunpack.c.l.b16 %v1337
        %v1434 = vunpack.c.l.b16 %v1338
        %v1435 = vpack.c.b16 %v1420, %v1419
        %v1436 = vpack.c.b16 %v1422, %v1421
        %v1437 = vpack.c.b16 %v1424, %v1423
        %v1438 = vpack.c.b16 %v1426, %v1425
        %v1439 = vpack.c.b16 %v1428, %v1427
        %v1440 = vpack.c.b16 %v1430, %v1429
        %v1441 = vpack.c.b16 %v1432, %v1431
        %v1442 = vpack.c.b16 %v1434, %v1433
        %1451 = vmatprep.subr.bf16.mxu0 0
        %1452 = vmatpush1.bf16.msra.mxu0 %v1435
        %1453 = vmatprep.subr.bf16.mxu0 0
        %1454 = vmatpush1.bf16.msra.mxu0 %v1436
        %1455 = vmatprep.subr.bf16.mxu0 0
        %1456 = vmatpush1.bf16.msra.mxu0 %v1437
        %1457 = vmatprep.subr.bf16.mxu0 0
        %1458 = vmatpush1.bf16.msra.mxu0 %v1438
        %1459 = vmatprep.subr.bf16.mxu0 0
        %1460 = vmatpush1.bf16.msra.mxu0 %v1439
        %1461 = vmatprep.subr.bf16.mxu0 0
        %1462 = vmatpush1.bf16.msra.mxu0 %v1440
        %1463 = vmatprep.subr.bf16.mxu0 0
        %1464 = vmatpush1.bf16.msra.mxu0 %v1441
        %1465 = vmatprep.subr.bf16.mxu0 0
        %1466 = vmatpush1.bf16.msra.mxu0 %v1442
        %1467 = vmatprep.subr.bf16.mxu0 0
        %1468 = vmatpush1.bf16.msra.mxu0 0
        %1469 = vmatprep.subr.bf16.mxu0 0
        %1470 = vmatpush1.bf16.msra.mxu0 0
        %1471 = vmatprep.subr.bf16.mxu0 0
        %1472 = vmatpush1.bf16.msra.mxu0 0
        %1473 = vmatprep.subr.bf16.mxu0 0
        %1474 = vmatpush1.bf16.msra.mxu0 0
        %1475 = vmatprep.subr.bf16.mxu0 0
        %1476 = vmatpush1.bf16.msra.mxu0 0
        %1477 = vmatprep.subr.bf16.mxu0 0
        %1478 = vmatpush1.bf16.msra.mxu0 0
        %1479 = vmatprep.subr.bf16.mxu0 0
        %1480 = vmatpush1.bf16.msra.mxu0 0
        %1481 = vmatprep.subr.bf16.mxu0 0
        %1482 = vmatpush1.bf16.msra.mxu0 0
        %1483 = vmatprep.mubr.bf16.mxu0 0
        %1484 = vmatmul.mubr.bf16.gmra.mrb[0].mxu0 %v1371
        %v1485 = vpop.f32.mrb[0].mxu0
        %v1486 = vadd.f32 0.0, %v1485
        %v1487 = vpop.f32.mrb[0].mxu0
        %v1488 = vpop.f32.mrb[0].mxu0
        %v1489 = vadd.f32 0.0, %v1488
        %v1490 = vpop.f32.mrb[0].mxu0
        %1491 = vmatprep.mubr.bf16.mxu0 0
        %1492 = vmatmul.mubr.bf16.gmra.mrb[0].mxu0 %v1372
        %v1493 = vpop.f32.mrb[0].mxu0
        %v1494 = vadd.f32 0.0, %v1493
        %v1495 = vpop.f32.mrb[0].mxu0
        %v1496 = vpop.f32.mrb[0].mxu0
        %v1497 = vadd.f32 0.0, %v1496
        %v1498 = vpop.f32.mrb[0].mxu0
        %1499 = vmatprep.mubr.bf16.mxu0 0
        %1500 = vmatmul.mubr.bf16.gmra.mrb[0].mxu0 %v1373
        %v1501 = vpop.f32.mrb[0].mxu0
        %v1502 = vadd.f32 0.0, %v1501
        %v1503 = vpop.f32.mrb[0].mxu0
        %v1504 = vpop.f32.mrb[0].mxu0
        %v1505 = vadd.f32 0.0, %v1504
        %v1506 = vpop.f32.mrb[0].mxu0
        %1507 = vmatprep.mubr.bf16.mxu0 0
        %1508 = vmatmul.mubr.bf16.gmra.mrb[0].mxu0 %v1374
        %v1509 = vpop.f32.mrb[0].mxu0
        %v1510 = vadd.f32 0.0, %v1509
        %v1511 = vpop.f32.mrb[0].mxu0
        %v1512 = vpop.f32.mrb[0].mxu0
        %v1513 = vadd.f32 0.0, %v1512
        %v1514 = vpop.f32.mrb[0].mxu0
        %1515 = vmatprep.mubr.bf16.mxu0 0
        %1516 = vmatmul.mubr.bf16.gmra.mrb[0].mxu0 %v1375
        %v1517 = vpop.f32.mrb[0].mxu0
        %v1518 = vadd.f32 0.0, %v1517
        %v1519 = vpop.f32.mrb[0].mxu0
        %v1520 = vpop.f32.mrb[0].mxu0
        %v1521 = vadd.f32 0.0, %v1520
        %v1522 = vpop.f32.mrb[0].mxu0
        %1523 = vmatprep.mubr.bf16.mxu0 0
        %1524 = vmatmul.mubr.bf16.gmra.mrb[0].mxu0 %v1376
        %v1525 = vpop.f32.mrb[0].mxu0
        %v1526 = vadd.f32 0.0, %v1525
        %v1527 = vpop.f32.mrb[0].mxu0
        %v1528 = vpop.f32.mrb[0].mxu0
        %v1529 = vadd.f32 0.0, %v1528
        %v1530 = vpop.f32.mrb[0].mxu0
        %1531 = vmatprep.mubr.bf16.mxu0 0
        %1532 = vmatmul.mubr.bf16.gmra.mrb[0].mxu0 %v1377
        %v1533 = vpop.f32.mrb[0].mxu0
        %v1534 = vadd.f32 0.0, %v1533
        %v1535 = vpop.f32.mrb[0].mxu0
        %v1536 = vpop.f32.mrb[0].mxu0
        %v1537 = vadd.f32 0.0, %v1536
        %v1538 = vpop.f32.mrb[0].mxu0
        %1539 = vmatprep.mubr.bf16.mxu0 0
        %1540 = vmatmul.mubr.bf16.gmra.mrb[0].mxu0 %v1378
        %v1541 = vpop.f32.mrb[0].mxu0
        %v1542 = vadd.f32 0.0, %v1541
        %v1543 = vpop.f32.mrb[0].mxu0
        %v1544 = vpop.f32.mrb[0].mxu0
        %v1545 = vadd.f32 0.0, %v1544
        %v1546 = vpop.f32.mrb[0].mxu0
        %1547 = vmatprep.mubr.bf16.mxu0 0
        %1548 = vmatmul.mubr.bf16.gmra.mrb[0].mxu0 %v1379
        %v1549 = vpop.f32.mrb[0].mxu0
        %v1550 = vadd.f32 0.0, %v1549
        %v1551 = vpop.f32.mrb[0].mxu0
        %v1552 = vpop.f32.mrb[0].mxu0
        %v1553 = vadd.f32 0.0, %v1552
        %v1554 = vpop.f32.mrb[0].mxu0
        %1555 = vmatprep.mubr.bf16.mxu0 0
        %1556 = vmatmul.mubr.bf16.gmra.mrb[0].mxu0 %v1380
        %v1557 = vpop.f32.mrb[0].mxu0
        %v1558 = vadd.f32 0.0, %v1557
        %v1559 = vpop.f32.mrb[0].mxu0
        %v1560 = vpop.f32.mrb[0].mxu0
        %v1561 = vadd.f32 0.0, %v1560
        %v1562 = vpop.f32.mrb[0].mxu0
        %1563 = vmatprep.mubr.bf16.mxu0 0
        %1564 = vmatmul.mubr.bf16.gmra.mrb[0].mxu0 %v1381
        %v1565 = vpop.f32.mrb[0].mxu0
        %v1566 = vadd.f32 0.0, %v1565
        %v1567 = vpop.f32.mrb[0].mxu0
        %v1568 = vpop.f32.mrb[0].mxu0
        %v1569 = vadd.f32 0.0, %v1568
        %v1570 = vpop.f32.mrb[0].mxu0
        %1571 = vmatprep.mubr.bf16.mxu0 0
        %1572 = vmatmul.mubr.bf16.gmra.mrb[0].mxu0 %v1382
        %v1573 = vpop.f32.mrb[0].mxu0
        %v1574 = vadd.f32 0.0, %v1573
        %v1575 = vpop.f32.mrb[0].mxu0
        %v1576 = vpop.f32.mrb[0].mxu0
        %v1577 = vadd.f32 0.0, %v1576
        %v1578 = vpop.f32.mrb[0].mxu0
        %1579 = vmatprep.mubr.bf16.mxu0 0
        %1580 = vmatmul.mubr.bf16.gmra.mrb[0].mxu0 %v1383
        %v1581 = vpop.f32.mrb[0].mxu0
        %v1582 = vadd.f32 0.0, %v1581
        %v1583 = vpop.f32.mrb[0].mxu0
        %v1584 = vpop.f32.mrb[0].mxu0
        %v1585 = vadd.f32 0.0, %v1584
        %v1586 = vpop.f32.mrb[0].mxu0
        %1587 = vmatprep.mubr.bf16.mxu0 0
        %1588 = vmatmul.mubr.bf16.gmra.mrb[0].mxu0 %v1384
        %v1589 = vpop.f32.mrb[0].mxu0
        %v1590 = vadd.f32 0.0, %v1589
        %v1591 = vpop.f32.mrb[0].mxu0
        %v1592 = vpop.f32.mrb[0].mxu0
        %v1593 = vadd.f32 0.0, %v1592
        %v1594 = vpop.f32.mrb[0].mxu0
        %1595 = vmatprep.mubr.bf16.mxu0 0
        %1596 = vmatmul.mubr.bf16.gmra.mrb[0].mxu0 %v1385
        %v1597 = vpop.f32.mrb[0].mxu0
        %v1598 = vadd.f32 0.0, %v1597
        %v1599 = vpop.f32.mrb[0].mxu0
        %v1600 = vpop.f32.mrb[0].mxu0
        %v1601 = vadd.f32 0.0, %v1600
        %v1602 = vpop.f32.mrb[0].mxu0
        %1603 = vmatprep.mubr.bf16.mxu0 0
        %1604 = vmatmul.mubr.bf16.gmra.mrb[0].mxu0 %v1386
        %v1605 = vpop.f32.mrb[0].mxu0
        %v1606 = vadd.f32 0.0, %v1605
        %v1607 = vpop.f32.mrb[0].mxu0
        %v1608 = vpop.f32.mrb[0].mxu0
        %v1609 = vadd.f32 0.0, %v1608
        %v1610 = vpop.f32.mrb[0].mxu0
        %1611 = vdwg.mxu0
        %v1644 = vunpack.c.l.b16 %v871
        %v1645 = vunpack.c.l.b16 %v872
        %v1646 = vunpack.c.l.b16 %v873
        %v1647 = vunpack.c.l.b16 %v874
        %v1648 = vunpack.c.l.b16 %v875
        %v1649 = vunpack.c.l.b16 %v876
        %v1650 = vunpack.c.l.b16 %v877
        %v1651 = vunpack.c.l.b16 %v878
        %v1652 = vunpack.c.l.b16 %v879
        %v1653 = vunpack.c.l.b16 %v880
        %v1654 = vunpack.c.l.b16 %v881
        %v1655 = vunpack.c.l.b16 %v882
        %v1656 = vunpack.c.l.b16 %v883
        %v1657 = vunpack.c.l.b16 %v884
        %v1658 = vunpack.c.l.b16 %v885
        %v1659 = vunpack.c.l.b16 %v886
        %v1660 = vunpack.c.l.b16 %v887
        %v1661 = vunpack.c.l.b16 %v888
        %v1662 = vunpack.c.l.b16 %v889
        %v1663 = vunpack.c.l.b16 %v890
        %v1664 = vunpack.c.l.b16 %v891
        %v1665 = vunpack.c.l.b16 %v892
        %v1666 = vunpack.c.l.b16 %v893
        %v1667 = vunpack.c.l.b16 %v894
        %v1668 = vunpack.c.l.b16 %v895
        %v1669 = vunpack.c.l.b16 %v896
        %v1670 = vunpack.c.l.b16 %v897
        %v1671 = vunpack.c.l.b16 %v898
        %v1672 = vunpack.c.l.b16 %v899
        %v1673 = vunpack.c.l.b16 %v900
        %v1674 = vunpack.c.l.b16 %v901
        %v1675 = vunpack.c.l.b16 %v902
        %v1676 = vpack.c.b16 %v1645, %v1644
        %v1677 = vpack.c.b16 %v1647, %v1646
        %v1678 = vpack.c.b16 %v1649, %v1648
        %v1679 = vpack.c.b16 %v1651, %v1650
        %v1680 = vpack.c.b16 %v1653, %v1652
        %v1681 = vpack.c.b16 %v1655, %v1654
        %v1682 = vpack.c.b16 %v1657, %v1656
        %v1683 = vpack.c.b16 %v1659, %v1658
        %v1684 = vpack.c.b16 %v1661, %v1660
        %v1685 = vpack.c.b16 %v1663, %v1662
        %v1686 = vpack.c.b16 %v1665, %v1664
        %v1687 = vpack.c.b16 %v1667, %v1666
        %v1688 = vpack.c.b16 %v1669, %v1668
        %v1689 = vpack.c.b16 %v1671, %v1670
        %v1690 = vpack.c.b16 %v1673, %v1672
        %v1691 = vpack.c.b16 %v1675, %v1674
        %v1724 = vunpack.c.l.b16 %v903
        %v1725 = vunpack.c.l.b16 %v904
        %v1726 = vunpack.c.l.b16 %v905
        %v1727 = vunpack.c.l.b16 %v906
        %v1728 = vunpack.c.l.b16 %v907
        %v1729 = vunpack.c.l.b16 %v908
        %v1730 = vunpack.c.l.b16 %v909
        %v1731 = vunpack.c.l.b16 %v910
        %v1732 = vunpack.c.l.b16 %v911
        %v1733 = vunpack.c.l.b16 %v912
        %v1734 = vunpack.c.l.b16 %v913
        %v1735 = vunpack.c.l.b16 %v914
        %v1736 = vunpack.c.l.b16 %v915
        %v1737 = vunpack.c.l.b16 %v916
        %v1738 = vunpack.c.l.b16 %v917
        %v1739 = vunpack.c.l.b16 %v918
        %v1740 = vpack.c.b16 %v1725, %v1724
        %v1741 = vpack.c.b16 %v1727, %v1726
        %v1742 = vpack.c.b16 %v1729, %v1728
        %v1743 = vpack.c.b16 %v1731, %v1730
        %v1744 = vpack.c.b16 %v1733, %v1732
        %v1745 = vpack.c.b16 %v1735, %v1734
        %v1746 = vpack.c.b16 %v1737, %v1736
        %v1747 = vpack.c.b16 %v1739, %v1738
        %1756 = vmatprep.subr.bf16.mxu0 0
        %1757 = vmatpush1.bf16.msra.mxu0 %v1740
        %1758 = vmatprep.subr.bf16.mxu0 0
        %1759 = vmatpush1.bf16.msra.mxu0 %v1741
        %1760 = vmatprep.subr.bf16.mxu0 0
        %1761 = vmatpush1.bf16.msra.mxu0 %v1742
        %1762 = vmatprep.subr.bf16.mxu0 0
        %1763 = vmatpush1.bf16.msra.mxu0 %v1743
        %1764 = vmatprep.subr.bf16.mxu0 0
        %1765 = vmatpush1.bf16.msra.mxu0 %v1744
        %1766 = vmatprep.subr.bf16.mxu0 0
        %1767 = vmatpush1.bf16.msra.mxu0 %v1745
        %1768 = vmatprep.subr.bf16.mxu0 0
        %1769 = vmatpush1.bf16.msra.mxu0 %v1746
        %1770 = vmatprep.subr.bf16.mxu0 0
        %1771 = vmatpush1.bf16.msra.mxu0 %v1747
        %1772 = vmatprep.subr.bf16.mxu0 0
        %1773 = vmatpush1.bf16.msra.mxu0 0
        %1774 = vmatprep.subr.bf16.mxu0 0
        %1775 = vmatpush1.bf16.msra.mxu0 0
        %1776 = vmatprep.subr.bf16.mxu0 0
        %1777 = vmatpush1.bf16.msra.mxu0 0
        %1778 = vmatprep.subr.bf16.mxu0 0
        %1779 = vmatpush1.bf16.msra.mxu0 0
        %1780 = vmatprep.subr.bf16.mxu0 0
        %1781 = vmatpush1.bf16.msra.mxu0 0
        %1782 = vmatprep.subr.bf16.mxu0 0
        %1783 = vmatpush1.bf16.msra.mxu0 0
        %1784 = vmatprep.subr.bf16.mxu0 0
        %1785 = vmatpush1.bf16.msra.mxu0 0
        %1786 = vmatprep.subr.bf16.mxu0 0
        %1787 = vmatpush1.bf16.msra.mxu0 0
        %1788 = vmatprep.mubr.bf16.mxu0 0
        %1789 = vmatmul.mubr.bf16.gmra.mrb[0].mxu0 %v1676
        %v1790 = vpop.f32.mrb[0].mxu0
        %v1791 = vadd.f32 %v1486, %v1790
        %v1792 = vpop.f32.mrb[0].mxu0
        %v1793 = vpop.f32.mrb[0].mxu0
        %v1794 = vadd.f32 %v1489, %v1793
        %v1795 = vpop.f32.mrb[0].mxu0
        %1796 = vmatprep.mubr.bf16.mxu0 0
        %1797 = vmatmul.mubr.bf16.gmra.mrb[0].mxu0 %v1677
        %v1798 = vpop.f32.mrb[0].mxu0
        %v1799 = vadd.f32 %v1494, %v1798
        %v1800 = vpop.f32.mrb[0].mxu0
        %v1801 = vpop.f32.mrb[0].mxu0
        %v1802 = vadd.f32 %v1497, %v1801
        %v1803 = vpop.f32.mrb[0].mxu0
        %1804 = vmatprep.mubr.bf16.mxu0 0
        %1805 = vmatmul.mubr.bf16.gmra.mrb[0].mxu0 %v1678
        %v1806 = vpop.f32.mrb[0].mxu0
        %v1807 = vadd.f32 %v1502, %v1806
        %v1808 = vpop.f32.mrb[0].mxu0
        %v1809 = vpop.f32.mrb[0].mxu0
        %v1810 = vadd.f32 %v1505, %v1809
        %v1811 = vpop.f32.mrb[0].mxu0
        %1812 = vmatprep.mubr.bf16.mxu0 0
        %1813 = vmatmul.mubr.bf16.gmra.mrb[0].mxu0 %v1679
        %v1814 = vpop.f32.mrb[0].mxu0
        %v1815 = vadd.f32 %v1510, %v1814
        %v1816 = vpop.f32.mrb[0].mxu0
        %v1817 = vpop.f32.mrb[0].mxu0
        %v1818 = vadd.f32 %v1513, %v1817
        %v1819 = vpop.f32.mrb[0].mxu0
        %1820 = vmatprep.mubr.bf16.mxu0 0
        %1821 = vmatmul.mubr.bf16.gmra.mrb[0].mxu0 %v1680
        %v1822 = vpop.f32.mrb[0].mxu0
        %v1823 = vadd.f32 %v1518, %v1822
        %v1824 = vpop.f32.mrb[0].mxu0
        %v1825 = vpop.f32.mrb[0].mxu0
        %v1826 = vadd.f32 %v1521, %v1825
        %v1827 = vpop.f32.mrb[0].mxu0
        %1828 = vmatprep.mubr.bf16.mxu0 0
        %1829 = vmatmul.mubr.bf16.gmra.mrb[0].mxu0 %v1681
        %v1830 = vpop.f32.mrb[0].mxu0
        %v1831 = vadd.f32 %v1526, %v1830
        %v1832 = vpop.f32.mrb[0].mxu0
        %v1833 = vpop.f32.mrb[0].mxu0
        %v1834 = vadd.f32 %v1529, %v1833
        %v1835 = vpop.f32.mrb[0].mxu0
        %1836 = vmatprep.mubr.bf16.mxu0 0
        %1837 = vmatmul.mubr.bf16.gmra.mrb[0].mxu0 %v1682
        %v1838 = vpop.f32.mrb[0].mxu0
        %v1839 = vadd.f32 %v1534, %v1838
        %v1840 = vpop.f32.mrb[0].mxu0
        %v1841 = vpop.f32.mrb[0].mxu0
        %v1842 = vadd.f32 %v1537, %v1841
        %v1843 = vpop.f32.mrb[0].mxu0
        %1844 = vmatprep.mubr.bf16.mxu0 0
        %1845 = vmatmul.mubr.bf16.gmra.mrb[0].mxu0 %v1683
        %v1846 = vpop.f32.mrb[0].mxu0
        %v1847 = vadd.f32 %v1542, %v1846
        %v1848 = vpop.f32.mrb[0].mxu0
        %v1849 = vpop.f32.mrb[0].mxu0
        %v1850 = vadd.f32 %v1545, %v1849
        %v1851 = vpop.f32.mrb[0].mxu0
        %1852 = vmatprep.mubr.bf16.mxu0 0
        %1853 = vmatmul.mubr.bf16.gmra.mrb[0].mxu0 %v1684
        %v1854 = vpop.f32.mrb[0].mxu0
        %v1855 = vadd.f32 %v1550, %v1854
        %v1856 = vpop.f32.mrb[0].mxu0
        %v1857 = vpop.f32.mrb[0].mxu0
        %v1858 = vadd.f32 %v1553, %v1857
        %v1859 = vpop.f32.mrb[0].mxu0
        %1860 = vmatprep.mubr.bf16.mxu0 0
        %1861 = vmatmul.mubr.bf16.gmra.mrb[0].mxu0 %v1685
        %v1862 = vpop.f32.mrb[0].mxu0
        %v1863 = vadd.f32 %v1558, %v1862
        %v1864 = vpop.f32.mrb[0].mxu0
        %v1865 = vpop.f32.mrb[0].mxu0
        %v1866 = vadd.f32 %v1561, %v1865
        %v1867 = vpop.f32.mrb[0].mxu0
        %1868 = vmatprep.mubr.bf16.mxu0 0
        %1869 = vmatmul.mubr.bf16.gmra.mrb[0].mxu0 %v1686
        %v1870 = vpop.f32.mrb[0].mxu0
        %v1871 = vadd.f32 %v1566, %v1870
        %v1872 = vpop.f32.mrb[0].mxu0
        %v1873 = vpop.f32.mrb[0].mxu0
        %v1874 = vadd.f32 %v1569, %v1873
        %v1875 = vpop.f32.mrb[0].mxu0
        %1876 = vmatprep.mubr.bf16.mxu0 0
        %1877 = vmatmul.mubr.bf16.gmra.mrb[0].mxu0 %v1687
        %v1878 = vpop.f32.mrb[0].mxu0
        %v1879 = vadd.f32 %v1574, %v1878
        %v1880 = vpop.f32.mrb[0].mxu0
        %v1881 = vpop.f32.mrb[0].mxu0
        %v1882 = vadd.f32 %v1577, %v1881
        %v1883 = vpop.f32.mrb[0].mxu0
        %1884 = vmatprep.mubr.bf16.mxu0 0
        %1885 = vmatmul.mubr.bf16.gmra.mrb[0].mxu0 %v1688
        %v1886 = vpop.f32.mrb[0].mxu0
        %v1887 = vadd.f32 %v1582, %v1886
        %v1888 = vpop.f32.mrb[0].mxu0
        %v1889 = vpop.f32.mrb[0].mxu0
        %v1890 = vadd.f32 %v1585, %v1889
        %v1891 = vpop.f32.mrb[0].mxu0
        %1892 = vmatprep.mubr.bf16.mxu0 0
        %1893 = vmatmul.mubr.bf16.gmra.mrb[0].mxu0 %v1689
        %v1894 = vpop.f32.mrb[0].mxu0
        %v1895 = vadd.f32 %v1590, %v1894
        %v1896 = vpop.f32.mrb[0].mxu0
        %v1897 = vpop.f32.mrb[0].mxu0
        %v1898 = vadd.f32 %v1593, %v1897
        %v1899 = vpop.f32.mrb[0].mxu0
        %1900 = vmatprep.mubr.bf16.mxu0 0
        %1901 = vmatmul.mubr.bf16.gmra.mrb[0].mxu0 %v1690
        %v1902 = vpop.f32.mrb[0].mxu0
        %v1903 = vadd.f32 %v1598, %v1902
        %v1904 = vpop.f32.mrb[0].mxu0
        %v1905 = vpop.f32.mrb[0].mxu0
        %v1906 = vadd.f32 %v1601, %v1905
        %v1907 = vpop.f32.mrb[0].mxu0
        %1908 = vmatprep.mubr.bf16.mxu0 0
        %1909 = vmatmul.mubr.bf16.gmra.mrb[0].mxu0 %v1691
        %v1910 = vpop.f32.mrb[0].mxu0
        %v1911 = vadd.f32 %v1606, %v1910
        %v1912 = vpop.f32.mrb[0].mxu0
        %v1913 = vpop.f32.mrb[0].mxu0
        %v1914 = vadd.f32 %v1609, %v1913
        %v1915 = vpop.f32.mrb[0].mxu0
        %1916 = vdwg.mxu0
        %v1917 = vld [vmem:[#allocation2] sm:$0xe]
        %v1918 = vld [vmem:[#allocation2 + $0xc] sm:$0xe]
        %v1919 = vld [vmem:[#allocation2 + $0x18] sm:$0xe]
        %v1920 = vld [vmem:[#allocation2 + $0x24] sm:$0xe]
        %v1921 = vld [vmem:[#allocation2 + $0x30] sm:$0xe]
        %v1922 = vld [vmem:[#allocation2 + $0x3c] sm:$0xe]
        %v1923 = vld [vmem:[#allocation2 + $0x48] sm:$0xe]
        %v1924 = vld [vmem:[#allocation2 + $0x54] sm:$0xe]
        %v1925 = vld [vmem:[#allocation2 + $0x60] sm:$0xe]
        %v1926 = vld [vmem:[#allocation2 + $0x6c] sm:$0xe]
        %v1927 = vld [vmem:[#allocation2 + $0x78] sm:$0xe]
        %v1928 = vld [vmem:[#allocation2 + $0x84] sm:$0xe]
        %v1929 = vld [vmem:[#allocation2 + $0x90] sm:$0xe]
        %v1930 = vld [vmem:[#allocation2 + $0x9c] sm:$0xe]
        %v1931 = vld [vmem:[#allocation2 + $0xa8] sm:$0xe]
        %v1932 = vld [vmem:[#allocation2 + $0xb4] sm:$0xe]
        %vm1965 = vcmask 1042432
        %vm1966 = vcmask 1046532
        %vm1967 = vmor %vm1965, %vm1966
        %v1968 = vrot.slane %v1917, 5
        %v1969 = vrot.slane %v1968, 4
        %v1970 = vrot.slane %v872, 5
        %v1971 = vsel %vm1967, %v1969, %v1970
        %v1972 = vrot.slane %v1970, 4
        %v1973 = vrot.slane %v919, 5
        %v1974 = vsel %vm1967, %v1972, %v1973
        %v1975 = vrot.slane %v1918, 5
        %v1976 = vrot.slane %v1975, 4
        %v1977 = vrot.slane %v874, 5
        %v1978 = vsel %vm1967, %v1976, %v1977
        %v1979 = vrot.slane %v1977, 4
        %v1980 = vrot.slane %v920, 5
        %v1981 = vsel %vm1967, %v1979, %v1980
        %v1982 = vrot.slane %v1919, 5
        %v1983 = vrot.slane %v1982, 4
        %v1984 = vrot.slane %v876, 5
        %v1985 = vsel %vm1967, %v1983, %v1984
        %v1986 = vrot.slane %v1984, 4
        %v1987 = vrot.slane %v921, 5
        %v1988 = vsel %vm1967, %v1986, %v1987
        %v1989 = vrot.slane %v1920, 5
        %v1990 = vrot.slane %v1989, 4
        %v1991 = vrot.slane %v878, 5
        %v1992 = vsel %vm1967, %v1990, %v1991
        %v1993 = vrot.slane %v1991, 4
        %v1994 = vrot.slane %v922, 5
        %v1995 = vsel %vm1967, %v1993, %v1994
        %v1996 = vrot.slane %v1921, 5
        %v1997 = vrot.slane %v1996, 4
        %v1998 = vrot.slane %v880, 5
        %v1999 = vsel %vm1967, %v1997, %v1998
        %v2000 = vrot.slane %v1998, 4
        %v2001 = vrot.slane %v923, 5
        %v2002 = vsel %vm1967, %v2000, %v2001
        %v2003 = vrot.slane %v1922, 5
        %v2004 = vrot.slane %v2003, 4
        %v2005 = vrot.slane %v882, 5
        %v2006 = vsel %vm1967, %v2004, %v2005
        %v2007 = vrot.slane %v2005, 4
        %v2008 = vrot.slane %v924, 5
        %v2009 = vsel %vm1967, %v2007, %v2008
        %v2010 = vrot.slane %v1923, 5
        %v2011 = vrot.slane %v2010, 4
        %v2012 = vrot.slane %v884, 5
        %v2013 = vsel %vm1967, %v2011, %v2012
        %v2014 = vrot.slane %v2012, 4
        %v2015 = vrot.slane %v925, 5
        %v2016 = vsel %vm1967, %v2014, %v2015
        %v2017 = vrot.slane %v1924, 5
        %v2018 = vrot.slane %v2017, 4
        %v2019 = vrot.slane %v886, 5
        %v2020 = vsel %vm1967, %v2018, %v2019
        %v2021 = vrot.slane %v2019, 4
        %v2022 = vrot.slane %v926, 5
        %v2023 = vsel %vm1967, %v2021, %v2022
        %v2024 = vrot.slane %v1925, 5
        %v2025 = vrot.slane %v2024, 4
        %v2026 = vrot.slane %v888, 5
        %v2027 = vsel %vm1967, %v2025, %v2026
        %v2028 = vrot.slane %v2026, 4
        %v2029 = vrot.slane %v927, 5
        %v2030 = vsel %vm1967, %v2028, %v2029
        %v2031 = vrot.slane %v1926, 5
        %v2032 = vrot.slane %v2031, 4
        %v2033 = vrot.slane %v890, 5
        %v2034 = vsel %vm1967, %v2032, %v2033
        %v2035 = vrot.slane %v2033, 4
        %v2036 = vrot.slane %v928, 5
        %v2037 = vsel %vm1967, %v2035, %v2036
        %v2038 = vrot.slane %v1927, 5
        %v2039 = vrot.slane %v2038, 4
        %v2040 = vrot.slane %v892, 5
        %v2041 = vsel %vm1967, %v2039, %v2040
        %v2042 = vrot.slane %v2040, 4
        %v2043 = vrot.slane %v929, 5
        %v2044 = vsel %vm1967, %v2042, %v2043
        %v2045 = vrot.slane %v1928, 5
        %v2046 = vrot.slane %v2045, 4
        %v2047 = vrot.slane %v894, 5
        %v2048 = vsel %vm1967, %v2046, %v2047
        %v2049 = vrot.slane %v2047, 4
        %v2050 = vrot.slane %v930, 5
        %v2051 = vsel %vm1967, %v2049, %v2050
        %v2052 = vrot.slane %v1929, 5
        %v2053 = vrot.slane %v2052, 4
        %v2054 = vrot.slane %v896, 5
        %v2055 = vsel %vm1967, %v2053, %v2054
        %v2056 = vrot.slane %v2054, 4
        %v2057 = vrot.slane %v931, 5
        %v2058 = vsel %vm1967, %v2056, %v2057
        %v2059 = vrot.slane %v1930, 5
        %v2060 = vrot.slane %v2059, 4
        %v2061 = vrot.slane %v898, 5
        %v2062 = vsel %vm1967, %v2060, %v2061
        %v2063 = vrot.slane %v2061, 4
        %v2064 = vrot.slane %v932, 5
        %v2065 = vsel %vm1967, %v2063, %v2064
        %v2066 = vrot.slane %v1931, 5
        %v2067 = vrot.slane %v2066, 4
        %v2068 = vrot.slane %v900, 5
        %v2069 = vsel %vm1967, %v2067, %v2068
        %v2070 = vrot.slane %v2068, 4
        %v2071 = vrot.slane %v933, 5
        %v2072 = vsel %vm1967, %v2070, %v2071
        %v2073 = vrot.slane %v1932, 5
        %v2074 = vrot.slane %v2073, 4
        %v2075 = vrot.slane %v902, 5
        %v2076 = vsel %vm1967, %v2074, %v2075
        %v2077 = vrot.slane %v2075, 4
        %v2078 = vrot.slane %v934, 5
        %v2079 = vsel %vm1967, %v2077, %v2078
        %s2080 = scalar_lea.vmem [#allocation6], 128
        %v2081 = vld [vmem:[%s2080] sm:$0xf]
        %v2082 = vld [vmem:[%s2080 + $0x4] sm:$0xf]
        %v2083 = vld [vmem:[%s2080 + $0x8] sm:$0xf]
        %v2084 = vld [vmem:[%s2080 + $0xc] sm:$0xf]
        %v2085 = vld [vmem:[%s2080 + $0x10] sm:$0xf]
        %v2086 = vld [vmem:[%s2080 + $0x14] sm:$0xf]
        %v2087 = vld [vmem:[%s2080 + $0x18] sm:$0xf]
        %v2088 = vld [vmem:[%s2080 + $0x1c] sm:$0xf]
        %v2089 = vld [vmem:[%s2080 + $0x20] sm:$0xf]
        %v2090 = vld [vmem:[%s2080 + $0x24] sm:$0xf]
        %v2091 = vld [vmem:[%s2080 + $0x28] sm:$0xf]
        %v2092 = vld [vmem:[%s2080 + $0x2c] sm:$0xf]
        %v2093 = vld [vmem:[%s2080 + $0x30] sm:$0xf]
        %v2094 = vld [vmem:[%s2080 + $0x34] sm:$0xf]
        %v2095 = vld [vmem:[%s2080 + $0x38] sm:$0xf]
        %v2096 = vld [vmem:[%s2080 + $0x3c] sm:$0xf]
        %v2097 = vunpack.c.l.b16 %v1971
        %v2098 = vunpack.c.l.b16 %v1974
        %v2099 = vunpack.c.l.b16 %v1978
        %v2100 = vunpack.c.l.b16 %v1981
        %v2101 = vunpack.c.l.b16 %v1985
        %v2102 = vunpack.c.l.b16 %v1988
        %v2103 = vunpack.c.l.b16 %v1992
        %v2104 = vunpack.c.l.b16 %v1995
        %v2105 = vunpack.c.l.b16 %v1999
        %v2106 = vunpack.c.l.b16 %v2002
        %v2107 = vunpack.c.l.b16 %v2006
        %v2108 = vunpack.c.l.b16 %v2009
        %v2109 = vunpack.c.l.b16 %v2013
        %v2110 = vunpack.c.l.b16 %v2016
        %v2111 = vunpack.c.l.b16 %v2020
        %v2112 = vunpack.c.l.b16 %v2023
        %v2113 = vunpack.c.l.b16 %v2027
        %v2114 = vunpack.c.l.b16 %v2030
        %v2115 = vunpack.c.l.b16 %v2034
        %v2116 = vunpack.c.l.b16 %v2037
        %v2117 = vunpack.c.l.b16 %v2041
        %v2118 = vunpack.c.l.b16 %v2044
        %v2119 = vunpack.c.l.b16 %v2048
        %v2120 = vunpack.c.l.b16 %v2051
        %v2121 = vunpack.c.l.b16 %v2055
        %v2122 = vunpack.c.l.b16 %v2058
        %v2123 = vunpack.c.l.b16 %v2062
        %v2124 = vunpack.c.l.b16 %v2065
        %v2125 = vunpack.c.l.b16 %v2069
        %v2126 = vunpack.c.l.b16 %v2072
        %v2127 = vunpack.c.l.b16 %v2076
        %v2128 = vunpack.c.l.b16 %v2079
        %v2129 = vpack.c.b16 %v2098, %v2097
        %v2130 = vpack.c.b16 %v2100, %v2099
        %v2131 = vpack.c.b16 %v2102, %v2101
        %v2132 = vpack.c.b16 %v2104, %v2103
        %v2133 = vpack.c.b16 %v2106, %v2105
        %v2134 = vpack.c.b16 %v2108, %v2107
        %v2135 = vpack.c.b16 %v2110, %v2109
        %v2136 = vpack.c.b16 %v2112, %v2111
        %v2137 = vpack.c.b16 %v2114, %v2113
        %v2138 = vpack.c.b16 %v2116, %v2115
        %v2139 = vpack.c.b16 %v2118, %v2117
        %v2140 = vpack.c.b16 %v2120, %v2119
        %v2141 = vpack.c.b16 %v2122, %v2121
        %v2142 = vpack.c.b16 %v2124, %v2123
        %v2143 = vpack.c.b16 %v2126, %v2125
        %v2144 = vpack.c.b16 %v2128, %v2127
        %v2177 = vunpack.c.l.b16 %v2081
        %v2178 = vunpack.c.l.b16 %v2082
        %v2179 = vunpack.c.l.b16 %v2083
        %v2180 = vunpack.c.l.b16 %v2084
        %v2181 = vunpack.c.l.b16 %v2085
        %v2182 = vunpack.c.l.b16 %v2086
        %v2183 = vunpack.c.l.b16 %v2087
        %v2184 = vunpack.c.l.b16 %v2088
        %v2185 = vunpack.c.l.b16 %v2089
        %v2186 = vunpack.c.l.b16 %v2090
        %v2187 = vunpack.c.l.b16 %v2091
        %v2188 = vunpack.c.l.b16 %v2092
        %v2189 = vunpack.c.l.b16 %v2093
        %v2190 = vunpack.c.l.b16 %v2094
        %v2191 = vunpack.c.l.b16 %v2095
        %v2192 = vunpack.c.l.b16 %v2096
        %v2193 = vpack.c.b16 %v2178, %v2177
        %v2194 = vpack.c.b16 %v2180, %v2179
        %v2195 = vpack.c.b16 %v2182, %v2181
        %v2196 = vpack.c.b16 %v2184, %v2183
        %v2197 = vpack.c.b16 %v2186, %v2185
        %v2198 = vpack.c.b16 %v2188, %v2187
        %v2199 = vpack.c.b16 %v2190, %v2189
        %v2200 = vpack.c.b16 %v2192, %v2191
        %2209 = vmatprep.subr.bf16.mxu0 0
        %2210 = vmatpush1.bf16.msra.mxu0 %v2193
        %2211 = vmatprep.subr.bf16.mxu0 0
        %2212 = vmatpush1.bf16.msra.mxu0 %v2194
        %2213 = vmatprep.subr.bf16.mxu0 0
        %2214 = vmatpush1.bf16.msra.mxu0 %v2195
        %2215 = vmatprep.subr.bf16.mxu0 0
        %2216 = vmatpush1.bf16.msra.mxu0 %v2196
        %2217 = vmatprep.subr.bf16.mxu0 0
        %2218 = vmatpush1.bf16.msra.mxu0 %v2197
        %2219 = vmatprep.subr.bf16.mxu0 0
        %2220 = vmatpush1.bf16.msra.mxu0 %v2198
        %2221 = vmatprep.subr.bf16.mxu0 0
        %2222 = vmatpush1.bf16.msra.mxu0 %v2199
        %2223 = vmatprep.subr.bf16.mxu0 0
        %2224 = vmatpush1.bf16.msra.mxu0 %v2200
        %2225 = vmatprep.subr.bf16.mxu0 0
        %2226 = vmatpush1.bf16.msra.mxu0 0
        %2227 = vmatprep.subr.bf16.mxu0 0
        %2228 = vmatpush1.bf16.msra.mxu0 0
        %2229 = vmatprep.subr.bf16.mxu0 0
        %2230 = vmatpush1.bf16.msra.mxu0 0
        %2231 = vmatprep.subr.bf16.mxu0 0
        %2232 = vmatpush1.bf16.msra.mxu0 0
        %2233 = vmatprep.subr.bf16.mxu0 0
        %2234 = vmatpush1.bf16.msra.mxu0 0
        %2235 = vmatprep.subr.bf16.mxu0 0
        %2236 = vmatpush1.bf16.msra.mxu0 0
        %2237 = vmatprep.subr.bf16.mxu0 0
        %2238 = vmatpush1.bf16.msra.mxu0 0
        %2239 = vmatprep.subr.bf16.mxu0 0
        %2240 = vmatpush1.bf16.msra.mxu0 0
        %2241 = vmatprep.mubr.bf16.mxu0 0
        %2242 = vmatmul.mubr.bf16.gmra.mrb[0].mxu0 %v2129
        %v2243 = vpop.f32.mrb[0].mxu0
        %v2244 = vadd.f32 0.0, %v2243
        %v2245 = vpop.f32.mrb[0].mxu0
        %v2246 = vpop.f32.mrb[0].mxu0
        %v2247 = vadd.f32 0.0, %v2246
        %v2248 = vpop.f32.mrb[0].mxu0
        %2249 = vmatprep.mubr.bf16.mxu0 0
        %2250 = vmatmul.mubr.bf16.gmra.mrb[0].mxu0 %v2130
        %v2251 = vpop.f32.mrb[0].mxu0
        %v2252 = vadd.f32 0.0, %v2251
        %v2253 = vpop.f32.mrb[0].mxu0
        %v2254 = vpop.f32.mrb[0].mxu0
        %v2255 = vadd.f32 0.0, %v2254
        %v2256 = vpop.f32.mrb[0].mxu0
        %2257 = vmatprep.mubr.bf16.mxu0 0
        %2258 = vmatmul.mubr.bf16.gmra.mrb[0].mxu0 %v2131
        %v2259 = vpop.f32.mrb[0].mxu0
        %v2260 = vadd.f32 0.0, %v2259
        %v2261 = vpop.f32.mrb[0].mxu0
        %v2262 = vpop.f32.mrb[0].mxu0
        %v2263 = vadd.f32 0.0, %v2262
        %v2264 = vpop.f32.mrb[0].mxu0
        %2265 = vmatprep.mubr.bf16.mxu0 0
        %2266 = vmatmul.mubr.bf16.gmra.mrb[0].mxu0 %v2132
        %v2267 = vpop.f32.mrb[0].mxu0
        %v2268 = vadd.f32 0.0, %v2267
        %v2269 = vpop.f32.mrb[0].mxu0
        %v2270 = vpop.f32.mrb[0].mxu0
        %v2271 = vadd.f32 0.0, %v2270
        %v2272 = vpop.f32.mrb[0].mxu0
        %2273 = vmatprep.mubr.bf16.mxu0 0
        %2274 = vmatmul.mubr.bf16.gmra.mrb[0].mxu0 %v2133
        %v2275 = vpop.f32.mrb[0].mxu0
        %v2276 = vadd.f32 0.0, %v2275
        %v2277 = vpop.f32.mrb[0].mxu0
        %v2278 = vpop.f32.mrb[0].mxu0
        %v2279 = vadd.f32 0.0, %v2278
        %v2280 = vpop.f32.mrb[0].mxu0
        %2281 = vmatprep.mubr.bf16.mxu0 0
        %2282 = vmatmul.mubr.bf16.gmra.mrb[0].mxu0 %v2134
        %v2283 = vpop.f32.mrb[0].mxu0
        %v2284 = vadd.f32 0.0, %v2283
        %v2285 = vpop.f32.mrb[0].mxu0
        %v2286 = vpop.f32.mrb[0].mxu0
        %v2287 = vadd.f32 0.0, %v2286
        %v2288 = vpop.f32.mrb[0].mxu0
        %2289 = vmatprep.mubr.bf16.mxu0 0
        %2290 = vmatmul.mubr.bf16.gmra.mrb[0].mxu0 %v2135
        %v2291 = vpop.f32.mrb[0].mxu0
        %v2292 = vadd.f32 0.0, %v2291
        %v2293 = vpop.f32.mrb[0].mxu0
        %v2294 = vpop.f32.mrb[0].mxu0
        %v2295 = vadd.f32 0.0, %v2294
        %v2296 = vpop.f32.mrb[0].mxu0
        %2297 = vmatprep.mubr.bf16.mxu0 0
        %2298 = vmatmul.mubr.bf16.gmra.mrb[0].mxu0 %v2136
        %v2299 = vpop.f32.mrb[0].mxu0
        %v2300 = vadd.f32 0.0, %v2299
        %v2301 = vpop.f32.mrb[0].mxu0
        %v2302 = vpop.f32.mrb[0].mxu0
        %v2303 = vadd.f32 0.0, %v2302
        %v2304 = vpop.f32.mrb[0].mxu0
        %2305 = vmatprep.mubr.bf16.mxu0 0
        %2306 = vmatmul.mubr.bf16.gmra.mrb[0].mxu0 %v2137
        %v2307 = vpop.f32.mrb[0].mxu0
        %v2308 = vadd.f32 0.0, %v2307
        %v2309 = vpop.f32.mrb[0].mxu0
        %v2310 = vpop.f32.mrb[0].mxu0
        %v2311 = vadd.f32 0.0, %v2310
        %v2312 = vpop.f32.mrb[0].mxu0
        %2313 = vmatprep.mubr.bf16.mxu0 0
        %2314 = vmatmul.mubr.bf16.gmra.mrb[0].mxu0 %v2138
        %v2315 = vpop.f32.mrb[0].mxu0
        %v2316 = vadd.f32 0.0, %v2315
        %v2317 = vpop.f32.mrb[0].mxu0
        %v2318 = vpop.f32.mrb[0].mxu0
        %v2319 = vadd.f32 0.0, %v2318
        %v2320 = vpop.f32.mrb[0].mxu0
        %2321 = vmatprep.mubr.bf16.mxu0 0
        %2322 = vmatmul.mubr.bf16.gmra.mrb[0].mxu0 %v2139
        %v2323 = vpop.f32.mrb[0].mxu0
        %v2324 = vadd.f32 0.0, %v2323
        %v2325 = vpop.f32.mrb[0].mxu0
        %v2326 = vpop.f32.mrb[0].mxu0
        %v2327 = vadd.f32 0.0, %v2326
        %v2328 = vpop.f32.mrb[0].mxu0
        %2329 = vmatprep.mubr.bf16.mxu0 0
        %2330 = vmatmul.mubr.bf16.gmra.mrb[0].mxu0 %v2140
        %v2331 = vpop.f32.mrb[0].mxu0
        %v2332 = vadd.f32 0.0, %v2331
        %v2333 = vpop.f32.mrb[0].mxu0
        %v2334 = vpop.f32.mrb[0].mxu0
        %v2335 = vadd.f32 0.0, %v2334
        %v2336 = vpop.f32.mrb[0].mxu0
        %2337 = vmatprep.mubr.bf16.mxu0 0
        %2338 = vmatmul.mubr.bf16.gmra.mrb[0].mxu0 %v2141
        %v2339 = vpop.f32.mrb[0].mxu0
        %v2340 = vadd.f32 0.0, %v2339
        %v2341 = vpop.f32.mrb[0].mxu0
        %v2342 = vpop.f32.mrb[0].mxu0
        %v2343 = vadd.f32 0.0, %v2342
        %v2344 = vpop.f32.mrb[0].mxu0
        %2345 = vmatprep.mubr.bf16.mxu0 0
        %2346 = vmatmul.mubr.bf16.gmra.mrb[0].mxu0 %v2142
        %v2347 = vpop.f32.mrb[0].mxu0
        %v2348 = vadd.f32 0.0, %v2347
        %v2349 = vpop.f32.mrb[0].mxu0
        %v2350 = vpop.f32.mrb[0].mxu0
        %v2351 = vadd.f32 0.0, %v2350
        %v2352 = vpop.f32.mrb[0].mxu0
        %2353 = vmatprep.mubr.bf16.mxu0 0
        %2354 = vmatmul.mubr.bf16.gmra.mrb[0].mxu0 %v2143
        %v2355 = vpop.f32.mrb[0].mxu0
        %v2356 = vadd.f32 0.0, %v2355
        %v2357 = vpop.f32.mrb[0].mxu0
        %v2358 = vpop.f32.mrb[0].mxu0
        %v2359 = vadd.f32 0.0, %v2358
        %v2360 = vpop.f32.mrb[0].mxu0
        %2361 = vmatprep.mubr.bf16.mxu0 0
        %2362 = vmatmul.mubr.bf16.gmra.mrb[0].mxu0 %v2144
        %v2363 = vpop.f32.mrb[0].mxu0
        %v2364 = vadd.f32 0.0, %v2363
        %v2365 = vpop.f32.mrb[0].mxu0
        %v2366 = vpop.f32.mrb[0].mxu0
        %v2367 = vadd.f32 0.0, %v2366
        %v2368 = vpop.f32.mrb[0].mxu0
        %2369 = vdwg.mxu0
        %v2370 = vadd.f32 %v1791, %v2244
        %v2371 = vadd.f32 %v1794, %v2247
        %v2372 = vadd.f32 %v1799, %v2252
        %v2373 = vadd.f32 %v1802, %v2255
        %v2374 = vadd.f32 %v1807, %v2260
        %v2375 = vadd.f32 %v1810, %v2263
        %v2376 = vadd.f32 %v1815, %v2268
        %v2377 = vadd.f32 %v1818, %v2271
        %v2378 = vadd.f32 %v1823, %v2276
        %v2379 = vadd.f32 %v1826, %v2279
        %v2380 = vadd.f32 %v1831, %v2284
        %v2381 = vadd.f32 %v1834, %v2287
        %v2382 = vadd.f32 %v1839, %v2292
        %v2383 = vadd.f32 %v1842, %v2295
        %v2384 = vadd.f32 %v1847, %v2300
        %v2385 = vadd.f32 %v1850, %v2303
        %v2386 = vadd.f32 %v1855, %v2308
        %v2387 = vadd.f32 %v1858, %v2311
        %v2388 = vadd.f32 %v1863, %v2316
        %v2389 = vadd.f32 %v1866, %v2319
        %v2390 = vadd.f32 %v1871, %v2324
        %v2391 = vadd.f32 %v1874, %v2327
        %v2392 = vadd.f32 %v1879, %v2332
        %v2393 = vadd.f32 %v1882, %v2335
        %v2394 = vadd.f32 %v1887, %v2340
        %v2395 = vadd.f32 %v1890, %v2343
        %v2396 = vadd.f32 %v1895, %v2348
        %v2397 = vadd.f32 %v1898, %v2351
        %v2398 = vadd.f32 %v1903, %v2356
        %v2399 = vadd.f32 %v1906, %v2359
        %v2400 = vadd.f32 %v1911, %v2364
        %v2401 = vadd.f32 %v1914, %v2367
        %v2402 = vld [vmem:[%s753] sm:$0xf]
        %v2403 = vld [vmem:[%s753 + $0x4] sm:$0xf]
        %v2404 = vld [vmem:[%s753 + $0xc] sm:$0xf]
        %v2405 = vld [vmem:[%s753 + $0x10] sm:$0xf]
        %v2406 = vld [vmem:[%s753 + $0x18] sm:$0xf]
        %v2407 = vld [vmem:[%s753 + $0x1c] sm:$0xf]
        %v2408 = vld [vmem:[%s753 + $0x24] sm:$0xf]
        %v2409 = vld [vmem:[%s753 + $0x28] sm:$0xf]
        %v2410 = vld [vmem:[%s753 + $0x30] sm:$0xf]
        %v2411 = vld [vmem:[%s753 + $0x34] sm:$0xf]
        %v2412 = vld [vmem:[%s753 + $0x3c] sm:$0xf]
        %v2413 = vld [vmem:[%s753 + $0x40] sm:$0xf]
        %v2414 = vld [vmem:[%s753 + $0x48] sm:$0xf]
        %v2415 = vld [vmem:[%s753 + $0x4c] sm:$0xf]
        %v2416 = vld [vmem:[%s753 + $0x54] sm:$0xf]
        %v2417 = vld [vmem:[%s753 + $0x58] sm:$0xf]
        %v2418 = vld [vmem:[%s753 + $0x60] sm:$0xf]
        %v2419 = vld [vmem:[%s753 + $0x64] sm:$0xf]
        %v2420 = vld [vmem:[%s753 + $0x6c] sm:$0xf]
        %v2421 = vld [vmem:[%s753 + $0x70] sm:$0xf]
        %v2422 = vld [vmem:[%s753 + $0x78] sm:$0xf]
        %v2423 = vld [vmem:[%s753 + $0x7c] sm:$0xf]
        %v2424 = vld [vmem:[%s753 + $0x84] sm:$0xf]
        %v2425 = vld [vmem:[%s753 + $0x88] sm:$0xf]
        %v2426 = vld [vmem:[%s753 + $0x90] sm:$0xf]
        %v2427 = vld [vmem:[%s753 + $0x94] sm:$0xf]
        %v2428 = vld [vmem:[%s753 + $0x9c] sm:$0xf]
        %v2429 = vld [vmem:[%s753 + $0xa0] sm:$0xf]
        %v2430 = vld [vmem:[%s753 + $0xa8] sm:$0xf]
        %v2431 = vld [vmem:[%s753 + $0xac] sm:$0xf]
        %v2432 = vld [vmem:[%s753 + $0xb4] sm:$0xf]
        %v2433 = vld [vmem:[%s753 + $0xb8] sm:$0xf]
        %s2434 = scalar_lea.vmem [#allocation6], 192
        %v2435 = vld [vmem:[%s2434] sm:$0xf]
        %v2436 = vld [vmem:[%s2434 + $0x4] sm:$0xf]
        %v2437 = vld [vmem:[%s2434 + $0x8] sm:$0xf]
        %v2438 = vld [vmem:[%s2434 + $0xc] sm:$0xf]
        %v2439 = vld [vmem:[%s2434 + $0x10] sm:$0xf]
        %v2440 = vld [vmem:[%s2434 + $0x14] sm:$0xf]
        %v2441 = vld [vmem:[%s2434 + $0x18] sm:$0xf]
        %v2442 = vld [vmem:[%s2434 + $0x1c] sm:$0xf]
        %v2443 = vld [vmem:[%s2434 + $0x20] sm:$0xf]
        %v2444 = vld [vmem:[%s2434 + $0x24] sm:$0xf]
        %v2445 = vld [vmem:[%s2434 + $0x28] sm:$0xf]
        %v2446 = vld [vmem:[%s2434 + $0x2c] sm:$0xf]
        %v2447 = vld [vmem:[%s2434 + $0x30] sm:$0xf]
        %v2448 = vld [vmem:[%s2434 + $0x34] sm:$0xf]
        %v2449 = vld [vmem:[%s2434 + $0x38] sm:$0xf]
        %v2450 = vld [vmem:[%s2434 + $0x3c] sm:$0xf]
        %v2483 = vunpack.c.l.b16 %v2402
        %v2484 = vunpack.c.l.b16 %v2403
        %v2485 = vunpack.c.l.b16 %v2404
        %v2486 = vunpack.c.l.b16 %v2405
        %v2487 = vunpack.c.l.b16 %v2406
        %v2488 = vunpack.c.l.b16 %v2407
        %v2489 = vunpack.c.l.b16 %v2408
        %v2490 = vunpack.c.l.b16 %v2409
        %v2491 = vunpack.c.l.b16 %v2410
        %v2492 = vunpack.c.l.b16 %v2411
        %v2493 = vunpack.c.l.b16 %v2412
        %v2494 = vunpack.c.l.b16 %v2413
        %v2495 = vunpack.c.l.b16 %v2414
        %v2496 = vunpack.c.l.b16 %v2415
        %v2497 = vunpack.c.l.b16 %v2416
        %v2498 = vunpack.c.l.b16 %v2417
        %v2499 = vunpack.c.l.b16 %v2418
        %v2500 = vunpack.c.l.b16 %v2419
        %v2501 = vunpack.c.l.b16 %v2420
        %v2502 = vunpack.c.l.b16 %v2421
        %v2503 = vunpack.c.l.b16 %v2422
        %v2504 = vunpack.c.l.b16 %v2423
        %v2505 = vunpack.c.l.b16 %v2424
        %v2506 = vunpack.c.l.b16 %v2425
        %v2507 = vunpack.c.l.b16 %v2426
        %v2508 = vunpack.c.l.b16 %v2427
        %v2509 = vunpack.c.l.b16 %v2428
        %v2510 = vunpack.c.l.b16 %v2429
        %v2511 = vunpack.c.l.b16 %v2430
        %v2512 = vunpack.c.l.b16 %v2431
        %v2513 = vunpack.c.l.b16 %v2432
        %v2514 = vunpack.c.l.b16 %v2433
        %v2515 = vpack.c.b16 %v2484, %v2483
        %v2516 = vpack.c.b16 %v2486, %v2485
        %v2517 = vpack.c.b16 %v2488, %v2487
        %v2518 = vpack.c.b16 %v2490, %v2489
        %v2519 = vpack.c.b16 %v2492, %v2491
        %v2520 = vpack.c.b16 %v2494, %v2493
        %v2521 = vpack.c.b16 %v2496, %v2495
        %v2522 = vpack.c.b16 %v2498, %v2497
        %v2523 = vpack.c.b16 %v2500, %v2499
        %v2524 = vpack.c.b16 %v2502, %v2501
        %v2525 = vpack.c.b16 %v2504, %v2503
        %v2526 = vpack.c.b16 %v2506, %v2505
        %v2527 = vpack.c.b16 %v2508, %v2507
        %v2528 = vpack.c.b16 %v2510, %v2509
        %v2529 = vpack.c.b16 %v2512, %v2511
        %v2530 = vpack.c.b16 %v2514, %v2513
        %v2563 = vunpack.c.l.b16 %v2435
        %v2564 = vunpack.c.l.b16 %v2436
        %v2565 = vunpack.c.l.b16 %v2437
        %v2566 = vunpack.c.l.b16 %v2438
        %v2567 = vunpack.c.l.b16 %v2439
        %v2568 = vunpack.c.l.b16 %v2440
        %v2569 = vunpack.c.l.b16 %v2441
        %v2570 = vunpack.c.l.b16 %v2442
        %v2571 = vunpack.c.l.b16 %v2443
        %v2572 = vunpack.c.l.b16 %v2444
        %v2573 = vunpack.c.l.b16 %v2445
        %v2574 = vunpack.c.l.b16 %v2446
        %v2575 = vunpack.c.l.b16 %v2447
        %v2576 = vunpack.c.l.b16 %v2448
        %v2577 = vunpack.c.l.b16 %v2449
        %v2578 = vunpack.c.l.b16 %v2450
        %v2579 = vpack.c.b16 %v2564, %v2563
        %v2580 = vpack.c.b16 %v2566, %v2565
        %v2581 = vpack.c.b16 %v2568, %v2567
        %v2582 = vpack.c.b16 %v2570, %v2569
        %v2583 = vpack.c.b16 %v2572, %v2571
        %v2584 = vpack.c.b16 %v2574, %v2573
        %v2585 = vpack.c.b16 %v2576, %v2575
        %v2586 = vpack.c.b16 %v2578, %v2577
        %2595 = vmatprep.subr.bf16.mxu0 0
        %2596 = vmatpush1.bf16.msra.mxu0 %v2579
        %2597 = vmatprep.subr.bf16.mxu0 0
        %2598 = vmatpush1.bf16.msra.mxu0 %v2580
        %2599 = vmatprep.subr.bf16.mxu0 0
        %2600 = vmatpush1.bf16.msra.mxu0 %v2581
        %2601 = vmatprep.subr.bf16.mxu0 0
        %2602 = vmatpush1.bf16.msra.mxu0 %v2582
        %2603 = vmatprep.subr.bf16.mxu0 0
        %2604 = vmatpush1.bf16.msra.mxu0 %v2583
        %2605 = vmatprep.subr.bf16.mxu0 0
        %2606 = vmatpush1.bf16.msra.mxu0 %v2584
        %2607 = vmatprep.subr.bf16.mxu0 0
        %2608 = vmatpush1.bf16.msra.mxu0 %v2585
        %2609 = vmatprep.subr.bf16.mxu0 0
        %2610 = vmatpush1.bf16.msra.mxu0 %v2586
        %2611 = vmatprep.subr.bf16.mxu0 0
        %2612 = vmatpush1.bf16.msra.mxu0 0
        %2613 = vmatprep.subr.bf16.mxu0 0
        %2614 = vmatpush1.bf16.msra.mxu0 0
        %2615 = vmatprep.subr.bf16.mxu0 0
        %2616 = vmatpush1.bf16.msra.mxu0 0
        %2617 = vmatprep.subr.bf16.mxu0 0
        %2618 = vmatpush1.bf16.msra.mxu0 0
        %2619 = vmatprep.subr.bf16.mxu0 0
        %2620 = vmatpush1.bf16.msra.mxu0 0
        %2621 = vmatprep.subr.bf16.mxu0 0
        %2622 = vmatpush1.bf16.msra.mxu0 0
        %2623 = vmatprep.subr.bf16.mxu0 0
        %2624 = vmatpush1.bf16.msra.mxu0 0
        %2625 = vmatprep.subr.bf16.mxu0 0
        %2626 = vmatpush1.bf16.msra.mxu0 0
        %2627 = vmatprep.mubr.bf16.mxu0 0
        %2628 = vmatmul.mubr.bf16.gmra.mrb[0].mxu0 %v2515
        %v2629 = vpop.f32.mrb[0].mxu0
        %v2630 = vadd.f32 0.0, %v2629
        %v2631 = vpop.f32.mrb[0].mxu0
        %v2632 = vpop.f32.mrb[0].mxu0
        %v2633 = vadd.f32 0.0, %v2632
        %v2634 = vpop.f32.mrb[0].mxu0
        %2635 = vmatprep.mubr.bf16.mxu0 0
        %2636 = vmatmul.mubr.bf16.gmra.mrb[0].mxu0 %v2516
        %v2637 = vpop.f32.mrb[0].mxu0
        %v2638 = vadd.f32 0.0, %v2637
        %v2639 = vpop.f32.mrb[0].mxu0
        %v2640 = vpop.f32.mrb[0].mxu0
        %v2641 = vadd.f32 0.0, %v2640
        %v2642 = vpop.f32.mrb[0].mxu0
        %2643 = vmatprep.mubr.bf16.mxu0 0
        %2644 = vmatmul.mubr.bf16.gmra.mrb[0].mxu0 %v2517
        %v2645 = vpop.f32.mrb[0].mxu0
        %v2646 = vadd.f32 0.0, %v2645
        %v2647 = vpop.f32.mrb[0].mxu0
        %v2648 = vpop.f32.mrb[0].mxu0
        %v2649 = vadd.f32 0.0, %v2648
        %v2650 = vpop.f32.mrb[0].mxu0
        %2651 = vmatprep.mubr.bf16.mxu0 0
        %2652 = vmatmul.mubr.bf16.gmra.mrb[0].mxu0 %v2518
        %v2653 = vpop.f32.mrb[0].mxu0
        %v2654 = vadd.f32 0.0, %v2653
        %v2655 = vpop.f32.mrb[0].mxu0
        %v2656 = vpop.f32.mrb[0].mxu0
        %v2657 = vadd.f32 0.0, %v2656
        %v2658 = vpop.f32.mrb[0].mxu0
        %2659 = vmatprep.mubr.bf16.mxu0 0
        %2660 = vmatmul.mubr.bf16.gmra.mrb[0].mxu0 %v2519
        %v2661 = vpop.f32.mrb[0].mxu0
        %v2662 = vadd.f32 0.0, %v2661
        %v2663 = vpop.f32.mrb[0].mxu0
        %v2664 = vpop.f32.mrb[0].mxu0
        %v2665 = vadd.f32 0.0, %v2664
        %v2666 = vpop.f32.mrb[0].mxu0
        %2667 = vmatprep.mubr.bf16.mxu0 0
        %2668 = vmatmul.mubr.bf16.gmra.mrb[0].mxu0 %v2520
        %v2669 = vpop.f32.mrb[0].mxu0
        %v2670 = vadd.f32 0.0, %v2669
        %v2671 = vpop.f32.mrb[0].mxu0
        %v2672 = vpop.f32.mrb[0].mxu0
        %v2673 = vadd.f32 0.0, %v2672
        %v2674 = vpop.f32.mrb[0].mxu0
        %2675 = vmatprep.mubr.bf16.mxu0 0
        %2676 = vmatmul.mubr.bf16.gmra.mrb[0].mxu0 %v2521
        %v2677 = vpop.f32.mrb[0].mxu0
        %v2678 = vadd.f32 0.0, %v2677
        %v2679 = vpop.f32.mrb[0].mxu0
        %v2680 = vpop.f32.mrb[0].mxu0
        %v2681 = vadd.f32 0.0, %v2680
        %v2682 = vpop.f32.mrb[0].mxu0
        %2683 = vmatprep.mubr.bf16.mxu0 0
        %2684 = vmatmul.mubr.bf16.gmra.mrb[0].mxu0 %v2522
        %v2685 = vpop.f32.mrb[0].mxu0
        %v2686 = vadd.f32 0.0, %v2685
        %v2687 = vpop.f32.mrb[0].mxu0
        %v2688 = vpop.f32.mrb[0].mxu0
        %v2689 = vadd.f32 0.0, %v2688
        %v2690 = vpop.f32.mrb[0].mxu0
        %2691 = vmatprep.mubr.bf16.mxu0 0
        %2692 = vmatmul.mubr.bf16.gmra.mrb[0].mxu0 %v2523
        %v2693 = vpop.f32.mrb[0].mxu0
        %v2694 = vadd.f32 0.0, %v2693
        %v2695 = vpop.f32.mrb[0].mxu0
        %v2696 = vpop.f32.mrb[0].mxu0
        %v2697 = vadd.f32 0.0, %v2696
        %v2698 = vpop.f32.mrb[0].mxu0
        %2699 = vmatprep.mubr.bf16.mxu0 0
        %2700 = vmatmul.mubr.bf16.gmra.mrb[0].mxu0 %v2524
        %v2701 = vpop.f32.mrb[0].mxu0
        %v2702 = vadd.f32 0.0, %v2701
        %v2703 = vpop.f32.mrb[0].mxu0
        %v2704 = vpop.f32.mrb[0].mxu0
        %v2705 = vadd.f32 0.0, %v2704
        %v2706 = vpop.f32.mrb[0].mxu0
        %2707 = vmatprep.mubr.bf16.mxu0 0
        %2708 = vmatmul.mubr.bf16.gmra.mrb[0].mxu0 %v2525
        %v2709 = vpop.f32.mrb[0].mxu0
        %v2710 = vadd.f32 0.0, %v2709
        %v2711 = vpop.f32.mrb[0].mxu0
        %v2712 = vpop.f32.mrb[0].mxu0
        %v2713 = vadd.f32 0.0, %v2712
        %v2714 = vpop.f32.mrb[0].mxu0
        %2715 = vmatprep.mubr.bf16.mxu0 0
        %2716 = vmatmul.mubr.bf16.gmra.mrb[0].mxu0 %v2526
        %v2717 = vpop.f32.mrb[0].mxu0
        %v2718 = vadd.f32 0.0, %v2717
        %v2719 = vpop.f32.mrb[0].mxu0
        %v2720 = vpop.f32.mrb[0].mxu0
        %v2721 = vadd.f32 0.0, %v2720
        %v2722 = vpop.f32.mrb[0].mxu0
        %2723 = vmatprep.mubr.bf16.mxu0 0
        %2724 = vmatmul.mubr.bf16.gmra.mrb[0].mxu0 %v2527
        %v2725 = vpop.f32.mrb[0].mxu0
        %v2726 = vadd.f32 0.0, %v2725
        %v2727 = vpop.f32.mrb[0].mxu0
        %v2728 = vpop.f32.mrb[0].mxu0
        %v2729 = vadd.f32 0.0, %v2728
        %v2730 = vpop.f32.mrb[0].mxu0
        %2731 = vmatprep.mubr.bf16.mxu0 0
        %2732 = vmatmul.mubr.bf16.gmra.mrb[0].mxu0 %v2528
        %v2733 = vpop.f32.mrb[0].mxu0
        %v2734 = vadd.f32 0.0, %v2733
        %v2735 = vpop.f32.mrb[0].mxu0
        %v2736 = vpop.f32.mrb[0].mxu0
        %v2737 = vadd.f32 0.0, %v2736
        %v2738 = vpop.f32.mrb[0].mxu0
        %2739 = vmatprep.mubr.bf16.mxu0 0
        %2740 = vmatmul.mubr.bf16.gmra.mrb[0].mxu0 %v2529
        %v2741 = vpop.f32.mrb[0].mxu0
        %v2742 = vadd.f32 0.0, %v2741
        %v2743 = vpop.f32.mrb[0].mxu0
        %v2744 = vpop.f32.mrb[0].mxu0
        %v2745 = vadd.f32 0.0, %v2744
        %v2746 = vpop.f32.mrb[0].mxu0
        %2747 = vmatprep.mubr.bf16.mxu0 0
        %2748 = vmatmul.mubr.bf16.gmra.mrb[0].mxu0 %v2530
        %v2749 = vpop.f32.mrb[0].mxu0
        %v2750 = vadd.f32 0.0, %v2749
        %v2751 = vpop.f32.mrb[0].mxu0
        %v2752 = vpop.f32.mrb[0].mxu0
        %v2753 = vadd.f32 0.0, %v2752
        %v2754 = vpop.f32.mrb[0].mxu0
        %2755 = vdwg.mxu0
        %v2756 = vadd.f32 %v2370, %v2630
        %v2757 = vadd.f32 %v2371, %v2633
        %v2758 = vadd.f32 %v2372, %v2638
        %v2759 = vadd.f32 %v2373, %v2641
        %v2760 = vadd.f32 %v2374, %v2646
        %v2761 = vadd.f32 %v2375, %v2649
        %v2762 = vadd.f32 %v2376, %v2654
        %v2763 = vadd.f32 %v2377, %v2657
        %v2764 = vadd.f32 %v2378, %v2662
        %v2765 = vadd.f32 %v2379, %v2665
        %v2766 = vadd.f32 %v2380, %v2670
        %v2767 = vadd.f32 %v2381, %v2673
        %v2768 = vadd.f32 %v2382, %v2678
        %v2769 = vadd.f32 %v2383, %v2681
        %v2770 = vadd.f32 %v2384, %v2686
        %v2771 = vadd.f32 %v2385, %v2689
        %v2772 = vadd.f32 %v2386, %v2694
        %v2773 = vadd.f32 %v2387, %v2697
        %v2774 = vadd.f32 %v2388, %v2702
        %v2775 = vadd.f32 %v2389, %v2705
        %v2776 = vadd.f32 %v2390, %v2710
        %v2777 = vadd.f32 %v2391, %v2713
        %v2778 = vadd.f32 %v2392, %v2718
        %v2779 = vadd.f32 %v2393, %v2721
        %v2780 = vadd.f32 %v2394, %v2726
        %v2781 = vadd.f32 %v2395, %v2729
        %v2782 = vadd.f32 %v2396, %v2734
        %v2783 = vadd.f32 %v2397, %v2737
        %v2784 = vadd.f32 %v2398, %v2742
        %v2785 = vadd.f32 %v2399, %v2745
        %v2786 = vadd.f32 %v2400, %v2750
        %v2787 = vadd.f32 %v2401, %v2753
        %v2788 = vld [vmem:[%s753] sm:$0xf]
        %v2789 = vld [vmem:[%s753 + $0x4] sm:$0xf]
        %v2790 = vld [vmem:[%s753 + $0x8] sm:$0x1]
        %v2791 = vld [vmem:[%s753 + $0xc] sm:$0xf]
        %v2792 = vld [vmem:[%s753 + $0x10] sm:$0xf]
        %v2793 = vld [vmem:[%s753 + $0x14] sm:$0x1]
        %v2794 = vld [vmem:[%s753 + $0x18] sm:$0xf]
        %v2795 = vld [vmem:[%s753 + $0x1c] sm:$0xf]
        %v2796 = vld [vmem:[%s753 + $0x20] sm:$0x1]
        %v2797 = vld [vmem:[%s753 + $0x24] sm:$0xf]
        %v2798 = vld [vmem:[%s753 + $0x28] sm:$0xf]
        %v2799 = vld [vmem:[%s753 + $0x2c] sm:$0x1]
        %v2800 = vld [vmem:[%s753 + $0x30] sm:$0xf]
        %v2801 = vld [vmem:[%s753 + $0x34] sm:$0xf]
        %v2802 = vld [vmem:[%s753 + $0x38] sm:$0x1]
        %v2803 = vld [vmem:[%s753 + $0x3c] sm:$0xf]
        %v2804 = vld [vmem:[%s753 + $0x40] sm:$0xf]
        %v2805 = vld [vmem:[%s753 + $0x44] sm:$0x1]
        %v2806 = vld [vmem:[%s753 + $0x48] sm:$0xf]
        %v2807 = vld [vmem:[%s753 + $0x4c] sm:$0xf]
        %v2808 = vld [vmem:[%s753 + $0x50] sm:$0x1]
        %v2809 = vld [vmem:[%s753 + $0x54] sm:$0xf]
        %v2810 = vld [vmem:[%s753 + $0x58] sm:$0xf]
        %v2811 = vld [vmem:[%s753 + $0x5c] sm:$0x1]
        %v2812 = vld [vmem:[%s753 + $0x60] sm:$0xf]
        %v2813 = vld [vmem:[%s753 + $0x64] sm:$0xf]
        %v2814 = vld [vmem:[%s753 + $0x68] sm:$0x1]
        %v2815 = vld [vmem:[%s753 + $0x6c] sm:$0xf]
        %v2816 = vld [vmem:[%s753 + $0x70] sm:$0xf]
        %v2817 = vld [vmem:[%s753 + $0x74] sm:$0x1]
        %v2818 = vld [vmem:[%s753 + $0x78] sm:$0xf]
        %v2819 = vld [vmem:[%s753 + $0x7c] sm:$0xf]
        %v2820 = vld [vmem:[%s753 + $0x80] sm:$0x1]
        %v2821 = vld [vmem:[%s753 + $0x84] sm:$0xf]
        %v2822 = vld [vmem:[%s753 + $0x88] sm:$0xf]
        %v2823 = vld [vmem:[%s753 + $0x8c] sm:$0x1]
        %v2824 = vld [vmem:[%s753 + $0x90] sm:$0xf]
        %v2825 = vld [vmem:[%s753 + $0x94] sm:$0xf]
        %v2826 = vld [vmem:[%s753 + $0x98] sm:$0x1]
        %v2827 = vld [vmem:[%s753 + $0x9c] sm:$0xf]
        %v2828 = vld [vmem:[%s753 + $0xa0] sm:$0xf]
        %v2829 = vld [vmem:[%s753 + $0xa4] sm:$0x1]
        %v2830 = vld [vmem:[%s753 + $0xa8] sm:$0xf]
        %v2831 = vld [vmem:[%s753 + $0xac] sm:$0xf]
        %v2832 = vld [vmem:[%s753 + $0xb0] sm:$0x1]
        %v2833 = vld [vmem:[%s753 + $0xb4] sm:$0xf]
        %v2834 = vld [vmem:[%s753 + $0xb8] sm:$0xf]
        %v2835 = vld [vmem:[%s753 + $0xbc] sm:$0x1]
        %v2837 = vshrl.u32 %v2788, 16
        %v2839 = vrot.slane %v2837, 4
        %v2840 = vshll.u32 %v2788, 16
        %v2842 = vrot.slane %v2840, 5
        %v2843 = vor.u32 %v2839, %v2842
        %v2844 = vrot.slane %v2843, 4
        %v2846 = vshll.u32 %v2789, 16
        %v2848 = vrot.slane %v2846, 5
        %v2849 = vsel %vm937, %v2844, %v2848
        %v2850 = vshrl.u32 %v2789, 16
        %v2852 = vrot.slane %v2850, 4
        %v2853 = vor.u32 %v2852, %v2848
        %v2854 = vrot.slane %v2853, 4
        %v2856 = vshll.u32 %v2790, 16
        %v2858 = vrot.slane %v2856, 5
        %v2859 = vsel %vm937, %v2854, %v2858
        %v2861 = vshrl.u32 %v2791, 16
        %v2863 = vrot.slane %v2861, 4
        %v2864 = vshll.u32 %v2791, 16
        %v2866 = vrot.slane %v2864, 5
        %v2867 = vor.u32 %v2863, %v2866
        %v2868 = vrot.slane %v2867, 4
        %v2870 = vshll.u32 %v2792, 16
        %v2872 = vrot.slane %v2870, 5
        %v2873 = vsel %vm937, %v2868, %v2872
        %v2874 = vshrl.u32 %v2792, 16
        %v2876 = vrot.slane %v2874, 4
        %v2877 = vor.u32 %v2876, %v2872
        %v2878 = vrot.slane %v2877, 4
        %v2880 = vshll.u32 %v2793, 16
        %v2882 = vrot.slane %v2880, 5
        %v2883 = vsel %vm937, %v2878, %v2882
        %v2885 = vshrl.u32 %v2794, 16
        %v2887 = vrot.slane %v2885, 4
        %v2888 = vshll.u32 %v2794, 16
        %v2890 = vrot.slane %v2888, 5
        %v2891 = vor.u32 %v2887, %v2890
        %v2892 = vrot.slane %v2891, 4
        %v2894 = vshll.u32 %v2795, 16
        %v2896 = vrot.slane %v2894, 5
        %v2897 = vsel %vm937, %v2892, %v2896
        %v2898 = vshrl.u32 %v2795, 16
        %v2900 = vrot.slane %v2898, 4
        %v2901 = vor.u32 %v2900, %v2896
        %v2902 = vrot.slane %v2901, 4
        %v2904 = vshll.u32 %v2796, 16
        %v2906 = vrot.slane %v2904, 5
        %v2907 = vsel %vm937, %v2902, %v2906
        %v2909 = vshrl.u32 %v2797, 16
        %v2911 = vrot.slane %v2909, 4
        %v2912 = vshll.u32 %v2797, 16
        %v2914 = vrot.slane %v2912, 5
        %v2915 = vor.u32 %v2911, %v2914
        %v2916 = vrot.slane %v2915, 4
        %v2918 = vshll.u32 %v2798, 16
        %v2920 = vrot.slane %v2918, 5
        %v2921 = vsel %vm937, %v2916, %v2920
        %v2922 = vshrl.u32 %v2798, 16
        %v2924 = vrot.slane %v2922, 4
        %v2925 = vor.u32 %v2924, %v2920
        %v2926 = vrot.slane %v2925, 4
        %v2928 = vshll.u32 %v2799, 16
        %v2930 = vrot.slane %v2928, 5
        %v2931 = vsel %vm937, %v2926, %v2930
        %v2933 = vshrl.u32 %v2800, 16
        %v2935 = vrot.slane %v2933, 4
        %v2936 = vshll.u32 %v2800, 16
        %v2938 = vrot.slane %v2936, 5
        %v2939 = vor.u32 %v2935, %v2938
        %v2940 = vrot.slane %v2939, 4
        %v2942 = vshll.u32 %v2801, 16
        %v2944 = vrot.slane %v2942, 5
        %v2945 = vsel %vm937, %v2940, %v2944
        %v2946 = vshrl.u32 %v2801, 16
        %v2948 = vrot.slane %v2946, 4
        %v2949 = vor.u32 %v2948, %v2944
        %v2950 = vrot.slane %v2949, 4
        %v2952 = vshll.u32 %v2802, 16
        %v2954 = vrot.slane %v2952, 5
        %v2955 = vsel %vm937, %v2950, %v2954
        %v2957 = vshrl.u32 %v2803, 16
        %v2959 = vrot.slane %v2957, 4
        %v2960 = vshll.u32 %v2803, 16
        %v2962 = vrot.slane %v2960, 5
        %v2963 = vor.u32 %v2959, %v2962
        %v2964 = vrot.slane %v2963, 4
        %v2966 = vshll.u32 %v2804, 16
        %v2968 = vrot.slane %v2966, 5
        %v2969 = vsel %vm937, %v2964, %v2968
        %v2970 = vshrl.u32 %v2804, 16
        %v2972 = vrot.slane %v2970, 4
        %v2973 = vor.u32 %v2972, %v2968
        %v2974 = vrot.slane %v2973, 4
        %v2976 = vshll.u32 %v2805, 16
        %v2978 = vrot.slane %v2976, 5
        %v2979 = vsel %vm937, %v2974, %v2978
        %v2981 = vshrl.u32 %v2806, 16
        %v2983 = vrot.slane %v2981, 4
        %v2984 = vshll.u32 %v2806, 16
        %v2986 = vrot.slane %v2984, 5
        %v2987 = vor.u32 %v2983, %v2986
        %v2988 = vrot.slane %v2987, 4
        %v2990 = vshll.u32 %v2807, 16
        %v2992 = vrot.slane %v2990, 5
        %v2993 = vsel %vm937, %v2988, %v2992
        %v2994 = vshrl.u32 %v2807, 16
        %v2996 = vrot.slane %v2994, 4
        %v2997 = vor.u32 %v2996, %v2992
        %v2998 = vrot.slane %v2997, 4
        %v3000 = vshll.u32 %v2808, 16
        %v3002 = vrot.slane %v3000, 5
        %v3003 = vsel %vm937, %v2998, %v3002
        %v3005 = vshrl.u32 %v2809, 16
        %v3007 = vrot.slane %v3005, 4
        %v3008 = vshll.u32 %v2809, 16
        %v3010 = vrot.slane %v3008, 5
        %v3011 = vor.u32 %v3007, %v3010
        %v3012 = vrot.slane %v3011, 4
        %v3014 = vshll.u32 %v2810, 16
        %v3016 = vrot.slane %v3014, 5
        %v3017 = vsel %vm937, %v3012, %v3016
        %v3018 = vshrl.u32 %v2810, 16
        %v3020 = vrot.slane %v3018, 4
        %v3021 = vor.u32 %v3020, %v3016
        %v3022 = vrot.slane %v3021, 4
        %v3024 = vshll.u32 %v2811, 16
        %v3026 = vrot.slane %v3024, 5
        %v3027 = vsel %vm937, %v3022, %v3026
        %v3029 = vshrl.u32 %v2812, 16
        %v3031 = vrot.slane %v3029, 4
        %v3032 = vshll.u32 %v2812, 16
        %v3034 = vrot.slane %v3032, 5
        %v3035 = vor.u32 %v3031, %v3034
        %v3036 = vrot.slane %v3035, 4
        %v3038 = vshll.u32 %v2813, 16
        %v3040 = vrot.slane %v3038, 5
        %v3041 = vsel %vm937, %v3036, %v3040
        %v3042 = vshrl.u32 %v2813, 16
        %v3044 = vrot.slane %v3042, 4
        %v3045 = vor.u32 %v3044, %v3040
        %v3046 = vrot.slane %v3045, 4
        %v3048 = vshll.u32 %v2814, 16
        %v3050 = vrot.slane %v3048, 5
        %v3051 = vsel %vm937, %v3046, %v3050
        %v3053 = vshrl.u32 %v2815, 16
        %v3055 = vrot.slane %v3053, 4
        %v3056 = vshll.u32 %v2815, 16
        %v3058 = vrot.slane %v3056, 5
        %v3059 = vor.u32 %v3055, %v3058
        %v3060 = vrot.slane %v3059, 4
        %v3062 = vshll.u32 %v2816, 16
        %v3064 = vrot.slane %v3062, 5
        %v3065 = vsel %vm937, %v3060, %v3064
        %v3066 = vshrl.u32 %v2816, 16
        %v3068 = vrot.slane %v3066, 4
        %v3069 = vor.u32 %v3068, %v3064
        %v3070 = vrot.slane %v3069, 4
        %v3072 = vshll.u32 %v2817, 16
        %v3074 = vrot.slane %v3072, 5
        %v3075 = vsel %vm937, %v3070, %v3074
        %v3077 = vshrl.u32 %v2818, 16
        %v3079 = vrot.slane %v3077, 4
        %v3080 = vshll.u32 %v2818, 16
        %v3082 = vrot.slane %v3080, 5
        %v3083 = vor.u32 %v3079, %v3082
        %v3084 = vrot.slane %v3083, 4
        %v3086 = vshll.u32 %v2819, 16
        %v3088 = vrot.slane %v3086, 5
        %v3089 = vsel %vm937, %v3084, %v3088
        %v3090 = vshrl.u32 %v2819, 16
        %v3092 = vrot.slane %v3090, 4
        %v3093 = vor.u32 %v3092, %v3088
        %v3094 = vrot.slane %v3093, 4
        %v3096 = vshll.u32 %v2820, 16
        %v3098 = vrot.slane %v3096, 5
        %v3099 = vsel %vm937, %v3094, %v3098
        %v3101 = vshrl.u32 %v2821, 16
        %v3103 = vrot.slane %v3101, 4
        %v3104 = vshll.u32 %v2821, 16
        %v3106 = vrot.slane %v3104, 5
        %v3107 = vor.u32 %v3103, %v3106
        %v3108 = vrot.slane %v3107, 4
        %v3110 = vshll.u32 %v2822, 16
        %v3112 = vrot.slane %v3110, 5
        %v3113 = vsel %vm937, %v3108, %v3112
        %v3114 = vshrl.u32 %v2822, 16
        %v3116 = vrot.slane %v3114, 4
        %v3117 = vor.u32 %v3116, %v3112
        %v3118 = vrot.slane %v3117, 4
        %v3120 = vshll.u32 %v2823, 16
        %v3122 = vrot.slane %v3120, 5
        %v3123 = vsel %vm937, %v3118, %v3122
        %v3125 = vshrl.u32 %v2824, 16
        %v3127 = vrot.slane %v3125, 4
        %v3128 = vshll.u32 %v2824, 16
        %v3130 = vrot.slane %v3128, 5
        %v3131 = vor.u32 %v3127, %v3130
        %v3132 = vrot.slane %v3131, 4
        %v3134 = vshll.u32 %v2825, 16
        %v3136 = vrot.slane %v3134, 5
        %v3137 = vsel %vm937, %v3132, %v3136
        %v3138 = vshrl.u32 %v2825, 16
        %v3140 = vrot.slane %v3138, 4
        %v3141 = vor.u32 %v3140, %v3136
        %v3142 = vrot.slane %v3141, 4
        %v3144 = vshll.u32 %v2826, 16
        %v3146 = vrot.slane %v3144, 5
        %v3147 = vsel %vm937, %v3142, %v3146
        %v3149 = vshrl.u32 %v2827, 16
        %v3151 = vrot.slane %v3149, 4
        %v3152 = vshll.u32 %v2827, 16
        %v3154 = vrot.slane %v3152, 5
        %v3155 = vor.u32 %v3151, %v3154
        %v3156 = vrot.slane %v3155, 4
        %v3158 = vshll.u32 %v2828, 16
        %v3160 = vrot.slane %v3158, 5
        %v3161 = vsel %vm937, %v3156, %v3160
        %v3162 = vshrl.u32 %v2828, 16
        %v3164 = vrot.slane %v3162, 4
        %v3165 = vor.u32 %v3164, %v3160
        %v3166 = vrot.slane %v3165, 4
        %v3168 = vshll.u32 %v2829, 16
        %v3170 = vrot.slane %v3168, 5
        %v3171 = vsel %vm937, %v3166, %v3170
        %v3173 = vshrl.u32 %v2830, 16
        %v3175 = vrot.slane %v3173, 4
        %v3176 = vshll.u32 %v2830, 16
        %v3178 = vrot.slane %v3176, 5
        %v3179 = vor.u32 %v3175, %v3178
        %v3180 = vrot.slane %v3179, 4
        %v3182 = vshll.u32 %v2831, 16
        %v3184 = vrot.slane %v3182, 5
        %v3185 = vsel %vm937, %v3180, %v3184
        %v3186 = vshrl.u32 %v2831, 16
        %v3188 = vrot.slane %v3186, 4
        %v3189 = vor.u32 %v3188, %v3184
        %v3190 = vrot.slane %v3189, 4
        %v3192 = vshll.u32 %v2832, 16
        %v3194 = vrot.slane %v3192, 5
        %v3195 = vsel %vm937, %v3190, %v3194
        %v3197 = vshrl.u32 %v2833, 16
        %v3199 = vrot.slane %v3197, 4
        %v3200 = vshll.u32 %v2833, 16
        %v3202 = vrot.slane %v3200, 5
        %v3203 = vor.u32 %v3199, %v3202
        %v3204 = vrot.slane %v3203, 4
        %v3206 = vshll.u32 %v2834, 16
        %v3208 = vrot.slane %v3206, 5
        %v3209 = vsel %vm937, %v3204, %v3208
        %v3210 = vshrl.u32 %v2834, 16
        %v3212 = vrot.slane %v3210, 4
        %v3213 = vor.u32 %v3212, %v3208
        %v3214 = vrot.slane %v3213, 4
        %v3216 = vshll.u32 %v2835, 16
        %v3218 = vrot.slane %v3216, 5
        %v3219 = vsel %vm937, %v3214, %v3218
        %s3220 = scalar_lea.vmem [#allocation6], 256
        %v3221 = vld [vmem:[%s3220] sm:$0xf]
        %v3222 = vld [vmem:[%s3220 + $0x4] sm:$0xf]
        %v3223 = vld [vmem:[%s3220 + $0x8] sm:$0xf]
        %v3224 = vld [vmem:[%s3220 + $0xc] sm:$0xf]
        %v3225 = vld [vmem:[%s3220 + $0x10] sm:$0xf]
        %v3226 = vld [vmem:[%s3220 + $0x14] sm:$0xf]
        %v3227 = vld [vmem:[%s3220 + $0x18] sm:$0xf]
        %v3228 = vld [vmem:[%s3220 + $0x1c] sm:$0xf]
        %v3229 = vld [vmem:[%s3220 + $0x20] sm:$0xf]
        %v3230 = vld [vmem:[%s3220 + $0x24] sm:$0xf]
        %v3231 = vld [vmem:[%s3220 + $0x28] sm:$0xf]
        %v3232 = vld [vmem:[%s3220 + $0x2c] sm:$0xf]
        %v3233 = vld [vmem:[%s3220 + $0x30] sm:$0xf]
        %v3234 = vld [vmem:[%s3220 + $0x34] sm:$0xf]
        %v3235 = vld [vmem:[%s3220 + $0x38] sm:$0xf]
        %v3236 = vld [vmem:[%s3220 + $0x3c] sm:$0xf]
        %v3237 = vunpack.c.l.b16 %v2849
        %v3238 = vunpack.c.l.b16 %v2859
        %v3239 = vunpack.c.l.b16 %v2873
        %v3240 = vunpack.c.l.b16 %v2883
        %v3241 = vunpack.c.l.b16 %v2897
        %v3242 = vunpack.c.l.b16 %v2907
        %v3243 = vunpack.c.l.b16 %v2921
        %v3244 = vunpack.c.l.b16 %v2931
        %v3245 = vunpack.c.l.b16 %v2945
        %v3246 = vunpack.c.l.b16 %v2955
        %v3247 = vunpack.c.l.b16 %v2969
        %v3248 = vunpack.c.l.b16 %v2979
        %v3249 = vunpack.c.l.b16 %v2993
        %v3250 = vunpack.c.l.b16 %v3003
        %v3251 = vunpack.c.l.b16 %v3017
        %v3252 = vunpack.c.l.b16 %v3027
        %v3253 = vunpack.c.l.b16 %v3041
        %v3254 = vunpack.c.l.b16 %v3051
        %v3255 = vunpack.c.l.b16 %v3065
        %v3256 = vunpack.c.l.b16 %v3075
        %v3257 = vunpack.c.l.b16 %v3089
        %v3258 = vunpack.c.l.b16 %v3099
        %v3259 = vunpack.c.l.b16 %v3113
        %v3260 = vunpack.c.l.b16 %v3123
        %v3261 = vunpack.c.l.b16 %v3137
        %v3262 = vunpack.c.l.b16 %v3147
        %v3263 = vunpack.c.l.b16 %v3161
        %v3264 = vunpack.c.l.b16 %v3171
        %v3265 = vunpack.c.l.b16 %v3185
        %v3266 = vunpack.c.l.b16 %v3195
        %v3267 = vunpack.c.l.b16 %v3209
        %v3268 = vunpack.c.l.b16 %v3219
        %v3269 = vpack.c.b16 %v3238, %v3237
        %v3270 = vpack.c.b16 %v3240, %v3239
        %v3271 = vpack.c.b16 %v3242, %v3241
        %v3272 = vpack.c.b16 %v3244, %v3243
        %v3273 = vpack.c.b16 %v3246, %v3245
        %v3274 = vpack.c.b16 %v3248, %v3247
        %v3275 = vpack.c.b16 %v3250, %v3249
        %v3276 = vpack.c.b16 %v3252, %v3251
        %v3277 = vpack.c.b16 %v3254, %v3253
        %v3278 = vpack.c.b16 %v3256, %v3255
        %v3279 = vpack.c.b16 %v3258, %v3257
        %v3280 = vpack.c.b16 %v3260, %v3259
        %v3281 = vpack.c.b16 %v3262, %v3261
        %v3282 = vpack.c.b16 %v3264, %v3263
        %v3283 = vpack.c.b16 %v3266, %v3265
        %v3284 = vpack.c.b16 %v3268, %v3267
        %v3317 = vunpack.c.l.b16 %v3221
        %v3318 = vunpack.c.l.b16 %v3222
        %v3319 = vunpack.c.l.b16 %v3223
        %v3320 = vunpack.c.l.b16 %v3224
        %v3321 = vunpack.c.l.b16 %v3225
        %v3322 = vunpack.c.l.b16 %v3226
        %v3323 = vunpack.c.l.b16 %v3227
        %v3324 = vunpack.c.l.b16 %v3228
        %v3325 = vunpack.c.l.b16 %v3229
        %v3326 = vunpack.c.l.b16 %v3230
        %v3327 = vunpack.c.l.b16 %v3231
        %v3328 = vunpack.c.l.b16 %v3232
        %v3329 = vunpack.c.l.b16 %v3233
        %v3330 = vunpack.c.l.b16 %v3234
        %v3331 = vunpack.c.l.b16 %v3235
        %v3332 = vunpack.c.l.b16 %v3236
        %v3333 = vpack.c.b16 %v3318, %v3317
        %v3334 = vpack.c.b16 %v3320, %v3319
        %v3335 = vpack.c.b16 %v3322, %v3321
        %v3336 = vpack.c.b16 %v3324, %v3323
        %v3337 = vpack.c.b16 %v3326, %v3325
        %v3338 = vpack.c.b16 %v3328, %v3327
        %v3339 = vpack.c.b16 %v3330, %v3329
        %v3340 = vpack.c.b16 %v3332, %v3331
        %3349 = vmatprep.subr.bf16.mxu0 0
        %3350 = vmatpush1.bf16.msra.mxu0 %v3333
        %3351 = vmatprep.subr.bf16.mxu0 0
        %3352 = vmatpush1.bf16.msra.mxu0 %v3334
        %3353 = vmatprep.subr.bf16.mxu0 0
        %3354 = vmatpush1.bf16.msra.mxu0 %v3335
        %3355 = vmatprep.subr.bf16.mxu0 0
        %3356 = vmatpush1.bf16.msra.mxu0 %v3336
        %3357 = vmatprep.subr.bf16.mxu0 0
        %3358 = vmatpush1.bf16.msra.mxu0 %v3337
        %3359 = vmatprep.subr.bf16.mxu0 0
        %3360 = vmatpush1.bf16.msra.mxu0 %v3338
        %3361 = vmatprep.subr.bf16.mxu0 0
        %3362 = vmatpush1.bf16.msra.mxu0 %v3339
        %3363 = vmatprep.subr.bf16.mxu0 0
        %3364 = vmatpush1.bf16.msra.mxu0 %v3340
        %3365 = vmatprep.subr.bf16.mxu0 0
        %3366 = vmatpush1.bf16.msra.mxu0 0
        %3367 = vmatprep.subr.bf16.mxu0 0
        %3368 = vmatpush1.bf16.msra.mxu0 0
        %3369 = vmatprep.subr.bf16.mxu0 0
        %3370 = vmatpush1.bf16.msra.mxu0 0
        %3371 = vmatprep.subr.bf16.mxu0 0
        %3372 = vmatpush1.bf16.msra.mxu0 0
        %3373 = vmatprep.subr.bf16.mxu0 0
        %3374 = vmatpush1.bf16.msra.mxu0 0
        %3375 = vmatprep.subr.bf16.mxu0 0
        %3376 = vmatpush1.bf16.msra.mxu0 0
        %3377 = vmatprep.subr.bf16.mxu0 0
        %3378 = vmatpush1.bf16.msra.mxu0 0
        %3379 = vmatprep.subr.bf16.mxu0 0
        %3380 = vmatpush1.bf16.msra.mxu0 0
        %3381 = vmatprep.mubr.bf16.mxu0 0
        %3382 = vmatmul.mubr.bf16.gmra.mrb[0].mxu0 %v3269
        %v3383 = vpop.f32.mrb[0].mxu0
        %v3384 = vadd.f32 0.0, %v3383
        %v3385 = vpop.f32.mrb[0].mxu0
        %v3386 = vpop.f32.mrb[0].mxu0
        %v3387 = vadd.f32 0.0, %v3386
        %v3388 = vpop.f32.mrb[0].mxu0
        %3389 = vmatprep.mubr.bf16.mxu0 0
        %3390 = vmatmul.mubr.bf16.gmra.mrb[0].mxu0 %v3270
        %v3391 = vpop.f32.mrb[0].mxu0
        %v3392 = vadd.f32 0.0, %v3391
        %v3393 = vpop.f32.mrb[0].mxu0
        %v3394 = vpop.f32.mrb[0].mxu0
        %v3395 = vadd.f32 0.0, %v3394
        %v3396 = vpop.f32.mrb[0].mxu0
        %3397 = vmatprep.mubr.bf16.mxu0 0
        %3398 = vmatmul.mubr.bf16.gmra.mrb[0].mxu0 %v3271
        %v3399 = vpop.f32.mrb[0].mxu0
        %v3400 = vadd.f32 0.0, %v3399
        %v3401 = vpop.f32.mrb[0].mxu0
        %v3402 = vpop.f32.mrb[0].mxu0
        %v3403 = vadd.f32 0.0, %v3402
        %v3404 = vpop.f32.mrb[0].mxu0
        %3405 = vmatprep.mubr.bf16.mxu0 0
        %3406 = vmatmul.mubr.bf16.gmra.mrb[0].mxu0 %v3272
        %v3407 = vpop.f32.mrb[0].mxu0
        %v3408 = vadd.f32 0.0, %v3407
        %v3409 = vpop.f32.mrb[0].mxu0
        %v3410 = vpop.f32.mrb[0].mxu0
        %v3411 = vadd.f32 0.0, %v3410
        %v3412 = vpop.f32.mrb[0].mxu0
        %3413 = vmatprep.mubr.bf16.mxu0 0
        %3414 = vmatmul.mubr.bf16.gmra.mrb[0].mxu0 %v3273
        %v3415 = vpop.f32.mrb[0].mxu0
        %v3416 = vadd.f32 0.0, %v3415
        %v3417 = vpop.f32.mrb[0].mxu0
        %v3418 = vpop.f32.mrb[0].mxu0
        %v3419 = vadd.f32 0.0, %v3418
        %v3420 = vpop.f32.mrb[0].mxu0
        %3421 = vmatprep.mubr.bf16.mxu0 0
        %3422 = vmatmul.mubr.bf16.gmra.mrb[0].mxu0 %v3274
        %v3423 = vpop.f32.mrb[0].mxu0
        %v3424 = vadd.f32 0.0, %v3423
        %v3425 = vpop.f32.mrb[0].mxu0
        %v3426 = vpop.f32.mrb[0].mxu0
        %v3427 = vadd.f32 0.0, %v3426
        %v3428 = vpop.f32.mrb[0].mxu0
        %3429 = vmatprep.mubr.bf16.mxu0 0
        %3430 = vmatmul.mubr.bf16.gmra.mrb[0].mxu0 %v3275
        %v3431 = vpop.f32.mrb[0].mxu0
        %v3432 = vadd.f32 0.0, %v3431
        %v3433 = vpop.f32.mrb[0].mxu0
        %v3434 = vpop.f32.mrb[0].mxu0
        %v3435 = vadd.f32 0.0, %v3434
        %v3436 = vpop.f32.mrb[0].mxu0
        %3437 = vmatprep.mubr.bf16.mxu0 0
        %3438 = vmatmul.mubr.bf16.gmra.mrb[0].mxu0 %v3276
        %v3439 = vpop.f32.mrb[0].mxu0
        %v3440 = vadd.f32 0.0, %v3439
        %v3441 = vpop.f32.mrb[0].mxu0
        %v3442 = vpop.f32.mrb[0].mxu0
        %v3443 = vadd.f32 0.0, %v3442
        %v3444 = vpop.f32.mrb[0].mxu0
        %3445 = vmatprep.mubr.bf16.mxu0 0
        %3446 = vmatmul.mubr.bf16.gmra.mrb[0].mxu0 %v3277
        %v3447 = vpop.f32.mrb[0].mxu0
        %v3448 = vadd.f32 0.0, %v3447
        %v3449 = vpop.f32.mrb[0].mxu0
        %v3450 = vpop.f32.mrb[0].mxu0
        %v3451 = vadd.f32 0.0, %v3450
        %v3452 = vpop.f32.mrb[0].mxu0
        %3453 = vmatprep.mubr.bf16.mxu0 0
        %3454 = vmatmul.mubr.bf16.gmra.mrb[0].mxu0 %v3278
        %v3455 = vpop.f32.mrb[0].mxu0
        %v3456 = vadd.f32 0.0, %v3455
        %v3457 = vpop.f32.mrb[0].mxu0
        %v3458 = vpop.f32.mrb[0].mxu0
        %v3459 = vadd.f32 0.0, %v3458
        %v3460 = vpop.f32.mrb[0].mxu0
        %3461 = vmatprep.mubr.bf16.mxu0 0
        %3462 = vmatmul.mubr.bf16.gmra.mrb[0].mxu0 %v3279
        %v3463 = vpop.f32.mrb[0].mxu0
        %v3464 = vadd.f32 0.0, %v3463
        %v3465 = vpop.f32.mrb[0].mxu0
        %v3466 = vpop.f32.mrb[0].mxu0
        %v3467 = vadd.f32 0.0, %v3466
        %v3468 = vpop.f32.mrb[0].mxu0
        %3469 = vmatprep.mubr.bf16.mxu0 0
        %3470 = vmatmul.mubr.bf16.gmra.mrb[0].mxu0 %v3280
        %v3471 = vpop.f32.mrb[0].mxu0
        %v3472 = vadd.f32 0.0, %v3471
        %v3473 = vpop.f32.mrb[0].mxu0
        %v3474 = vpop.f32.mrb[0].mxu0
        %v3475 = vadd.f32 0.0, %v3474
        %v3476 = vpop.f32.mrb[0].mxu0
        %3477 = vmatprep.mubr.bf16.mxu0 0
        %3478 = vmatmul.mubr.bf16.gmra.mrb[0].mxu0 %v3281
        %v3479 = vpop.f32.mrb[0].mxu0
        %v3480 = vadd.f32 0.0, %v3479
        %v3481 = vpop.f32.mrb[0].mxu0
        %v3482 = vpop.f32.mrb[0].mxu0
        %v3483 = vadd.f32 0.0, %v3482
        %v3484 = vpop.f32.mrb[0].mxu0
        %3485 = vmatprep.mubr.bf16.mxu0 0
        %3486 = vmatmul.mubr.bf16.gmra.mrb[0].mxu0 %v3282
        %v3487 = vpop.f32.mrb[0].mxu0
        %v3488 = vadd.f32 0.0, %v3487
        %v3489 = vpop.f32.mrb[0].mxu0
        %v3490 = vpop.f32.mrb[0].mxu0
        %v3491 = vadd.f32 0.0, %v3490
        %v3492 = vpop.f32.mrb[0].mxu0
        %3493 = vmatprep.mubr.bf16.mxu0 0
        %3494 = vmatmul.mubr.bf16.gmra.mrb[0].mxu0 %v3283
        %v3495 = vpop.f32.mrb[0].mxu0
        %v3496 = vadd.f32 0.0, %v3495
        %v3497 = vpop.f32.mrb[0].mxu0
        %v3498 = vpop.f32.mrb[0].mxu0
        %v3499 = vadd.f32 0.0, %v3498
        %v3500 = vpop.f32.mrb[0].mxu0
        %3501 = vmatprep.mubr.bf16.mxu0 0
        %3502 = vmatmul.mubr.bf16.gmra.mrb[0].mxu0 %v3284
        %v3503 = vpop.f32.mrb[0].mxu0
        %v3504 = vadd.f32 0.0, %v3503
        %v3505 = vpop.f32.mrb[0].mxu0
        %v3506 = vpop.f32.mrb[0].mxu0
        %v3507 = vadd.f32 0.0, %v3506
        %v3508 = vpop.f32.mrb[0].mxu0
        %3509 = vdwg.mxu0
        %v3510 = vadd.f32 %v2756, %v3384
        %v3511 = vadd.f32 %v2757, %v3387
        %v3512 = vadd.f32 %v2758, %v3392
        %v3513 = vadd.f32 %v2759, %v3395
        %v3514 = vadd.f32 %v2760, %v3400
        %v3515 = vadd.f32 %v2761, %v3403
        %v3516 = vadd.f32 %v2762, %v3408
        %v3517 = vadd.f32 %v2763, %v3411
        %v3518 = vadd.f32 %v2764, %v3416
        %v3519 = vadd.f32 %v2765, %v3419
        %v3520 = vadd.f32 %v2766, %v3424
        %v3521 = vadd.f32 %v2767, %v3427
        %v3522 = vadd.f32 %v2768, %v3432
        %v3523 = vadd.f32 %v2769, %v3435
        %v3524 = vadd.f32 %v2770, %v3440
        %v3525 = vadd.f32 %v2771, %v3443
        %v3526 = vadd.f32 %v2772, %v3448
        %v3527 = vadd.f32 %v2773, %v3451
        %v3528 = vadd.f32 %v2774, %v3456
        %v3529 = vadd.f32 %v2775, %v3459
        %v3530 = vadd.f32 %v2776, %v3464
        %v3531 = vadd.f32 %v2777, %v3467
        %v3532 = vadd.f32 %v2778, %v3472
        %v3533 = vadd.f32 %v2779, %v3475
        %v3534 = vadd.f32 %v2780, %v3480
        %v3535 = vadd.f32 %v2781, %v3483
        %v3536 = vadd.f32 %v2782, %v3488
        %v3537 = vadd.f32 %v2783, %v3491
        %v3538 = vadd.f32 %v2784, %v3496
        %v3539 = vadd.f32 %v2785, %v3499
        %v3540 = vadd.f32 %v2786, %v3504
        %v3541 = vadd.f32 %v2787, %v3507
        %v3542 = vld [vmem:[%s753] sm:$0xe]
        %v3543 = vld [vmem:[%s753 + $0xc] sm:$0xe]
        %v3544 = vld [vmem:[%s753 + $0x18] sm:$0xe]
        %v3545 = vld [vmem:[%s753 + $0x24] sm:$0xe]
        %v3546 = vld [vmem:[%s753 + $0x30] sm:$0xe]
        %v3547 = vld [vmem:[%s753 + $0x3c] sm:$0xe]
        %v3548 = vld [vmem:[%s753 + $0x48] sm:$0xe]
        %v3549 = vld [vmem:[%s753 + $0x54] sm:$0xe]
        %v3550 = vld [vmem:[%s753 + $0x60] sm:$0xe]
        %v3551 = vld [vmem:[%s753 + $0x6c] sm:$0xe]
        %v3552 = vld [vmem:[%s753 + $0x78] sm:$0xe]
        %v3553 = vld [vmem:[%s753 + $0x84] sm:$0xe]
        %v3554 = vld [vmem:[%s753 + $0x90] sm:$0xe]
        %v3555 = vld [vmem:[%s753 + $0x9c] sm:$0xe]
        %v3556 = vld [vmem:[%s753 + $0xa8] sm:$0xe]
        %v3557 = vld [vmem:[%s753 + $0xb4] sm:$0xe]
        %v3606 = vrot.slane %v3542, 5
        %v3607 = vrot.slane %v3606, 4
        %v3608 = vrot.slane %v2789, 5
        %v3609 = vsel %vm1967, %v3607, %v3608
        %v3610 = vrot.slane %v3608, 4
        %v3611 = vrot.slane %v2790, 5
        %v3612 = vsel %vm1967, %v3610, %v3611
        %v3613 = vrot.slane %v3543, 5
        %v3614 = vrot.slane %v3613, 4
        %v3615 = vrot.slane %v2792, 5
        %v3616 = vsel %vm1967, %v3614, %v3615
        %v3617 = vrot.slane %v3615, 4
        %v3618 = vrot.slane %v2793, 5
        %v3619 = vsel %vm1967, %v3617, %v3618
        %v3620 = vrot.slane %v3544, 5
        %v3621 = vrot.slane %v3620, 4
        %v3622 = vrot.slane %v2795, 5
        %v3623 = vsel %vm1967, %v3621, %v3622
        %v3624 = vrot.slane %v3622, 4
        %v3625 = vrot.slane %v2796, 5
        %v3626 = vsel %vm1967, %v3624, %v3625
        %v3627 = vrot.slane %v3545, 5
        %v3628 = vrot.slane %v3627, 4
        %v3629 = vrot.slane %v2798, 5
        %v3630 = vsel %vm1967, %v3628, %v3629
        %v3631 = vrot.slane %v3629, 4
        %v3632 = vrot.slane %v2799, 5
        %v3633 = vsel %vm1967, %v3631, %v3632
        %v3634 = vrot.slane %v3546, 5
        %v3635 = vrot.slane %v3634, 4
        %v3636 = vrot.slane %v2801, 5
        %v3637 = vsel %vm1967, %v3635, %v3636
        %v3638 = vrot.slane %v3636, 4
        %v3639 = vrot.slane %v2802, 5
        %v3640 = vsel %vm1967, %v3638, %v3639
        %v3641 = vrot.slane %v3547, 5
        %v3642 = vrot.slane %v3641, 4
        %v3643 = vrot.slane %v2804, 5
        %v3644 = vsel %vm1967, %v3642, %v3643
        %v3645 = vrot.slane %v3643, 4
        %v3646 = vrot.slane %v2805, 5
        %v3647 = vsel %vm1967, %v3645, %v3646
        %v3648 = vrot.slane %v3548, 5
        %v3649 = vrot.slane %v3648, 4
        %v3650 = vrot.slane %v2807, 5
        %v3651 = vsel %vm1967, %v3649, %v3650
        %v3652 = vrot.slane %v3650, 4
        %v3653 = vrot.slane %v2808, 5
        %v3654 = vsel %vm1967, %v3652, %v3653
        %v3655 = vrot.slane %v3549, 5
        %v3656 = vrot.slane %v3655, 4
        %v3657 = vrot.slane %v2810, 5
        %v3658 = vsel %vm1967, %v3656, %v3657
        %v3659 = vrot.slane %v3657, 4
        %v3660 = vrot.slane %v2811, 5
        %v3661 = vsel %vm1967, %v3659, %v3660
        %v3662 = vrot.slane %v3550, 5
        %v3663 = vrot.slane %v3662, 4
        %v3664 = vrot.slane %v2813, 5
        %v3665 = vsel %vm1967, %v3663, %v3664
        %v3666 = vrot.slane %v3664, 4
        %v3667 = vrot.slane %v2814, 5
        %v3668 = vsel %vm1967, %v3666, %v3667
        %v3669 = vrot.slane %v3551, 5
        %v3670 = vrot.slane %v3669, 4
        %v3671 = vrot.slane %v2816, 5
        %v3672 = vsel %vm1967, %v3670, %v3671
        %v3673 = vrot.slane %v3671, 4
        %v3674 = vrot.slane %v2817, 5
        %v3675 = vsel %vm1967, %v3673, %v3674
        %v3676 = vrot.slane %v3552, 5
        %v3677 = vrot.slane %v3676, 4
        %v3678 = vrot.slane %v2819, 5
        %v3679 = vsel %vm1967, %v3677, %v3678
        %v3680 = vrot.slane %v3678, 4
        %v3681 = vrot.slane %v2820, 5
        %v3682 = vsel %vm1967, %v3680, %v3681
        %v3683 = vrot.slane %v3553, 5
        %v3684 = vrot.slane %v3683, 4
        %v3685 = vrot.slane %v2822, 5
        %v3686 = vsel %vm1967, %v3684, %v3685
        %v3687 = vrot.slane %v3685, 4
        %v3688 = vrot.slane %v2823, 5
        %v3689 = vsel %vm1967, %v3687, %v3688
        %v3690 = vrot.slane %v3554, 5
        %v3691 = vrot.slane %v3690, 4
        %v3692 = vrot.slane %v2825, 5
        %v3693 = vsel %vm1967, %v3691, %v3692
        %v3694 = vrot.slane %v3692, 4
        %v3695 = vrot.slane %v2826, 5
        %v3696 = vsel %vm1967, %v3694, %v3695
        %v3697 = vrot.slane %v3555, 5
        %v3698 = vrot.slane %v3697, 4
        %v3699 = vrot.slane %v2828, 5
        %v3700 = vsel %vm1967, %v3698, %v3699
        %v3701 = vrot.slane %v3699, 4
        %v3702 = vrot.slane %v2829, 5
        %v3703 = vsel %vm1967, %v3701, %v3702
        %v3704 = vrot.slane %v3556, 5
        %v3705 = vrot.slane %v3704, 4
        %v3706 = vrot.slane %v2831, 5
        %v3707 = vsel %vm1967, %v3705, %v3706
        %v3708 = vrot.slane %v3706, 4
        %v3709 = vrot.slane %v2832, 5
        %v3710 = vsel %vm1967, %v3708, %v3709
        %v3711 = vrot.slane %v3557, 5
        %v3712 = vrot.slane %v3711, 4
        %v3713 = vrot.slane %v2834, 5
        %v3714 = vsel %vm1967, %v3712, %v3713
        %v3715 = vrot.slane %v3713, 4
        %v3716 = vrot.slane %v2835, 5
        %v3717 = vsel %vm1967, %v3715, %v3716
        %s3718 = scalar_lea.vmem [#allocation6], 320
        %v3719 = vld [vmem:[%s3718] sm:$0xf]
        %v3720 = vld [vmem:[%s3718 + $0x4] sm:$0xf]
        %v3721 = vld [vmem:[%s3718 + $0x8] sm:$0xf]
        %v3722 = vld [vmem:[%s3718 + $0xc] sm:$0xf]
        %v3723 = vld [vmem:[%s3718 + $0x10] sm:$0xf]
        %v3724 = vld [vmem:[%s3718 + $0x14] sm:$0xf]
        %v3725 = vld [vmem:[%s3718 + $0x18] sm:$0xf]
        %v3726 = vld [vmem:[%s3718 + $0x1c] sm:$0xf]
        %v3727 = vld [vmem:[%s3718 + $0x20] sm:$0xf]
        %v3728 = vld [vmem:[%s3718 + $0x24] sm:$0xf]
        %v3729 = vld [vmem:[%s3718 + $0x28] sm:$0xf]
        %v3730 = vld [vmem:[%s3718 + $0x2c] sm:$0xf]
        %v3731 = vld [vmem:[%s3718 + $0x30] sm:$0xf]
        %v3732 = vld [vmem:[%s3718 + $0x34] sm:$0xf]
        %v3733 = vld [vmem:[%s3718 + $0x38] sm:$0xf]
        %v3734 = vld [vmem:[%s3718 + $0x3c] sm:$0xf]
        %v3735 = vunpack.c.l.b16 %v3609
        %v3736 = vunpack.c.l.b16 %v3612
        %v3737 = vunpack.c.l.b16 %v3616
        %v3738 = vunpack.c.l.b16 %v3619
        %v3739 = vunpack.c.l.b16 %v3623
        %v3740 = vunpack.c.l.b16 %v3626
        %v3741 = vunpack.c.l.b16 %v3630
        %v3742 = vunpack.c.l.b16 %v3633
        %v3743 = vunpack.c.l.b16 %v3637
        %v3744 = vunpack.c.l.b16 %v3640
        %v3745 = vunpack.c.l.b16 %v3644
        %v3746 = vunpack.c.l.b16 %v3647
        %v3747 = vunpack.c.l.b16 %v3651
        %v3748 = vunpack.c.l.b16 %v3654
        %v3749 = vunpack.c.l.b16 %v3658
        %v3750 = vunpack.c.l.b16 %v3661
        %v3751 = vunpack.c.l.b16 %v3665
        %v3752 = vunpack.c.l.b16 %v3668
        %v3753 = vunpack.c.l.b16 %v3672
        %v3754 = vunpack.c.l.b16 %v3675
        %v3755 = vunpack.c.l.b16 %v3679
        %v3756 = vunpack.c.l.b16 %v3682
        %v3757 = vunpack.c.l.b16 %v3686
        %v3758 = vunpack.c.l.b16 %v3689
        %v3759 = vunpack.c.l.b16 %v3693
        %v3760 = vunpack.c.l.b16 %v3696
        %v3761 = vunpack.c.l.b16 %v3700
        %v3762 = vunpack.c.l.b16 %v3703
        %v3763 = vunpack.c.l.b16 %v3707
        %v3764 = vunpack.c.l.b16 %v3710
        %v3765 = vunpack.c.l.b16 %v3714
        %v3766 = vunpack.c.l.b16 %v3717
        %v3767 = vpack.c.b16 %v3736, %v3735
        %v3768 = vpack.c.b16 %v3738, %v3737
        %v3769 = vpack.c.b16 %v3740, %v3739
        %v3770 = vpack.c.b16 %v3742, %v3741
        %v3771 = vpack.c.b16 %v3744, %v3743
        %v3772 = vpack.c.b16 %v3746, %v3745
        %v3773 = vpack.c.b16 %v3748, %v3747
        %v3774 = vpack.c.b16 %v3750, %v3749
        %v3775 = vpack.c.b16 %v3752, %v3751
        %v3776 = vpack.c.b16 %v3754, %v3753
        %v3777 = vpack.c.b16 %v3756, %v3755
        %v3778 = vpack.c.b16 %v3758, %v3757
        %v3779 = vpack.c.b16 %v3760, %v3759
        %v3780 = vpack.c.b16 %v3762, %v3761
        %v3781 = vpack.c.b16 %v3764, %v3763
        %v3782 = vpack.c.b16 %v3766, %v3765
        %v3815 = vunpack.c.l.b16 %v3719
        %v3816 = vunpack.c.l.b16 %v3720
        %v3817 = vunpack.c.l.b16 %v3721
        %v3818 = vunpack.c.l.b16 %v3722
        %v3819 = vunpack.c.l.b16 %v3723
        %v3820 = vunpack.c.l.b16 %v3724
        %v3821 = vunpack.c.l.b16 %v3725
        %v3822 = vunpack.c.l.b16 %v3726
        %v3823 = vunpack.c.l.b16 %v3727
        %v3824 = vunpack.c.l.b16 %v3728
        %v3825 = vunpack.c.l.b16 %v3729
        %v3826 = vunpack.c.l.b16 %v3730
        %v3827 = vunpack.c.l.b16 %v3731
        %v3828 = vunpack.c.l.b16 %v3732
        %v3829 = vunpack.c.l.b16 %v3733
        %v3830 = vunpack.c.l.b16 %v3734
        %v3831 = vpack.c.b16 %v3816, %v3815
        %v3832 = vpack.c.b16 %v3818, %v3817
        %v3833 = vpack.c.b16 %v3820, %v3819
        %v3834 = vpack.c.b16 %v3822, %v3821
        %v3835 = vpack.c.b16 %v3824, %v3823
        %v3836 = vpack.c.b16 %v3826, %v3825
        %v3837 = vpack.c.b16 %v3828, %v3827
        %v3838 = vpack.c.b16 %v3830, %v3829
        %3847 = vmatprep.subr.bf16.mxu0 0
        %3848 = vmatpush1.bf16.msra.mxu0 %v3831
        %3849 = vmatprep.subr.bf16.mxu0 0
        %3850 = vmatpush1.bf16.msra.mxu0 %v3832
        %3851 = vmatprep.subr.bf16.mxu0 0
        %3852 = vmatpush1.bf16.msra.mxu0 %v3833
        %3853 = vmatprep.subr.bf16.mxu0 0
        %3854 = vmatpush1.bf16.msra.mxu0 %v3834
        %3855 = vmatprep.subr.bf16.mxu0 0
        %3856 = vmatpush1.bf16.msra.mxu0 %v3835
        %3857 = vmatprep.subr.bf16.mxu0 0
        %3858 = vmatpush1.bf16.msra.mxu0 %v3836
        %3859 = vmatprep.subr.bf16.mxu0 0
        %3860 = vmatpush1.bf16.msra.mxu0 %v3837
        %3861 = vmatprep.subr.bf16.mxu0 0
        %3862 = vmatpush1.bf16.msra.mxu0 %v3838
        %3863 = vmatprep.subr.bf16.mxu0 0
        %3864 = vmatpush1.bf16.msra.mxu0 0
        %3865 = vmatprep.subr.bf16.mxu0 0
        %3866 = vmatpush1.bf16.msra.mxu0 0
        %3867 = vmatprep.subr.bf16.mxu0 0
        %3868 = vmatpush1.bf16.msra.mxu0 0
        %3869 = vmatprep.subr.bf16.mxu0 0
        %3870 = vmatpush1.bf16.msra.mxu0 0
        %3871 = vmatprep.subr.bf16.mxu0 0
        %3872 = vmatpush1.bf16.msra.mxu0 0
        %3873 = vmatprep.subr.bf16.mxu0 0
        %3874 = vmatpush1.bf16.msra.mxu0 0
        %3875 = vmatprep.subr.bf16.mxu0 0
        %3876 = vmatpush1.bf16.msra.mxu0 0
        %3877 = vmatprep.subr.bf16.mxu0 0
        %3878 = vmatpush1.bf16.msra.mxu0 0
        %3879 = vmatprep.mubr.bf16.mxu0 0
        %3880 = vmatmul.mubr.bf16.gmra.mrb[0].mxu0 %v3767
        %v3881 = vpop.f32.mrb[0].mxu0
        %v3882 = vadd.f32 0.0, %v3881
        %v3883 = vpop.f32.mrb[0].mxu0
        %v3884 = vpop.f32.mrb[0].mxu0
        %v3885 = vadd.f32 0.0, %v3884
        %v3886 = vpop.f32.mrb[0].mxu0
        %3887 = vmatprep.mubr.bf16.mxu0 0
        %3888 = vmatmul.mubr.bf16.gmra.mrb[0].mxu0 %v3768
        %v3889 = vpop.f32.mrb[0].mxu0
        %v3890 = vadd.f32 0.0, %v3889
        %v3891 = vpop.f32.mrb[0].mxu0
        %v3892 = vpop.f32.mrb[0].mxu0
        %v3893 = vadd.f32 0.0, %v3892
        %v3894 = vpop.f32.mrb[0].mxu0
        %3895 = vmatprep.mubr.bf16.mxu0 0
        %3896 = vmatmul.mubr.bf16.gmra.mrb[0].mxu0 %v3769
        %v3897 = vpop.f32.mrb[0].mxu0
        %v3898 = vadd.f32 0.0, %v3897
        %v3899 = vpop.f32.mrb[0].mxu0
        %v3900 = vpop.f32.mrb[0].mxu0
        %v3901 = vadd.f32 0.0, %v3900
        %v3902 = vpop.f32.mrb[0].mxu0
        %3903 = vmatprep.mubr.bf16.mxu0 0
        %3904 = vmatmul.mubr.bf16.gmra.mrb[0].mxu0 %v3770
        %v3905 = vpop.f32.mrb[0].mxu0
        %v3906 = vadd.f32 0.0, %v3905
        %v3907 = vpop.f32.mrb[0].mxu0
        %v3908 = vpop.f32.mrb[0].mxu0
        %v3909 = vadd.f32 0.0, %v3908
        %v3910 = vpop.f32.mrb[0].mxu0
        %3911 = vmatprep.mubr.bf16.mxu0 0
        %3912 = vmatmul.mubr.bf16.gmra.mrb[0].mxu0 %v3771
        %v3913 = vpop.f32.mrb[0].mxu0
        %v3914 = vadd.f32 0.0, %v3913
        %v3915 = vpop.f32.mrb[0].mxu0
        %v3916 = vpop.f32.mrb[0].mxu0
        %v3917 = vadd.f32 0.0, %v3916
        %v3918 = vpop.f32.mrb[0].mxu0
        %3919 = vmatprep.mubr.bf16.mxu0 0
        %3920 = vmatmul.mubr.bf16.gmra.mrb[0].mxu0 %v3772
        %v3921 = vpop.f32.mrb[0].mxu0
        %v3922 = vadd.f32 0.0, %v3921
        %v3923 = vpop.f32.mrb[0].mxu0
        %v3924 = vpop.f32.mrb[0].mxu0
        %v3925 = vadd.f32 0.0, %v3924
        %v3926 = vpop.f32.mrb[0].mxu0
        %3927 = vmatprep.mubr.bf16.mxu0 0
        %3928 = vmatmul.mubr.bf16.gmra.mrb[0].mxu0 %v3773
        %v3929 = vpop.f32.mrb[0].mxu0
        %v3930 = vadd.f32 0.0, %v3929
        %v3931 = vpop.f32.mrb[0].mxu0
        %v3932 = vpop.f32.mrb[0].mxu0
        %v3933 = vadd.f32 0.0, %v3932
        %v3934 = vpop.f32.mrb[0].mxu0
        %3935 = vmatprep.mubr.bf16.mxu0 0
        %3936 = vmatmul.mubr.bf16.gmra.mrb[0].mxu0 %v3774
        %v3937 = vpop.f32.mrb[0].mxu0
        %v3938 = vadd.f32 0.0, %v3937
        %v3939 = vpop.f32.mrb[0].mxu0
        %v3940 = vpop.f32.mrb[0].mxu0
        %v3941 = vadd.f32 0.0, %v3940
        %v3942 = vpop.f32.mrb[0].mxu0
        %3943 = vmatprep.mubr.bf16.mxu0 0
        %3944 = vmatmul.mubr.bf16.gmra.mrb[0].mxu0 %v3775
        %v3945 = vpop.f32.mrb[0].mxu0
        %v3946 = vadd.f32 0.0, %v3945
        %v3947 = vpop.f32.mrb[0].mxu0
        %v3948 = vpop.f32.mrb[0].mxu0
        %v3949 = vadd.f32 0.0, %v3948
        %v3950 = vpop.f32.mrb[0].mxu0
        %3951 = vmatprep.mubr.bf16.mxu0 0
        %3952 = vmatmul.mubr.bf16.gmra.mrb[0].mxu0 %v3776
        %v3953 = vpop.f32.mrb[0].mxu0
        %v3954 = vadd.f32 0.0, %v3953
        %v3955 = vpop.f32.mrb[0].mxu0
        %v3956 = vpop.f32.mrb[0].mxu0
        %v3957 = vadd.f32 0.0, %v3956
        %v3958 = vpop.f32.mrb[0].mxu0
        %3959 = vmatprep.mubr.bf16.mxu0 0
        %3960 = vmatmul.mubr.bf16.gmra.mrb[0].mxu0 %v3777
        %v3961 = vpop.f32.mrb[0].mxu0
        %v3962 = vadd.f32 0.0, %v3961
        %v3963 = vpop.f32.mrb[0].mxu0
        %v3964 = vpop.f32.mrb[0].mxu0
        %v3965 = vadd.f32 0.0, %v3964
        %v3966 = vpop.f32.mrb[0].mxu0
        %3967 = vmatprep.mubr.bf16.mxu0 0
        %3968 = vmatmul.mubr.bf16.gmra.mrb[0].mxu0 %v3778
        %v3969 = vpop.f32.mrb[0].mxu0
        %v3970 = vadd.f32 0.0, %v3969
        %v3971 = vpop.f32.mrb[0].mxu0
        %v3972 = vpop.f32.mrb[0].mxu0
        %v3973 = vadd.f32 0.0, %v3972
        %v3974 = vpop.f32.mrb[0].mxu0
        %3975 = vmatprep.mubr.bf16.mxu0 0
        %3976 = vmatmul.mubr.bf16.gmra.mrb[0].mxu0 %v3779
        %v3977 = vpop.f32.mrb[0].mxu0
        %v3978 = vadd.f32 0.0, %v3977
        %v3979 = vpop.f32.mrb[0].mxu0
        %v3980 = vpop.f32.mrb[0].mxu0
        %v3981 = vadd.f32 0.0, %v3980
        %v3982 = vpop.f32.mrb[0].mxu0
        %3983 = vmatprep.mubr.bf16.mxu0 0
        %3984 = vmatmul.mubr.bf16.gmra.mrb[0].mxu0 %v3780
        %v3985 = vpop.f32.mrb[0].mxu0
        %v3986 = vadd.f32 0.0, %v3985
        %v3987 = vpop.f32.mrb[0].mxu0
        %v3988 = vpop.f32.mrb[0].mxu0
        %v3989 = vadd.f32 0.0, %v3988
        %v3990 = vpop.f32.mrb[0].mxu0
        %3991 = vmatprep.mubr.bf16.mxu0 0
        %3992 = vmatmul.mubr.bf16.gmra.mrb[0].mxu0 %v3781
        %v3993 = vpop.f32.mrb[0].mxu0
        %v3994 = vadd.f32 0.0, %v3993
        %v3995 = vpop.f32.mrb[0].mxu0
        %v3996 = vpop.f32.mrb[0].mxu0
        %v3997 = vadd.f32 0.0, %v3996
        %v3998 = vpop.f32.mrb[0].mxu0
        %3999 = vmatprep.mubr.bf16.mxu0 0
        %4000 = vmatmul.mubr.bf16.gmra.mrb[0].mxu0 %v3782
        %v4001 = vpop.f32.mrb[0].mxu0
        %v4002 = vadd.f32 0.0, %v4001
        %v4003 = vpop.f32.mrb[0].mxu0
        %v4004 = vpop.f32.mrb[0].mxu0
        %v4005 = vadd.f32 0.0, %v4004
        %v4006 = vpop.f32.mrb[0].mxu0
        %4007 = vdwg.mxu0
        %v4008 = vadd.f32 %v3510, %v3882
        %v4009 = vadd.f32 %v3511, %v3885
        %v4010 = vadd.f32 %v3512, %v3890
        %v4011 = vadd.f32 %v3513, %v3893
        %v4012 = vadd.f32 %v3514, %v3898
        %v4013 = vadd.f32 %v3515, %v3901
        %v4014 = vadd.f32 %v3516, %v3906
        %v4015 = vadd.f32 %v3517, %v3909
        %v4016 = vadd.f32 %v3518, %v3914
        %v4017 = vadd.f32 %v3519, %v3917
        %v4018 = vadd.f32 %v3520, %v3922
        %v4019 = vadd.f32 %v3521, %v3925
        %v4020 = vadd.f32 %v3522, %v3930
        %v4021 = vadd.f32 %v3523, %v3933
        %v4022 = vadd.f32 %v3524, %v3938
        %v4023 = vadd.f32 %v3525, %v3941
        %v4024 = vadd.f32 %v3526, %v3946
        %v4025 = vadd.f32 %v3527, %v3949
        %v4026 = vadd.f32 %v3528, %v3954
        %v4027 = vadd.f32 %v3529, %v3957
        %v4028 = vadd.f32 %v3530, %v3962
        %v4029 = vadd.f32 %v3531, %v3965
        %v4030 = vadd.f32 %v3532, %v3970
        %v4031 = vadd.f32 %v3533, %v3973
        %v4032 = vadd.f32 %v3534, %v3978
        %v4033 = vadd.f32 %v3535, %v3981
        %v4034 = vadd.f32 %v3536, %v3986
        %v4035 = vadd.f32 %v3537, %v3989
        %v4036 = vadd.f32 %v3538, %v3994
        %v4037 = vadd.f32 %v3539, %v3997
        %v4038 = vadd.f32 %v3540, %v4002
        %v4039 = vadd.f32 %v3541, %v4005
        %s4040 = scalar_lea.vmem [#allocation2], 24
        %v4041 = vld [vmem:[%s4040] sm:$0xf]
        %v4042 = vld [vmem:[%s4040 + $0x4] sm:$0xf]
        %v4043 = vld [vmem:[%s4040 + $0xc] sm:$0xf]
        %v4044 = vld [vmem:[%s4040 + $0x10] sm:$0xf]
        %v4045 = vld [vmem:[%s4040 + $0x18] sm:$0xf]
        %v4046 = vld [vmem:[%s4040 + $0x1c] sm:$0xf]
        %v4047 = vld [vmem:[%s4040 + $0x24] sm:$0xf]
        %v4048 = vld [vmem:[%s4040 + $0x28] sm:$0xf]
        %v4049 = vld [vmem:[%s4040 + $0x30] sm:$0xf]
        %v4050 = vld [vmem:[%s4040 + $0x34] sm:$0xf]
        %v4051 = vld [vmem:[%s4040 + $0x3c] sm:$0xf]
        %v4052 = vld [vmem:[%s4040 + $0x40] sm:$0xf]
        %v4053 = vld [vmem:[%s4040 + $0x48] sm:$0xf]
        %v4054 = vld [vmem:[%s4040 + $0x4c] sm:$0xf]
        %v4055 = vld [vmem:[%s4040 + $0x54] sm:$0xf]
        %v4056 = vld [vmem:[%s4040 + $0x58] sm:$0xf]
        %v4057 = vld [vmem:[%s4040 + $0x60] sm:$0xf]
        %v4058 = vld [vmem:[%s4040 + $0x64] sm:$0xf]
        %v4059 = vld [vmem:[%s4040 + $0x6c] sm:$0xf]
        %v4060 = vld [vmem:[%s4040 + $0x70] sm:$0xf]
        %v4061 = vld [vmem:[%s4040 + $0x78] sm:$0xf]
        %v4062 = vld [vmem:[%s4040 + $0x7c] sm:$0xf]
        %v4063 = vld [vmem:[%s4040 + $0x84] sm:$0xf]
        %v4064 = vld [vmem:[%s4040 + $0x88] sm:$0xf]
        %v4065 = vld [vmem:[%s4040 + $0x90] sm:$0xf]
        %v4066 = vld [vmem:[%s4040 + $0x94] sm:$0xf]
        %v4067 = vld [vmem:[%s4040 + $0x9c] sm:$0xf]
        %v4068 = vld [vmem:[%s4040 + $0xa0] sm:$0xf]
        %v4069 = vld [vmem:[%s4040 + $0xa8] sm:$0xf]
        %v4070 = vld [vmem:[%s4040 + $0xac] sm:$0xf]
        %v4071 = vld [vmem:[%s4040 + $0xb4] sm:$0xf]
        %v4072 = vld [vmem:[%s4040 + $0xb8] sm:$0xf]
        %s4073 = scalar_lea.vmem [#allocation6], 384
        %v4074 = vld [vmem:[%s4073] sm:$0xf]
        %v4075 = vld [vmem:[%s4073 + $0x4] sm:$0xf]
        %v4076 = vld [vmem:[%s4073 + $0x8] sm:$0xf]
        %v4077 = vld [vmem:[%s4073 + $0xc] sm:$0xf]
        %v4078 = vld [vmem:[%s4073 + $0x10] sm:$0xf]
        %v4079 = vld [vmem:[%s4073 + $0x14] sm:$0xf]
        %v4080 = vld [vmem:[%s4073 + $0x18] sm:$0xf]
        %v4081 = vld [vmem:[%s4073 + $0x1c] sm:$0xf]
        %v4082 = vld [vmem:[%s4073 + $0x20] sm:$0xf]
        %v4083 = vld [vmem:[%s4073 + $0x24] sm:$0xf]
        %v4084 = vld [vmem:[%s4073 + $0x28] sm:$0xf]
        %v4085 = vld [vmem:[%s4073 + $0x2c] sm:$0xf]
        %v4086 = vld [vmem:[%s4073 + $0x30] sm:$0xf]
        %v4087 = vld [vmem:[%s4073 + $0x34] sm:$0xf]
        %v4088 = vld [vmem:[%s4073 + $0x38] sm:$0xf]
        %v4089 = vld [vmem:[%s4073 + $0x3c] sm:$0xf]
        %v4122 = vunpack.c.l.b16 %v4041
        %v4123 = vunpack.c.l.b16 %v4042
        %v4124 = vunpack.c.l.b16 %v4043
        %v4125 = vunpack.c.l.b16 %v4044
        %v4126 = vunpack.c.l.b16 %v4045
        %v4127 = vunpack.c.l.b16 %v4046
        %v4128 = vunpack.c.l.b16 %v4047
        %v4129 = vunpack.c.l.b16 %v4048
        %v4130 = vunpack.c.l.b16 %v4049
        %v4131 = vunpack.c.l.b16 %v4050
        %v4132 = vunpack.c.l.b16 %v4051
        %v4133 = vunpack.c.l.b16 %v4052
        %v4134 = vunpack.c.l.b16 %v4053
        %v4135 = vunpack.c.l.b16 %v4054
        %v4136 = vunpack.c.l.b16 %v4055
        %v4137 = vunpack.c.l.b16 %v4056
        %v4138 = vunpack.c.l.b16 %v4057
        %v4139 = vunpack.c.l.b16 %v4058
        %v4140 = vunpack.c.l.b16 %v4059
        %v4141 = vunpack.c.l.b16 %v4060
        %v4142 = vunpack.c.l.b16 %v4061
        %v4143 = vunpack.c.l.b16 %v4062
        %v4144 = vunpack.c.l.b16 %v4063
        %v4145 = vunpack.c.l.b16 %v4064
        %v4146 = vunpack.c.l.b16 %v4065
        %v4147 = vunpack.c.l.b16 %v4066
        %v4148 = vunpack.c.l.b16 %v4067
        %v4149 = vunpack.c.l.b16 %v4068
        %v4150 = vunpack.c.l.b16 %v4069
        %v4151 = vunpack.c.l.b16 %v4070
        %v4152 = vunpack.c.l.b16 %v4071
        %v4153 = vunpack.c.l.b16 %v4072
        %v4154 = vpack.c.b16 %v4123, %v4122
        %v4155 = vpack.c.b16 %v4125, %v4124
        %v4156 = vpack.c.b16 %v4127, %v4126
        %v4157 = vpack.c.b16 %v4129, %v4128
        %v4158 = vpack.c.b16 %v4131, %v4130
        %v4159 = vpack.c.b16 %v4133, %v4132
        %v4160 = vpack.c.b16 %v4135, %v4134
        %v4161 = vpack.c.b16 %v4137, %v4136
        %v4162 = vpack.c.b16 %v4139, %v4138
        %v4163 = vpack.c.b16 %v4141, %v4140
        %v4164 = vpack.c.b16 %v4143, %v4142
        %v4165 = vpack.c.b16 %v4145, %v4144
        %v4166 = vpack.c.b16 %v4147, %v4146
        %v4167 = vpack.c.b16 %v4149, %v4148
        %v4168 = vpack.c.b16 %v4151, %v4150
        %v4169 = vpack.c.b16 %v4153, %v4152
        %v4202 = vunpack.c.l.b16 %v4074
        %v4203 = vunpack.c.l.b16 %v4075
        %v4204 = vunpack.c.l.b16 %v4076
        %v4205 = vunpack.c.l.b16 %v4077
        %v4206 = vunpack.c.l.b16 %v4078
        %v4207 = vunpack.c.l.b16 %v4079
        %v4208 = vunpack.c.l.b16 %v4080
        %v4209 = vunpack.c.l.b16 %v4081
        %v4210 = vunpack.c.l.b16 %v4082
        %v4211 = vunpack.c.l.b16 %v4083
        %v4212 = vunpack.c.l.b16 %v4084
        %v4213 = vunpack.c.l.b16 %v4085
        %v4214 = vunpack.c.l.b16 %v4086
        %v4215 = vunpack.c.l.b16 %v4087
        %v4216 = vunpack.c.l.b16 %v4088
        %v4217 = vunpack.c.l.b16 %v4089
        %v4218 = vpack.c.b16 %v4203, %v4202
        %v4219 = vpack.c.b16 %v4205, %v4204
        %v4220 = vpack.c.b16 %v4207, %v4206
        %v4221 = vpack.c.b16 %v4209, %v4208
        %v4222 = vpack.c.b16 %v4211, %v4210
        %v4223 = vpack.c.b16 %v4213, %v4212
        %v4224 = vpack.c.b16 %v4215, %v4214
        %v4225 = vpack.c.b16 %v4217, %v4216
        %4234 = vmatprep.subr.bf16.mxu0 0
        %4235 = vmatpush1.bf16.msra.mxu0 %v4218
        %4236 = vmatprep.subr.bf16.mxu0 0
        %4237 = vmatpush1.bf16.msra.mxu0 %v4219
        %4238 = vmatprep.subr.bf16.mxu0 0
        %4239 = vmatpush1.bf16.msra.mxu0 %v4220
        %4240 = vmatprep.subr.bf16.mxu0 0
        %4241 = vmatpush1.bf16.msra.mxu0 %v4221
        %4242 = vmatprep.subr.bf16.mxu0 0
        %4243 = vmatpush1.bf16.msra.mxu0 %v4222
        %4244 = vmatprep.subr.bf16.mxu0 0
        %4245 = vmatpush1.bf16.msra.mxu0 %v4223
        %4246 = vmatprep.subr.bf16.mxu0 0
        %4247 = vmatpush1.bf16.msra.mxu0 %v4224
        %4248 = vmatprep.subr.bf16.mxu0 0
        %4249 = vmatpush1.bf16.msra.mxu0 %v4225
        %4250 = vmatprep.subr.bf16.mxu0 0
        %4251 = vmatpush1.bf16.msra.mxu0 0
        %4252 = vmatprep.subr.bf16.mxu0 0
        %4253 = vmatpush1.bf16.msra.mxu0 0
        %4254 = vmatprep.subr.bf16.mxu0 0
        %4255 = vmatpush1.bf16.msra.mxu0 0
        %4256 = vmatprep.subr.bf16.mxu0 0
        %4257 = vmatpush1.bf16.msra.mxu0 0
        %4258 = vmatprep.subr.bf16.mxu0 0
        %4259 = vmatpush1.bf16.msra.mxu0 0
        %4260 = vmatprep.subr.bf16.mxu0 0
        %4261 = vmatpush1.bf16.msra.mxu0 0
        %4262 = vmatprep.subr.bf16.mxu0 0
        %4263 = vmatpush1.bf16.msra.mxu0 0
        %4264 = vmatprep.subr.bf16.mxu0 0
        %4265 = vmatpush1.bf16.msra.mxu0 0
        %4266 = vmatprep.mubr.bf16.mxu0 0
        %4267 = vmatmul.mubr.bf16.gmra.mrb[0].mxu0 %v4154
        %v4268 = vpop.f32.mrb[0].mxu0
        %v4269 = vadd.f32 0.0, %v4268
        %v4270 = vpop.f32.mrb[0].mxu0
        %v4271 = vpop.f32.mrb[0].mxu0
        %v4272 = vadd.f32 0.0, %v4271
        %v4273 = vpop.f32.mrb[0].mxu0
        %4274 = vmatprep.mubr.bf16.mxu0 0
        %4275 = vmatmul.mubr.bf16.gmra.mrb[0].mxu0 %v4155
        %v4276 = vpop.f32.mrb[0].mxu0
        %v4277 = vadd.f32 0.0, %v4276
        %v4278 = vpop.f32.mrb[0].mxu0
        %v4279 = vpop.f32.mrb[0].mxu0
        %v4280 = vadd.f32 0.0, %v4279
        %v4281 = vpop.f32.mrb[0].mxu0
        %4282 = vmatprep.mubr.bf16.mxu0 0
        %4283 = vmatmul.mubr.bf16.gmra.mrb[0].mxu0 %v4156
        %v4284 = vpop.f32.mrb[0].mxu0
        %v4285 = vadd.f32 0.0, %v4284
        %v4286 = vpop.f32.mrb[0].mxu0
        %v4287 = vpop.f32.mrb[0].mxu0
        %v4288 = vadd.f32 0.0, %v4287
        %v4289 = vpop.f32.mrb[0].mxu0
        %4290 = vmatprep.mubr.bf16.mxu0 0
        %4291 = vmatmul.mubr.bf16.gmra.mrb[0].mxu0 %v4157
        %v4292 = vpop.f32.mrb[0].mxu0
        %v4293 = vadd.f32 0.0, %v4292
        %v4294 = vpop.f32.mrb[0].mxu0
        %v4295 = vpop.f32.mrb[0].mxu0
        %v4296 = vadd.f32 0.0, %v4295
        %v4297 = vpop.f32.mrb[0].mxu0
        %4298 = vmatprep.mubr.bf16.mxu0 0
        %4299 = vmatmul.mubr.bf16.gmra.mrb[0].mxu0 %v4158
        %v4300 = vpop.f32.mrb[0].mxu0
        %v4301 = vadd.f32 0.0, %v4300
        %v4302 = vpop.f32.mrb[0].mxu0
        %v4303 = vpop.f32.mrb[0].mxu0
        %v4304 = vadd.f32 0.0, %v4303
        %v4305 = vpop.f32.mrb[0].mxu0
        %4306 = vmatprep.mubr.bf16.mxu0 0
        %4307 = vmatmul.mubr.bf16.gmra.mrb[0].mxu0 %v4159
        %v4308 = vpop.f32.mrb[0].mxu0
        %v4309 = vadd.f32 0.0, %v4308
        %v4310 = vpop.f32.mrb[0].mxu0
        %v4311 = vpop.f32.mrb[0].mxu0
        %v4312 = vadd.f32 0.0, %v4311
        %v4313 = vpop.f32.mrb[0].mxu0
        %4314 = vmatprep.mubr.bf16.mxu0 0
        %4315 = vmatmul.mubr.bf16.gmra.mrb[0].mxu0 %v4160
        %v4316 = vpop.f32.mrb[0].mxu0
        %v4317 = vadd.f32 0.0, %v4316
        %v4318 = vpop.f32.mrb[0].mxu0
        %v4319 = vpop.f32.mrb[0].mxu0
        %v4320 = vadd.f32 0.0, %v4319
        %v4321 = vpop.f32.mrb[0].mxu0
        %4322 = vmatprep.mubr.bf16.mxu0 0
        %4323 = vmatmul.mubr.bf16.gmra.mrb[0].mxu0 %v4161
        %v4324 = vpop.f32.mrb[0].mxu0
        %v4325 = vadd.f32 0.0, %v4324
        %v4326 = vpop.f32.mrb[0].mxu0
        %v4327 = vpop.f32.mrb[0].mxu0
        %v4328 = vadd.f32 0.0, %v4327
        %v4329 = vpop.f32.mrb[0].mxu0
        %4330 = vmatprep.mubr.bf16.mxu0 0
        %4331 = vmatmul.mubr.bf16.gmra.mrb[0].mxu0 %v4162
        %v4332 = vpop.f32.mrb[0].mxu0
        %v4333 = vadd.f32 0.0, %v4332
        %v4334 = vpop.f32.mrb[0].mxu0
        %v4335 = vpop.f32.mrb[0].mxu0
        %v4336 = vadd.f32 0.0, %v4335
        %v4337 = vpop.f32.mrb[0].mxu0
        %4338 = vmatprep.mubr.bf16.mxu0 0
        %4339 = vmatmul.mubr.bf16.gmra.mrb[0].mxu0 %v4163
        %v4340 = vpop.f32.mrb[0].mxu0
        %v4341 = vadd.f32 0.0, %v4340
        %v4342 = vpop.f32.mrb[0].mxu0
        %v4343 = vpop.f32.mrb[0].mxu0
        %v4344 = vadd.f32 0.0, %v4343
        %v4345 = vpop.f32.mrb[0].mxu0
        %4346 = vmatprep.mubr.bf16.mxu0 0
        %4347 = vmatmul.mubr.bf16.gmra.mrb[0].mxu0 %v4164
        %v4348 = vpop.f32.mrb[0].mxu0
        %v4349 = vadd.f32 0.0, %v4348
        %v4350 = vpop.f32.mrb[0].mxu0
        %v4351 = vpop.f32.mrb[0].mxu0
        %v4352 = vadd.f32 0.0, %v4351
        %v4353 = vpop.f32.mrb[0].mxu0
        %4354 = vmatprep.mubr.bf16.mxu0 0
        %4355 = vmatmul.mubr.bf16.gmra.mrb[0].mxu0 %v4165
        %v4356 = vpop.f32.mrb[0].mxu0
        %v4357 = vadd.f32 0.0, %v4356
        %v4358 = vpop.f32.mrb[0].mxu0
        %v4359 = vpop.f32.mrb[0].mxu0
        %v4360 = vadd.f32 0.0, %v4359
        %v4361 = vpop.f32.mrb[0].mxu0
        %4362 = vmatprep.mubr.bf16.mxu0 0
        %4363 = vmatmul.mubr.bf16.gmra.mrb[0].mxu0 %v4166
        %v4364 = vpop.f32.mrb[0].mxu0
        %v4365 = vadd.f32 0.0, %v4364
        %v4366 = vpop.f32.mrb[0].mxu0
        %v4367 = vpop.f32.mrb[0].mxu0
        %v4368 = vadd.f32 0.0, %v4367
        %v4369 = vpop.f32.mrb[0].mxu0
        %4370 = vmatprep.mubr.bf16.mxu0 0
        %4371 = vmatmul.mubr.bf16.gmra.mrb[0].mxu0 %v4167
        %v4372 = vpop.f32.mrb[0].mxu0
        %v4373 = vadd.f32 0.0, %v4372
        %v4374 = vpop.f32.mrb[0].mxu0
        %v4375 = vpop.f32.mrb[0].mxu0
        %v4376 = vadd.f32 0.0, %v4375
        %v4377 = vpop.f32.mrb[0].mxu0
        %4378 = vmatprep.mubr.bf16.mxu0 0
        %4379 = vmatmul.mubr.bf16.gmra.mrb[0].mxu0 %v4168
        %v4380 = vpop.f32.mrb[0].mxu0
        %v4381 = vadd.f32 0.0, %v4380
        %v4382 = vpop.f32.mrb[0].mxu0
        %v4383 = vpop.f32.mrb[0].mxu0
        %v4384 = vadd.f32 0.0, %v4383
        %v4385 = vpop.f32.mrb[0].mxu0
        %4386 = vmatprep.mubr.bf16.mxu0 0
        %4387 = vmatmul.mubr.bf16.gmra.mrb[0].mxu0 %v4169
        %v4388 = vpop.f32.mrb[0].mxu0
        %v4389 = vadd.f32 0.0, %v4388
        %v4390 = vpop.f32.mrb[0].mxu0
        %v4391 = vpop.f32.mrb[0].mxu0
        %v4392 = vadd.f32 0.0, %v4391
        %v4393 = vpop.f32.mrb[0].mxu0
        %4394 = vdwg.mxu0
        %v4395 = vadd.f32 %v4008, %v4269
        %v4396 = vadd.f32 %v4009, %v4272
        %v4397 = vadd.f32 %v4010, %v4277
        %v4398 = vadd.f32 %v4011, %v4280
        %v4399 = vadd.f32 %v4012, %v4285
        %v4400 = vadd.f32 %v4013, %v4288
        %v4401 = vadd.f32 %v4014, %v4293
        %v4402 = vadd.f32 %v4015, %v4296
        %v4403 = vadd.f32 %v4016, %v4301
        %v4404 = vadd.f32 %v4017, %v4304
        %v4405 = vadd.f32 %v4018, %v4309
        %v4406 = vadd.f32 %v4019, %v4312
        %v4407 = vadd.f32 %v4020, %v4317
        %v4408 = vadd.f32 %v4021, %v4320
        %v4409 = vadd.f32 %v4022, %v4325
        %v4410 = vadd.f32 %v4023, %v4328
        %v4411 = vadd.f32 %v4024, %v4333
        %v4412 = vadd.f32 %v4025, %v4336
        %v4413 = vadd.f32 %v4026, %v4341
        %v4414 = vadd.f32 %v4027, %v4344
        %v4415 = vadd.f32 %v4028, %v4349
        %v4416 = vadd.f32 %v4029, %v4352
        %v4417 = vadd.f32 %v4030, %v4357
        %v4418 = vadd.f32 %v4031, %v4360
        %v4419 = vadd.f32 %v4032, %v4365
        %v4420 = vadd.f32 %v4033, %v4368
        %v4421 = vadd.f32 %v4034, %v4373
        %v4422 = vadd.f32 %v4035, %v4376
        %v4423 = vadd.f32 %v4036, %v4381
        %v4424 = vadd.f32 %v4037, %v4384
        %v4425 = vadd.f32 %v4038, %v4389
        %v4426 = vadd.f32 %v4039, %v4392
        %v4427 = vld [vmem:[%s4040] sm:$0xf]
        %v4428 = vld [vmem:[%s4040 + $0x4] sm:$0xf]
        %v4429 = vld [vmem:[%s4040 + $0x8] sm:$0x1]
        %v4430 = vld [vmem:[%s4040 + $0xc] sm:$0xf]
        %v4431 = vld [vmem:[%s4040 + $0x10] sm:$0xf]
        %v4432 = vld [vmem:[%s4040 + $0x14] sm:$0x1]
        %v4433 = vld [vmem:[%s4040 + $0x18] sm:$0xf]
        %v4434 = vld [vmem:[%s4040 + $0x1c] sm:$0xf]
        %v4435 = vld [vmem:[%s4040 + $0x20] sm:$0x1]
        %v4436 = vld [vmem:[%s4040 + $0x24] sm:$0xf]
        %v4437 = vld [vmem:[%s4040 + $0x28] sm:$0xf]
        %v4438 = vld [vmem:[%s4040 + $0x2c] sm:$0x1]
        %v4439 = vld [vmem:[%s4040 + $0x30] sm:$0xf]
        %v4440 = vld [vmem:[%s4040 + $0x34] sm:$0xf]
        %v4441 = vld [vmem:[%s4040 + $0x38] sm:$0x1]
        %v4442 = vld [vmem:[%s4040 + $0x3c] sm:$0xf]
        %v4443 = vld [vmem:[%s4040 + $0x40] sm:$0xf]
        %v4444 = vld [vmem:[%s4040 + $0x44] sm:$0x1]
        %v4445 = vld [vmem:[%s4040 + $0x48] sm:$0xf]
        %v4446 = vld [vmem:[%s4040 + $0x4c] sm:$0xf]
        %v4447 = vld [vmem:[%s4040 + $0x50] sm:$0x1]
        %v4448 = vld [vmem:[%s4040 + $0x54] sm:$0xf]
        %v4449 = vld [vmem:[%s4040 + $0x58] sm:$0xf]
        %v4450 = vld [vmem:[%s4040 + $0x5c] sm:$0x1]
        %v4451 = vld [vmem:[%s4040 + $0x60] sm:$0xf]
        %v4452 = vld [vmem:[%s4040 + $0x64] sm:$0xf]
        %v4453 = vld [vmem:[%s4040 + $0x68] sm:$0x1]
        %v4454 = vld [vmem:[%s4040 + $0x6c] sm:$0xf]
        %v4455 = vld [vmem:[%s4040 + $0x70] sm:$0xf]
        %v4456 = vld [vmem:[%s4040 + $0x74] sm:$0x1]
        %v4457 = vld [vmem:[%s4040 + $0x78] sm:$0xf]
        %v4458 = vld [vmem:[%s4040 + $0x7c] sm:$0xf]
        %v4459 = vld [vmem:[%s4040 + $0x80] sm:$0x1]
        %v4460 = vld [vmem:[%s4040 + $0x84] sm:$0xf]
        %v4461 = vld [vmem:[%s4040 + $0x88] sm:$0xf]
        %v4462 = vld [vmem:[%s4040 + $0x8c] sm:$0x1]
        %v4463 = vld [vmem:[%s4040 + $0x90] sm:$0xf]
        %v4464 = vld [vmem:[%s4040 + $0x94] sm:$0xf]
        %v4465 = vld [vmem:[%s4040 + $0x98] sm:$0x1]
        %v4466 = vld [vmem:[%s4040 + $0x9c] sm:$0xf]
        %v4467 = vld [vmem:[%s4040 + $0xa0] sm:$0xf]
        %v4468 = vld [vmem:[%s4040 + $0xa4] sm:$0x1]
        %v4469 = vld [vmem:[%s4040 + $0xa8] sm:$0xf]
        %v4470 = vld [vmem:[%s4040 + $0xac] sm:$0xf]
        %v4471 = vld [vmem:[%s4040 + $0xb0] sm:$0x1]
        %v4472 = vld [vmem:[%s4040 + $0xb4] sm:$0xf]
        %v4473 = vld [vmem:[%s4040 + $0xb8] sm:$0xf]
        %v4474 = vld [vmem:[%s4040 + $0xbc] sm:$0x1]
        %v4476 = vshrl.u32 %v4427, 16
        %v4478 = vrot.slane %v4476, 4
        %v4479 = vshll.u32 %v4427, 16
        %v4481 = vrot.slane %v4479, 5
        %v4482 = vor.u32 %v4478, %v4481
        %v4483 = vrot.slane %v4482, 4
        %v4485 = vshll.u32 %v4428, 16
        %v4487 = vrot.slane %v4485, 5
        %v4488 = vsel %vm937, %v4483, %v4487
        %v4489 = vshrl.u32 %v4428, 16
        %v4491 = vrot.slane %v4489, 4
        %v4492 = vor.u32 %v4491, %v4487
        %v4493 = vrot.slane %v4492, 4
        %v4495 = vshll.u32 %v4429, 16
        %v4497 = vrot.slane %v4495, 5
        %v4498 = vsel %vm937, %v4493, %v4497
        %v4500 = vshrl.u32 %v4430, 16
        %v4502 = vrot.slane %v4500, 4
        %v4503 = vshll.u32 %v4430, 16
        %v4505 = vrot.slane %v4503, 5
        %v4506 = vor.u32 %v4502, %v4505
        %v4507 = vrot.slane %v4506, 4
        %v4509 = vshll.u32 %v4431, 16
        %v4511 = vrot.slane %v4509, 5
        %v4512 = vsel %vm937, %v4507, %v4511
        %v4513 = vshrl.u32 %v4431, 16
        %v4515 = vrot.slane %v4513, 4
        %v4516 = vor.u32 %v4515, %v4511
        %v4517 = vrot.slane %v4516, 4
        %v4519 = vshll.u32 %v4432, 16
        %v4521 = vrot.slane %v4519, 5
        %v4522 = vsel %vm937, %v4517, %v4521
        %v4524 = vshrl.u32 %v4433, 16
        %v4526 = vrot.slane %v4524, 4
        %v4527 = vshll.u32 %v4433, 16
        %v4529 = vrot.slane %v4527, 5
        %v4530 = vor.u32 %v4526, %v4529
        %v4531 = vrot.slane %v4530, 4
        %v4533 = vshll.u32 %v4434, 16
        %v4535 = vrot.slane %v4533, 5
        %v4536 = vsel %vm937, %v4531, %v4535
        %v4537 = vshrl.u32 %v4434, 16
        %v4539 = vrot.slane %v4537, 4
        %v4540 = vor.u32 %v4539, %v4535
        %v4541 = vrot.slane %v4540, 4
        %v4543 = vshll.u32 %v4435, 16
        %v4545 = vrot.slane %v4543, 5
        %v4546 = vsel %vm937, %v4541, %v4545
        %v4548 = vshrl.u32 %v4436, 16
        %v4550 = vrot.slane %v4548, 4
        %v4551 = vshll.u32 %v4436, 16
        %v4553 = vrot.slane %v4551, 5
        %v4554 = vor.u32 %v4550, %v4553
        %v4555 = vrot.slane %v4554, 4
        %v4557 = vshll.u32 %v4437, 16
        %v4559 = vrot.slane %v4557, 5
        %v4560 = vsel %vm937, %v4555, %v4559
        %v4561 = vshrl.u32 %v4437, 16
        %v4563 = vrot.slane %v4561, 4
        %v4564 = vor.u32 %v4563, %v4559
        %v4565 = vrot.slane %v4564, 4
        %v4567 = vshll.u32 %v4438, 16
        %v4569 = vrot.slane %v4567, 5
        %v4570 = vsel %vm937, %v4565, %v4569
        %v4572 = vshrl.u32 %v4439, 16
        %v4574 = vrot.slane %v4572, 4
        %v4575 = vshll.u32 %v4439, 16
        %v4577 = vrot.slane %v4575, 5
        %v4578 = vor.u32 %v4574, %v4577
        %v4579 = vrot.slane %v4578, 4
        %v4581 = vshll.u32 %v4440, 16
        %v4583 = vrot.slane %v4581, 5
        %v4584 = vsel %vm937, %v4579, %v4583
        %v4585 = vshrl.u32 %v4440, 16
        %v4587 = vrot.slane %v4585, 4
        %v4588 = vor.u32 %v4587, %v4583
        %v4589 = vrot.slane %v4588, 4
        %v4591 = vshll.u32 %v4441, 16
        %v4593 = vrot.slane %v4591, 5
        %v4594 = vsel %vm937, %v4589, %v4593
        %v4596 = vshrl.u32 %v4442, 16
        %v4598 = vrot.slane %v4596, 4
        %v4599 = vshll.u32 %v4442, 16
        %v4601 = vrot.slane %v4599, 5
        %v4602 = vor.u32 %v4598, %v4601
        %v4603 = vrot.slane %v4602, 4
        %v4605 = vshll.u32 %v4443, 16
        %v4607 = vrot.slane %v4605, 5
        %v4608 = vsel %vm937, %v4603, %v4607
        %v4609 = vshrl.u32 %v4443, 16
        %v4611 = vrot.slane %v4609, 4
        %v4612 = vor.u32 %v4611, %v4607
        %v4613 = vrot.slane %v4612, 4
        %v4615 = vshll.u32 %v4444, 16
        %v4617 = vrot.slane %v4615, 5
        %v4618 = vsel %vm937, %v4613, %v4617
        %v4620 = vshrl.u32 %v4445, 16
        %v4622 = vrot.slane %v4620, 4
        %v4623 = vshll.u32 %v4445, 16
        %v4625 = vrot.slane %v4623, 5
        %v4626 = vor.u32 %v4622, %v4625
        %v4627 = vrot.slane %v4626, 4
        %v4629 = vshll.u32 %v4446, 16
        %v4631 = vrot.slane %v4629, 5
        %v4632 = vsel %vm937, %v4627, %v4631
        %v4633 = vshrl.u32 %v4446, 16
        %v4635 = vrot.slane %v4633, 4
        %v4636 = vor.u32 %v4635, %v4631
        %v4637 = vrot.slane %v4636, 4
        %v4639 = vshll.u32 %v4447, 16
        %v4641 = vrot.slane %v4639, 5
        %v4642 = vsel %vm937, %v4637, %v4641
        %v4644 = vshrl.u32 %v4448, 16
        %v4646 = vrot.slane %v4644, 4
        %v4647 = vshll.u32 %v4448, 16
        %v4649 = vrot.slane %v4647, 5
        %v4650 = vor.u32 %v4646, %v4649
        %v4651 = vrot.slane %v4650, 4
        %v4653 = vshll.u32 %v4449, 16
        %v4655 = vrot.slane %v4653, 5
        %v4656 = vsel %vm937, %v4651, %v4655
        %v4657 = vshrl.u32 %v4449, 16
        %v4659 = vrot.slane %v4657, 4
        %v4660 = vor.u32 %v4659, %v4655
        %v4661 = vrot.slane %v4660, 4
        %v4663 = vshll.u32 %v4450, 16
        %v4665 = vrot.slane %v4663, 5
        %v4666 = vsel %vm937, %v4661, %v4665
        %v4668 = vshrl.u32 %v4451, 16
        %v4670 = vrot.slane %v4668, 4
        %v4671 = vshll.u32 %v4451, 16
        %v4673 = vrot.slane %v4671, 5
        %v4674 = vor.u32 %v4670, %v4673
        %v4675 = vrot.slane %v4674, 4
        %v4677 = vshll.u32 %v4452, 16
        %v4679 = vrot.slane %v4677, 5
        %v4680 = vsel %vm937, %v4675, %v4679
        %v4681 = vshrl.u32 %v4452, 16
        %v4683 = vrot.slane %v4681, 4
        %v4684 = vor.u32 %v4683, %v4679
        %v4685 = vrot.slane %v4684, 4
        %v4687 = vshll.u32 %v4453, 16
        %v4689 = vrot.slane %v4687, 5
        %v4690 = vsel %vm937, %v4685, %v4689
        %v4692 = vshrl.u32 %v4454, 16
        %v4694 = vrot.slane %v4692, 4
        %v4695 = vshll.u32 %v4454, 16
        %v4697 = vrot.slane %v4695, 5
        %v4698 = vor.u32 %v4694, %v4697
        %v4699 = vrot.slane %v4698, 4
        %v4701 = vshll.u32 %v4455, 16
        %v4703 = vrot.slane %v4701, 5
        %v4704 = vsel %vm937, %v4699, %v4703
        %v4705 = vshrl.u32 %v4455, 16
        %v4707 = vrot.slane %v4705, 4
        %v4708 = vor.u32 %v4707, %v4703
        %v4709 = vrot.slane %v4708, 4
        %v4711 = vshll.u32 %v4456, 16
        %v4713 = vrot.slane %v4711, 5
        %v4714 = vsel %vm937, %v4709, %v4713
        %v4716 = vshrl.u32 %v4457, 16
        %v4718 = vrot.slane %v4716, 4
        %v4719 = vshll.u32 %v4457, 16
        %v4721 = vrot.slane %v4719, 5
        %v4722 = vor.u32 %v4718, %v4721
        %v4723 = vrot.slane %v4722, 4
        %v4725 = vshll.u32 %v4458, 16
        %v4727 = vrot.slane %v4725, 5
        %v4728 = vsel %vm937, %v4723, %v4727
        %v4729 = vshrl.u32 %v4458, 16
        %v4731 = vrot.slane %v4729, 4
        %v4732 = vor.u32 %v4731, %v4727
        %v4733 = vrot.slane %v4732, 4
        %v4735 = vshll.u32 %v4459, 16
        %v4737 = vrot.slane %v4735, 5
        %v4738 = vsel %vm937, %v4733, %v4737
        %v4740 = vshrl.u32 %v4460, 16
        %v4742 = vrot.slane %v4740, 4
        %v4743 = vshll.u32 %v4460, 16
        %v4745 = vrot.slane %v4743, 5
        %v4746 = vor.u32 %v4742, %v4745
        %v4747 = vrot.slane %v4746, 4
        %v4749 = vshll.u32 %v4461, 16
        %v4751 = vrot.slane %v4749, 5
        %v4752 = vsel %vm937, %v4747, %v4751
        %v4753 = vshrl.u32 %v4461, 16
        %v4755 = vrot.slane %v4753, 4
        %v4756 = vor.u32 %v4755, %v4751
        %v4757 = vrot.slane %v4756, 4
        %v4759 = vshll.u32 %v4462, 16
        %v4761 = vrot.slane %v4759, 5
        %v4762 = vsel %vm937, %v4757, %v4761
        %v4764 = vshrl.u32 %v4463, 16
        %v4766 = vrot.slane %v4764, 4
        %v4767 = vshll.u32 %v4463, 16
        %v4769 = vrot.slane %v4767, 5
        %v4770 = vor.u32 %v4766, %v4769
        %v4771 = vrot.slane %v4770, 4
        %v4773 = vshll.u32 %v4464, 16
        %v4775 = vrot.slane %v4773, 5
        %v4776 = vsel %vm937, %v4771, %v4775
        %v4777 = vshrl.u32 %v4464, 16
        %v4779 = vrot.slane %v4777, 4
        %v4780 = vor.u32 %v4779, %v4775
        %v4781 = vrot.slane %v4780, 4
        %v4783 = vshll.u32 %v4465, 16
        %v4785 = vrot.slane %v4783, 5
        %v4786 = vsel %vm937, %v4781, %v4785
        %v4788 = vshrl.u32 %v4466, 16
        %v4790 = vrot.slane %v4788, 4
        %v4791 = vshll.u32 %v4466, 16
        %v4793 = vrot.slane %v4791, 5
        %v4794 = vor.u32 %v4790, %v4793
        %v4795 = vrot.slane %v4794, 4
        %v4797 = vshll.u32 %v4467, 16
        %v4799 = vrot.slane %v4797, 5
        %v4800 = vsel %vm937, %v4795, %v4799
        %v4801 = vshrl.u32 %v4467, 16
        %v4803 = vrot.slane %v4801, 4
        %v4804 = vor.u32 %v4803, %v4799
        %v4805 = vrot.slane %v4804, 4
        %v4807 = vshll.u32 %v4468, 16
        %v4809 = vrot.slane %v4807, 5
        %v4810 = vsel %vm937, %v4805, %v4809
        %v4812 = vshrl.u32 %v4469, 16
        %v4814 = vrot.slane %v4812, 4
        %v4815 = vshll.u32 %v4469, 16
        %v4817 = vrot.slane %v4815, 5
        %v4818 = vor.u32 %v4814, %v4817
        %v4819 = vrot.slane %v4818, 4
        %v4821 = vshll.u32 %v4470, 16
        %v4823 = vrot.slane %v4821, 5
        %v4824 = vsel %vm937, %v4819, %v4823
        %v4825 = vshrl.u32 %v4470, 16
        %v4827 = vrot.slane %v4825, 4
        %v4828 = vor.u32 %v4827, %v4823
        %v4829 = vrot.slane %v4828, 4
        %v4831 = vshll.u32 %v4471, 16
        %v4833 = vrot.slane %v4831, 5
        %v4834 = vsel %vm937, %v4829, %v4833
        %v4836 = vshrl.u32 %v4472, 16
        %v4838 = vrot.slane %v4836, 4
        %v4839 = vshll.u32 %v4472, 16
        %v4841 = vrot.slane %v4839, 5
        %v4842 = vor.u32 %v4838, %v4841
        %v4843 = vrot.slane %v4842, 4
        %v4845 = vshll.u32 %v4473, 16
        %v4847 = vrot.slane %v4845, 5
        %v4848 = vsel %vm937, %v4843, %v4847
        %v4849 = vshrl.u32 %v4473, 16
        %v4851 = vrot.slane %v4849, 4
        %v4852 = vor.u32 %v4851, %v4847
        %v4853 = vrot.slane %v4852, 4
        %v4855 = vshll.u32 %v4474, 16
        %v4857 = vrot.slane %v4855, 5
        %v4858 = vsel %vm937, %v4853, %v4857
        %s4859 = scalar_lea.vmem [#allocation6], 448
        %v4860 = vld [vmem:[%s4859] sm:$0xf]
        %v4861 = vld [vmem:[%s4859 + $0x4] sm:$0xf]
        %v4862 = vld [vmem:[%s4859 + $0x8] sm:$0xf]
        %v4863 = vld [vmem:[%s4859 + $0xc] sm:$0xf]
        %v4864 = vld [vmem:[%s4859 + $0x10] sm:$0xf]
        %v4865 = vld [vmem:[%s4859 + $0x14] sm:$0xf]
        %v4866 = vld [vmem:[%s4859 + $0x18] sm:$0xf]
        %v4867 = vld [vmem:[%s4859 + $0x1c] sm:$0xf]
        %v4868 = vld [vmem:[%s4859 + $0x20] sm:$0xf]
        %v4869 = vld [vmem:[%s4859 + $0x24] sm:$0xf]
        %v4870 = vld [vmem:[%s4859 + $0x28] sm:$0xf]
        %v4871 = vld [vmem:[%s4859 + $0x2c] sm:$0xf]
        %v4872 = vld [vmem:[%s4859 + $0x30] sm:$0xf]
        %v4873 = vld [vmem:[%s4859 + $0x34] sm:$0xf]
        %v4874 = vld [vmem:[%s4859 + $0x38] sm:$0xf]
        %v4875 = vld [vmem:[%s4859 + $0x3c] sm:$0xf]
        %v4876 = vunpack.c.l.b16 %v4488
        %v4877 = vunpack.c.l.b16 %v4498
        %v4878 = vunpack.c.l.b16 %v4512
        %v4879 = vunpack.c.l.b16 %v4522
        %v4880 = vunpack.c.l.b16 %v4536
        %v4881 = vunpack.c.l.b16 %v4546
        %v4882 = vunpack.c.l.b16 %v4560
        %v4883 = vunpack.c.l.b16 %v4570
        %v4884 = vunpack.c.l.b16 %v4584
        %v4885 = vunpack.c.l.b16 %v4594
        %v4886 = vunpack.c.l.b16 %v4608
        %v4887 = vunpack.c.l.b16 %v4618
        %v4888 = vunpack.c.l.b16 %v4632
        %v4889 = vunpack.c.l.b16 %v4642
        %v4890 = vunpack.c.l.b16 %v4656
        %v4891 = vunpack.c.l.b16 %v4666
        %v4892 = vunpack.c.l.b16 %v4680
        %v4893 = vunpack.c.l.b16 %v4690
        %v4894 = vunpack.c.l.b16 %v4704
        %v4895 = vunpack.c.l.b16 %v4714
        %v4896 = vunpack.c.l.b16 %v4728
        %v4897 = vunpack.c.l.b16 %v4738
        %v4898 = vunpack.c.l.b16 %v4752
        %v4899 = vunpack.c.l.b16 %v4762
        %v4900 = vunpack.c.l.b16 %v4776
        %v4901 = vunpack.c.l.b16 %v4786
        %v4902 = vunpack.c.l.b16 %v4800
        %v4903 = vunpack.c.l.b16 %v4810
        %v4904 = vunpack.c.l.b16 %v4824
        %v4905 = vunpack.c.l.b16 %v4834
        %v4906 = vunpack.c.l.b16 %v4848
        %v4907 = vunpack.c.l.b16 %v4858
        %v4908 = vpack.c.b16 %v4877, %v4876
        %v4909 = vpack.c.b16 %v4879, %v4878
        %v4910 = vpack.c.b16 %v4881, %v4880
        %v4911 = vpack.c.b16 %v4883, %v4882
        %v4912 = vpack.c.b16 %v4885, %v4884
        %v4913 = vpack.c.b16 %v4887, %v4886
        %v4914 = vpack.c.b16 %v4889, %v4888
        %v4915 = vpack.c.b16 %v4891, %v4890
        %v4916 = vpack.c.b16 %v4893, %v4892
        %v4917 = vpack.c.b16 %v4895, %v4894
        %v4918 = vpack.c.b16 %v4897, %v4896
        %v4919 = vpack.c.b16 %v4899, %v4898
        %v4920 = vpack.c.b16 %v4901, %v4900
        %v4921 = vpack.c.b16 %v4903, %v4902
        %v4922 = vpack.c.b16 %v4905, %v4904
        %v4923 = vpack.c.b16 %v4907, %v4906
        %v4956 = vunpack.c.l.b16 %v4860
        %v4957 = vunpack.c.l.b16 %v4861
        %v4958 = vunpack.c.l.b16 %v4862
        %v4959 = vunpack.c.l.b16 %v4863
        %v4960 = vunpack.c.l.b16 %v4864
        %v4961 = vunpack.c.l.b16 %v4865
        %v4962 = vunpack.c.l.b16 %v4866
        %v4963 = vunpack.c.l.b16 %v4867
        %v4964 = vunpack.c.l.b16 %v4868
        %v4965 = vunpack.c.l.b16 %v4869
        %v4966 = vunpack.c.l.b16 %v4870
        %v4967 = vunpack.c.l.b16 %v4871
        %v4968 = vunpack.c.l.b16 %v4872
        %v4969 = vunpack.c.l.b16 %v4873
        %v4970 = vunpack.c.l.b16 %v4874
        %v4971 = vunpack.c.l.b16 %v4875
        %v4972 = vpack.c.b16 %v4957, %v4956
        %v4973 = vpack.c.b16 %v4959, %v4958
        %v4974 = vpack.c.b16 %v4961, %v4960
        %v4975 = vpack.c.b16 %v4963, %v4962
        %v4976 = vpack.c.b16 %v4965, %v4964
        %v4977 = vpack.c.b16 %v4967, %v4966
        %v4978 = vpack.c.b16 %v4969, %v4968
        %v4979 = vpack.c.b16 %v4971, %v4970
        %4988 = vmatprep.subr.bf16.mxu0 0
        %4989 = vmatpush1.bf16.msra.mxu0 %v4972
        %4990 = vmatprep.subr.bf16.mxu0 0
        %4991 = vmatpush1.bf16.msra.mxu0 %v4973
        %4992 = vmatprep.subr.bf16.mxu0 0
        %4993 = vmatpush1.bf16.msra.mxu0 %v4974
        %4994 = vmatprep.subr.bf16.mxu0 0
        %4995 = vmatpush1.bf16.msra.mxu0 %v4975
        %4996 = vmatprep.subr.bf16.mxu0 0
        %4997 = vmatpush1.bf16.msra.mxu0 %v4976
        %4998 = vmatprep.subr.bf16.mxu0 0
        %4999 = vmatpush1.bf16.msra.mxu0 %v4977
        %5000 = vmatprep.subr.bf16.mxu0 0
        %5001 = vmatpush1.bf16.msra.mxu0 %v4978
        %5002 = vmatprep.subr.bf16.mxu0 0
        %5003 = vmatpush1.bf16.msra.mxu0 %v4979
        %5004 = vmatprep.subr.bf16.mxu0 0
        %5005 = vmatpush1.bf16.msra.mxu0 0
        %5006 = vmatprep.subr.bf16.mxu0 0
        %5007 = vmatpush1.bf16.msra.mxu0 0
        %5008 = vmatprep.subr.bf16.mxu0 0
        %5009 = vmatpush1.bf16.msra.mxu0 0
        %5010 = vmatprep.subr.bf16.mxu0 0
        %5011 = vmatpush1.bf16.msra.mxu0 0
        %5012 = vmatprep.subr.bf16.mxu0 0
        %5013 = vmatpush1.bf16.msra.mxu0 0
        %5014 = vmatprep.subr.bf16.mxu0 0
        %5015 = vmatpush1.bf16.msra.mxu0 0
        %5016 = vmatprep.subr.bf16.mxu0 0
        %5017 = vmatpush1.bf16.msra.mxu0 0
        %5018 = vmatprep.subr.bf16.mxu0 0
        %5019 = vmatpush1.bf16.msra.mxu0 0
        %5020 = vmatprep.mubr.bf16.mxu0 0
        %5021 = vmatmul.mubr.bf16.gmra.mrb[0].mxu0 %v4908
        %v5022 = vpop.f32.mrb[0].mxu0
        %v5023 = vadd.f32 0.0, %v5022
        %v5024 = vpop.f32.mrb[0].mxu0
        %v5025 = vpop.f32.mrb[0].mxu0
        %v5026 = vadd.f32 0.0, %v5025
        %v5027 = vpop.f32.mrb[0].mxu0
        %5028 = vmatprep.mubr.bf16.mxu0 0
        %5029 = vmatmul.mubr.bf16.gmra.mrb[0].mxu0 %v4909
        %v5030 = vpop.f32.mrb[0].mxu0
        %v5031 = vadd.f32 0.0, %v5030
        %v5032 = vpop.f32.mrb[0].mxu0
        %v5033 = vpop.f32.mrb[0].mxu0
        %v5034 = vadd.f32 0.0, %v5033
        %v5035 = vpop.f32.mrb[0].mxu0
        %5036 = vmatprep.mubr.bf16.mxu0 0
        %5037 = vmatmul.mubr.bf16.gmra.mrb[0].mxu0 %v4910
        %v5038 = vpop.f32.mrb[0].mxu0
        %v5039 = vadd.f32 0.0, %v5038
        %v5040 = vpop.f32.mrb[0].mxu0
        %v5041 = vpop.f32.mrb[0].mxu0
        %v5042 = vadd.f32 0.0, %v5041
        %v5043 = vpop.f32.mrb[0].mxu0
        %5044 = vmatprep.mubr.bf16.mxu0 0
        %5045 = vmatmul.mubr.bf16.gmra.mrb[0].mxu0 %v4911
        %v5046 = vpop.f32.mrb[0].mxu0
        %v5047 = vadd.f32 0.0, %v5046
        %v5048 = vpop.f32.mrb[0].mxu0
        %v5049 = vpop.f32.mrb[0].mxu0
        %v5050 = vadd.f32 0.0, %v5049
        %v5051 = vpop.f32.mrb[0].mxu0
        %5052 = vmatprep.mubr.bf16.mxu0 0
        %5053 = vmatmul.mubr.bf16.gmra.mrb[0].mxu0 %v4912
        %v5054 = vpop.f32.mrb[0].mxu0
        %v5055 = vadd.f32 0.0, %v5054
        %v5056 = vpop.f32.mrb[0].mxu0
        %v5057 = vpop.f32.mrb[0].mxu0
        %v5058 = vadd.f32 0.0, %v5057
        %v5059 = vpop.f32.mrb[0].mxu0
        %5060 = vmatprep.mubr.bf16.mxu0 0
        %5061 = vmatmul.mubr.bf16.gmra.mrb[0].mxu0 %v4913
        %v5062 = vpop.f32.mrb[0].mxu0
        %v5063 = vadd.f32 0.0, %v5062
        %v5064 = vpop.f32.mrb[0].mxu0
        %v5065 = vpop.f32.mrb[0].mxu0
        %v5066 = vadd.f32 0.0, %v5065
        %v5067 = vpop.f32.mrb[0].mxu0
        %5068 = vmatprep.mubr.bf16.mxu0 0
        %5069 = vmatmul.mubr.bf16.gmra.mrb[0].mxu0 %v4914
        %v5070 = vpop.f32.mrb[0].mxu0
        %v5071 = vadd.f32 0.0, %v5070
        %v5072 = vpop.f32.mrb[0].mxu0
        %v5073 = vpop.f32.mrb[0].mxu0
        %v5074 = vadd.f32 0.0, %v5073
        %v5075 = vpop.f32.mrb[0].mxu0
        %5076 = vmatprep.mubr.bf16.mxu0 0
        %5077 = vmatmul.mubr.bf16.gmra.mrb[0].mxu0 %v4915
        %v5078 = vpop.f32.mrb[0].mxu0
        %v5079 = vadd.f32 0.0, %v5078
        %v5080 = vpop.f32.mrb[0].mxu0
        %v5081 = vpop.f32.mrb[0].mxu0
        %v5082 = vadd.f32 0.0, %v5081
        %v5083 = vpop.f32.mrb[0].mxu0
        %5084 = vmatprep.mubr.bf16.mxu0 0
        %5085 = vmatmul.mubr.bf16.gmra.mrb[0].mxu0 %v4916
        %v5086 = vpop.f32.mrb[0].mxu0
        %v5087 = vadd.f32 0.0, %v5086
        %v5088 = vpop.f32.mrb[0].mxu0
        %v5089 = vpop.f32.mrb[0].mxu0
        %v5090 = vadd.f32 0.0, %v5089
        %v5091 = vpop.f32.mrb[0].mxu0
        %5092 = vmatprep.mubr.bf16.mxu0 0
        %5093 = vmatmul.mubr.bf16.gmra.mrb[0].mxu0 %v4917
        %v5094 = vpop.f32.mrb[0].mxu0
        %v5095 = vadd.f32 0.0, %v5094
        %v5096 = vpop.f32.mrb[0].mxu0
        %v5097 = vpop.f32.mrb[0].mxu0
        %v5098 = vadd.f32 0.0, %v5097
        %v5099 = vpop.f32.mrb[0].mxu0
        %5100 = vmatprep.mubr.bf16.mxu0 0
        %5101 = vmatmul.mubr.bf16.gmra.mrb[0].mxu0 %v4918
        %v5102 = vpop.f32.mrb[0].mxu0
        %v5103 = vadd.f32 0.0, %v5102
        %v5104 = vpop.f32.mrb[0].mxu0
        %v5105 = vpop.f32.mrb[0].mxu0
        %v5106 = vadd.f32 0.0, %v5105
        %v5107 = vpop.f32.mrb[0].mxu0
        %5108 = vmatprep.mubr.bf16.mxu0 0
        %5109 = vmatmul.mubr.bf16.gmra.mrb[0].mxu0 %v4919
        %v5110 = vpop.f32.mrb[0].mxu0
        %v5111 = vadd.f32 0.0, %v5110
        %v5112 = vpop.f32.mrb[0].mxu0
        %v5113 = vpop.f32.mrb[0].mxu0
        %v5114 = vadd.f32 0.0, %v5113
        %v5115 = vpop.f32.mrb[0].mxu0
        %5116 = vmatprep.mubr.bf16.mxu0 0
        %5117 = vmatmul.mubr.bf16.gmra.mrb[0].mxu0 %v4920
        %v5118 = vpop.f32.mrb[0].mxu0
        %v5119 = vadd.f32 0.0, %v5118
        %v5120 = vpop.f32.mrb[0].mxu0
        %v5121 = vpop.f32.mrb[0].mxu0
        %v5122 = vadd.f32 0.0, %v5121
        %v5123 = vpop.f32.mrb[0].mxu0
        %5124 = vmatprep.mubr.bf16.mxu0 0
        %5125 = vmatmul.mubr.bf16.gmra.mrb[0].mxu0 %v4921
        %v5126 = vpop.f32.mrb[0].mxu0
        %v5127 = vadd.f32 0.0, %v5126
        %v5128 = vpop.f32.mrb[0].mxu0
        %v5129 = vpop.f32.mrb[0].mxu0
        %v5130 = vadd.f32 0.0, %v5129
        %v5131 = vpop.f32.mrb[0].mxu0
        %5132 = vmatprep.mubr.bf16.mxu0 0
        %5133 = vmatmul.mubr.bf16.gmra.mrb[0].mxu0 %v4922
        %v5134 = vpop.f32.mrb[0].mxu0
        %v5135 = vadd.f32 0.0, %v5134
        %v5136 = vpop.f32.mrb[0].mxu0
        %v5137 = vpop.f32.mrb[0].mxu0
        %v5138 = vadd.f32 0.0, %v5137
        %v5139 = vpop.f32.mrb[0].mxu0
        %5140 = vmatprep.mubr.bf16.mxu0 0
        %5141 = vmatmul.mubr.bf16.gmra.mrb[0].mxu0 %v4923
        %v5142 = vpop.f32.mrb[0].mxu0
        %v5143 = vadd.f32 0.0, %v5142
        %v5144 = vpop.f32.mrb[0].mxu0
        %v5145 = vpop.f32.mrb[0].mxu0
        %v5146 = vadd.f32 0.0, %v5145
        %v5147 = vpop.f32.mrb[0].mxu0
        %5148 = vdwg.mxu0
        %v5149 = vadd.f32 %v4395, %v5023
        %v5150 = vadd.f32 %v4396, %v5026
        %v5151 = vadd.f32 %v4397, %v5031
        %v5152 = vadd.f32 %v4398, %v5034
        %v5153 = vadd.f32 %v4399, %v5039
        %v5154 = vadd.f32 %v4400, %v5042
        %v5155 = vadd.f32 %v4401, %v5047
        %v5156 = vadd.f32 %v4402, %v5050
        %v5157 = vadd.f32 %v4403, %v5055
        %v5158 = vadd.f32 %v4404, %v5058
        %v5159 = vadd.f32 %v4405, %v5063
        %v5160 = vadd.f32 %v4406, %v5066
        %v5161 = vadd.f32 %v4407, %v5071
        %v5162 = vadd.f32 %v4408, %v5074
        %v5163 = vadd.f32 %v4409, %v5079
        %v5164 = vadd.f32 %v4410, %v5082
        %v5165 = vadd.f32 %v4411, %v5087
        %v5166 = vadd.f32 %v4412, %v5090
        %v5167 = vadd.f32 %v4413, %v5095
        %v5168 = vadd.f32 %v4414, %v5098
        %v5169 = vadd.f32 %v4415, %v5103
        %v5170 = vadd.f32 %v4416, %v5106
        %v5171 = vadd.f32 %v4417, %v5111
        %v5172 = vadd.f32 %v4418, %v5114
        %v5173 = vadd.f32 %v4419, %v5119
        %v5174 = vadd.f32 %v4420, %v5122
        %v5175 = vadd.f32 %v4421, %v5127
        %v5176 = vadd.f32 %v4422, %v5130
        %v5177 = vadd.f32 %v4423, %v5135
        %v5178 = vadd.f32 %v4424, %v5138
        %v5179 = vadd.f32 %v4425, %v5143
        %v5180 = vadd.f32 %v4426, %v5146
        %v5181 = vld [vmem:[%s4040] sm:$0xe]
        %v5182 = vld [vmem:[%s4040 + $0xc] sm:$0xe]
        %v5183 = vld [vmem:[%s4040 + $0x18] sm:$0xe]
        %v5184 = vld [vmem:[%s4040 + $0x24] sm:$0xe]
        %v5185 = vld [vmem:[%s4040 + $0x30] sm:$0xe]
        %v5186 = vld [vmem:[%s4040 + $0x3c] sm:$0xe]
        %v5187 = vld [vmem:[%s4040 + $0x48] sm:$0xe]
        %v5188 = vld [vmem:[%s4040 + $0x54] sm:$0xe]
        %v5189 = vld [vmem:[%s4040 + $0x60] sm:$0xe]
        %v5190 = vld [vmem:[%s4040 + $0x6c] sm:$0xe]
        %v5191 = vld [vmem:[%s4040 + $0x78] sm:$0xe]
        %v5192 = vld [vmem:[%s4040 + $0x84] sm:$0xe]
        %v5193 = vld [vmem:[%s4040 + $0x90] sm:$0xe]
        %v5194 = vld [vmem:[%s4040 + $0x9c] sm:$0xe]
        %v5195 = vld [vmem:[%s4040 + $0xa8] sm:$0xe]
        %v5196 = vld [vmem:[%s4040 + $0xb4] sm:$0xe]
        %v5245 = vrot.slane %v5181, 5
        %v5246 = vrot.slane %v5245, 4
        %v5247 = vrot.slane %v4428, 5
        %v5248 = vsel %vm1967, %v5246, %v5247
        %v5249 = vrot.slane %v5247, 4
        %v5250 = vrot.slane %v4429, 5
        %v5251 = vsel %vm1967, %v5249, %v5250
        %v5252 = vrot.slane %v5182, 5
        %v5253 = vrot.slane %v5252, 4
        %v5254 = vrot.slane %v4431, 5
        %v5255 = vsel %vm1967, %v5253, %v5254
        %v5256 = vrot.slane %v5254, 4
        %v5257 = vrot.slane %v4432, 5
        %v5258 = vsel %vm1967, %v5256, %v5257
        %v5259 = vrot.slane %v5183, 5
        %v5260 = vrot.slane %v5259, 4
        %v5261 = vrot.slane %v4434, 5
        %v5262 = vsel %vm1967, %v5260, %v5261
        %v5263 = vrot.slane %v5261, 4
        %v5264 = vrot.slane %v4435, 5
        %v5265 = vsel %vm1967, %v5263, %v5264
        %v5266 = vrot.slane %v5184, 5
        %v5267 = vrot.slane %v5266, 4
        %v5268 = vrot.slane %v4437, 5
        %v5269 = vsel %vm1967, %v5267, %v5268
        %v5270 = vrot.slane %v5268, 4
        %v5271 = vrot.slane %v4438, 5
        %v5272 = vsel %vm1967, %v5270, %v5271
        %v5273 = vrot.slane %v5185, 5
        %v5274 = vrot.slane %v5273, 4
        %v5275 = vrot.slane %v4440, 5
        %v5276 = vsel %vm1967, %v5274, %v5275
        %v5277 = vrot.slane %v5275, 4
        %v5278 = vrot.slane %v4441, 5
        %v5279 = vsel %vm1967, %v5277, %v5278
        %v5280 = vrot.slane %v5186, 5
        %v5281 = vrot.slane %v5280, 4
        %v5282 = vrot.slane %v4443, 5
        %v5283 = vsel %vm1967, %v5281, %v5282
        %v5284 = vrot.slane %v5282, 4
        %v5285 = vrot.slane %v4444, 5
        %v5286 = vsel %vm1967, %v5284, %v5285
        %v5287 = vrot.slane %v5187, 5
        %v5288 = vrot.slane %v5287, 4
        %v5289 = vrot.slane %v4446, 5
        %v5290 = vsel %vm1967, %v5288, %v5289
        %v5291 = vrot.slane %v5289, 4
        %v5292 = vrot.slane %v4447, 5
        %v5293 = vsel %vm1967, %v5291, %v5292
        %v5294 = vrot.slane %v5188, 5
        %v5295 = vrot.slane %v5294, 4
        %v5296 = vrot.slane %v4449, 5
        %v5297 = vsel %vm1967, %v5295, %v5296
        %v5298 = vrot.slane %v5296, 4
        %v5299 = vrot.slane %v4450, 5
        %v5300 = vsel %vm1967, %v5298, %v5299
        %v5301 = vrot.slane %v5189, 5
        %v5302 = vrot.slane %v5301, 4
        %v5303 = vrot.slane %v4452, 5
        %v5304 = vsel %vm1967, %v5302, %v5303
        %v5305 = vrot.slane %v5303, 4
        %v5306 = vrot.slane %v4453, 5
        %v5307 = vsel %vm1967, %v5305, %v5306
        %v5308 = vrot.slane %v5190, 5
        %v5309 = vrot.slane %v5308, 4
        %v5310 = vrot.slane %v4455, 5
        %v5311 = vsel %vm1967, %v5309, %v5310
        %v5312 = vrot.slane %v5310, 4
        %v5313 = vrot.slane %v4456, 5
        %v5314 = vsel %vm1967, %v5312, %v5313
        %v5315 = vrot.slane %v5191, 5
        %v5316 = vrot.slane %v5315, 4
        %v5317 = vrot.slane %v4458, 5
        %v5318 = vsel %vm1967, %v5316, %v5317
        %v5319 = vrot.slane %v5317, 4
        %v5320 = vrot.slane %v4459, 5
        %v5321 = vsel %vm1967, %v5319, %v5320
        %v5322 = vrot.slane %v5192, 5
        %v5323 = vrot.slane %v5322, 4
        %v5324 = vrot.slane %v4461, 5
        %v5325 = vsel %vm1967, %v5323, %v5324
        %v5326 = vrot.slane %v5324, 4
        %v5327 = vrot.slane %v4462, 5
        %v5328 = vsel %vm1967, %v5326, %v5327
        %v5329 = vrot.slane %v5193, 5
        %v5330 = vrot.slane %v5329, 4
        %v5331 = vrot.slane %v4464, 5
        %v5332 = vsel %vm1967, %v5330, %v5331
        %v5333 = vrot.slane %v5331, 4
        %v5334 = vrot.slane %v4465, 5
        %v5335 = vsel %vm1967, %v5333, %v5334
        %v5336 = vrot.slane %v5194, 5
        %v5337 = vrot.slane %v5336, 4
        %v5338 = vrot.slane %v4467, 5
        %v5339 = vsel %vm1967, %v5337, %v5338
        %v5340 = vrot.slane %v5338, 4
        %v5341 = vrot.slane %v4468, 5
        %v5342 = vsel %vm1967, %v5340, %v5341
        %v5343 = vrot.slane %v5195, 5
        %v5344 = vrot.slane %v5343, 4
        %v5345 = vrot.slane %v4470, 5
        %v5346 = vsel %vm1967, %v5344, %v5345
        %v5347 = vrot.slane %v5345, 4
        %v5348 = vrot.slane %v4471, 5
        %v5349 = vsel %vm1967, %v5347, %v5348
        %v5350 = vrot.slane %v5196, 5
        %v5351 = vrot.slane %v5350, 4
        %v5352 = vrot.slane %v4473, 5
        %v5353 = vsel %vm1967, %v5351, %v5352
        %v5354 = vrot.slane %v5352, 4
        %v5355 = vrot.slane %v4474, 5
        %v5356 = vsel %vm1967, %v5354, %v5355
        %s5357 = scalar_lea.vmem [#allocation6], 512
        %v5358 = vld [vmem:[%s5357] sm:$0xf]
        %v5359 = vld [vmem:[%s5357 + $0x4] sm:$0xf]
        %v5360 = vld [vmem:[%s5357 + $0x8] sm:$0xf]
        %v5361 = vld [vmem:[%s5357 + $0xc] sm:$0xf]
        %v5362 = vld [vmem:[%s5357 + $0x10] sm:$0xf]
        %v5363 = vld [vmem:[%s5357 + $0x14] sm:$0xf]
        %v5364 = vld [vmem:[%s5357 + $0x18] sm:$0xf]
        %v5365 = vld [vmem:[%s5357 + $0x1c] sm:$0xf]
        %v5366 = vld [vmem:[%s5357 + $0x20] sm:$0xf]
        %v5367 = vld [vmem:[%s5357 + $0x24] sm:$0xf]
        %v5368 = vld [vmem:[%s5357 + $0x28] sm:$0xf]
        %v5369 = vld [vmem:[%s5357 + $0x2c] sm:$0xf]
        %v5370 = vld [vmem:[%s5357 + $0x30] sm:$0xf]
        %v5371 = vld [vmem:[%s5357 + $0x34] sm:$0xf]
        %v5372 = vld [vmem:[%s5357 + $0x38] sm:$0xf]
        %v5373 = vld [vmem:[%s5357 + $0x3c] sm:$0xf]
        %v5374 = vunpack.c.l.b16 %v5248
        %v5375 = vunpack.c.l.b16 %v5251
        %v5376 = vunpack.c.l.b16 %v5255
        %v5377 = vunpack.c.l.b16 %v5258
        %v5378 = vunpack.c.l.b16 %v5262
        %v5379 = vunpack.c.l.b16 %v5265
        %v5380 = vunpack.c.l.b16 %v5269
        %v5381 = vunpack.c.l.b16 %v5272
        %v5382 = vunpack.c.l.b16 %v5276
        %v5383 = vunpack.c.l.b16 %v5279
        %v5384 = vunpack.c.l.b16 %v5283
        %v5385 = vunpack.c.l.b16 %v5286
        %v5386 = vunpack.c.l.b16 %v5290
        %v5387 = vunpack.c.l.b16 %v5293
        %v5388 = vunpack.c.l.b16 %v5297
        %v5389 = vunpack.c.l.b16 %v5300
        %v5390 = vunpack.c.l.b16 %v5304
        %v5391 = vunpack.c.l.b16 %v5307
        %v5392 = vunpack.c.l.b16 %v5311
        %v5393 = vunpack.c.l.b16 %v5314
        %v5394 = vunpack.c.l.b16 %v5318
        %v5395 = vunpack.c.l.b16 %v5321
        %v5396 = vunpack.c.l.b16 %v5325
        %v5397 = vunpack.c.l.b16 %v5328
        %v5398 = vunpack.c.l.b16 %v5332
        %v5399 = vunpack.c.l.b16 %v5335
        %v5400 = vunpack.c.l.b16 %v5339
        %v5401 = vunpack.c.l.b16 %v5342
        %v5402 = vunpack.c.l.b16 %v5346
        %v5403 = vunpack.c.l.b16 %v5349
        %v5404 = vunpack.c.l.b16 %v5353
        %v5405 = vunpack.c.l.b16 %v5356
        %v5406 = vpack.c.b16 %v5375, %v5374
        %v5407 = vpack.c.b16 %v5377, %v5376
        %v5408 = vpack.c.b16 %v5379, %v5378
        %v5409 = vpack.c.b16 %v5381, %v5380
        %v5410 = vpack.c.b16 %v5383, %v5382
        %v5411 = vpack.c.b16 %v5385, %v5384
        %v5412 = vpack.c.b16 %v5387, %v5386
        %v5413 = vpack.c.b16 %v5389, %v5388
        %v5414 = vpack.c.b16 %v5391, %v5390
        %v5415 = vpack.c.b16 %v5393, %v5392
        %v5416 = vpack.c.b16 %v5395, %v5394
        %v5417 = vpack.c.b16 %v5397, %v5396
        %v5418 = vpack.c.b16 %v5399, %v5398
        %v5419 = vpack.c.b16 %v5401, %v5400
        %v5420 = vpack.c.b16 %v5403, %v5402
        %v5421 = vpack.c.b16 %v5405, %v5404
        %v5454 = vunpack.c.l.b16 %v5358
        %v5455 = vunpack.c.l.b16 %v5359
        %v5456 = vunpack.c.l.b16 %v5360
        %v5457 = vunpack.c.l.b16 %v5361
        %v5458 = vunpack.c.l.b16 %v5362
        %v5459 = vunpack.c.l.b16 %v5363
        %v5460 = vunpack.c.l.b16 %v5364
        %v5461 = vunpack.c.l.b16 %v5365
        %v5462 = vunpack.c.l.b16 %v5366
        %v5463 = vunpack.c.l.b16 %v5367
        %v5464 = vunpack.c.l.b16 %v5368
        %v5465 = vunpack.c.l.b16 %v5369
        %v5466 = vunpack.c.l.b16 %v5370
        %v5467 = vunpack.c.l.b16 %v5371
        %v5468 = vunpack.c.l.b16 %v5372
        %v5469 = vunpack.c.l.b16 %v5373
        %v5470 = vpack.c.b16 %v5455, %v5454
        %v5471 = vpack.c.b16 %v5457, %v5456
        %v5472 = vpack.c.b16 %v5459, %v5458
        %v5473 = vpack.c.b16 %v5461, %v5460
        %v5474 = vpack.c.b16 %v5463, %v5462
        %v5475 = vpack.c.b16 %v5465, %v5464
        %v5476 = vpack.c.b16 %v5467, %v5466
        %v5477 = vpack.c.b16 %v5469, %v5468
        %5486 = vmatprep.subr.bf16.mxu0 0
        %5487 = vmatpush1.bf16.msra.mxu0 %v5470
        %5488 = vmatprep.subr.bf16.mxu0 0
        %5489 = vmatpush1.bf16.msra.mxu0 %v5471
        %5490 = vmatprep.subr.bf16.mxu0 0
        %5491 = vmatpush1.bf16.msra.mxu0 %v5472
        %5492 = vmatprep.subr.bf16.mxu0 0
        %5493 = vmatpush1.bf16.msra.mxu0 %v5473
        %5494 = vmatprep.subr.bf16.mxu0 0
        %5495 = vmatpush1.bf16.msra.mxu0 %v5474
        %5496 = vmatprep.subr.bf16.mxu0 0
        %5497 = vmatpush1.bf16.msra.mxu0 %v5475
        %5498 = vmatprep.subr.bf16.mxu0 0
        %5499 = vmatpush1.bf16.msra.mxu0 %v5476
        %5500 = vmatprep.subr.bf16.mxu0 0
        %5501 = vmatpush1.bf16.msra.mxu0 %v5477
        %5502 = vmatprep.subr.bf16.mxu0 0
        %5503 = vmatpush1.bf16.msra.mxu0 0
        %5504 = vmatprep.subr.bf16.mxu0 0
        %5505 = vmatpush1.bf16.msra.mxu0 0
        %5506 = vmatprep.subr.bf16.mxu0 0
        %5507 = vmatpush1.bf16.msra.mxu0 0
        %5508 = vmatprep.subr.bf16.mxu0 0
        %5509 = vmatpush1.bf16.msra.mxu0 0
        %5510 = vmatprep.subr.bf16.mxu0 0
        %5511 = vmatpush1.bf16.msra.mxu0 0
        %5512 = vmatprep.subr.bf16.mxu0 0
        %5513 = vmatpush1.bf16.msra.mxu0 0
        %5514 = vmatprep.subr.bf16.mxu0 0
        %5515 = vmatpush1.bf16.msra.mxu0 0
        %5516 = vmatprep.subr.bf16.mxu0 0
        %5517 = vmatpush1.bf16.msra.mxu0 0
        %5518 = vmatprep.mubr.bf16.mxu0 0
        %5519 = vmatmul.mubr.bf16.gmra.mrb[0].mxu0 %v5406
        %v5520 = vpop.f32.mrb[0].mxu0
        %v5521 = vadd.f32 0.0, %v5520
        %v5522 = vpop.f32.mrb[0].mxu0
        %v5523 = vpop.f32.mrb[0].mxu0
        %v5524 = vadd.f32 0.0, %v5523
        %v5525 = vpop.f32.mrb[0].mxu0
        %5526 = vmatprep.mubr.bf16.mxu0 0
        %5527 = vmatmul.mubr.bf16.gmra.mrb[0].mxu0 %v5407
        %v5528 = vpop.f32.mrb[0].mxu0
        %v5529 = vadd.f32 0.0, %v5528
        %v5530 = vpop.f32.mrb[0].mxu0
        %v5531 = vpop.f32.mrb[0].mxu0
        %v5532 = vadd.f32 0.0, %v5531
        %v5533 = vpop.f32.mrb[0].mxu0
        %5534 = vmatprep.mubr.bf16.mxu0 0
        %5535 = vmatmul.mubr.bf16.gmra.mrb[0].mxu0 %v5408
        %v5536 = vpop.f32.mrb[0].mxu0
        %v5537 = vadd.f32 0.0, %v5536
        %v5538 = vpop.f32.mrb[0].mxu0
        %v5539 = vpop.f32.mrb[0].mxu0
        %v5540 = vadd.f32 0.0, %v5539
        %v5541 = vpop.f32.mrb[0].mxu0
        %5542 = vmatprep.mubr.bf16.mxu0 0
        %5543 = vmatmul.mubr.bf16.gmra.mrb[0].mxu0 %v5409
        %v5544 = vpop.f32.mrb[0].mxu0
        %v5545 = vadd.f32 0.0, %v5544
        %v5546 = vpop.f32.mrb[0].mxu0
        %v5547 = vpop.f32.mrb[0].mxu0
        %v5548 = vadd.f32 0.0, %v5547
        %v5549 = vpop.f32.mrb[0].mxu0
        %5550 = vmatprep.mubr.bf16.mxu0 0
        %5551 = vmatmul.mubr.bf16.gmra.mrb[0].mxu0 %v5410
        %v5552 = vpop.f32.mrb[0].mxu0
        %v5553 = vadd.f32 0.0, %v5552
        %v5554 = vpop.f32.mrb[0].mxu0
        %v5555 = vpop.f32.mrb[0].mxu0
        %v5556 = vadd.f32 0.0, %v5555
        %v5557 = vpop.f32.mrb[0].mxu0
        %5558 = vmatprep.mubr.bf16.mxu0 0
        %5559 = vmatmul.mubr.bf16.gmra.mrb[0].mxu0 %v5411
        %v5560 = vpop.f32.mrb[0].mxu0
        %v5561 = vadd.f32 0.0, %v5560
        %v5562 = vpop.f32.mrb[0].mxu0
        %v5563 = vpop.f32.mrb[0].mxu0
        %v5564 = vadd.f32 0.0, %v5563
        %v5565 = vpop.f32.mrb[0].mxu0
        %5566 = vmatprep.mubr.bf16.mxu0 0
        %5567 = vmatmul.mubr.bf16.gmra.mrb[0].mxu0 %v5412
        %v5568 = vpop.f32.mrb[0].mxu0
        %v5569 = vadd.f32 0.0, %v5568
        %v5570 = vpop.f32.mrb[0].mxu0
        %v5571 = vpop.f32.mrb[0].mxu0
        %v5572 = vadd.f32 0.0, %v5571
        %v5573 = vpop.f32.mrb[0].mxu0
        %5574 = vmatprep.mubr.bf16.mxu0 0
        %5575 = vmatmul.mubr.bf16.gmra.mrb[0].mxu0 %v5413
        %v5576 = vpop.f32.mrb[0].mxu0
        %v5577 = vadd.f32 0.0, %v5576
        %v5578 = vpop.f32.mrb[0].mxu0
        %v5579 = vpop.f32.mrb[0].mxu0
        %v5580 = vadd.f32 0.0, %v5579
        %v5581 = vpop.f32.mrb[0].mxu0
        %5582 = vmatprep.mubr.bf16.mxu0 0
        %5583 = vmatmul.mubr.bf16.gmra.mrb[0].mxu0 %v5414
        %v5584 = vpop.f32.mrb[0].mxu0
        %v5585 = vadd.f32 0.0, %v5584
        %v5586 = vpop.f32.mrb[0].mxu0
        %v5587 = vpop.f32.mrb[0].mxu0
        %v5588 = vadd.f32 0.0, %v5587
        %v5589 = vpop.f32.mrb[0].mxu0
        %5590 = vmatprep.mubr.bf16.mxu0 0
        %5591 = vmatmul.mubr.bf16.gmra.mrb[0].mxu0 %v5415
        %v5592 = vpop.f32.mrb[0].mxu0
        %v5593 = vadd.f32 0.0, %v5592
        %v5594 = vpop.f32.mrb[0].mxu0
        %v5595 = vpop.f32.mrb[0].mxu0
        %v5596 = vadd.f32 0.0, %v5595
        %v5597 = vpop.f32.mrb[0].mxu0
        %5598 = vmatprep.mubr.bf16.mxu0 0
        %5599 = vmatmul.mubr.bf16.gmra.mrb[0].mxu0 %v5416
        %v5600 = vpop.f32.mrb[0].mxu0
        %v5601 = vadd.f32 0.0, %v5600
        %v5602 = vpop.f32.mrb[0].mxu0
        %v5603 = vpop.f32.mrb[0].mxu0
        %v5604 = vadd.f32 0.0, %v5603
        %v5605 = vpop.f32.mrb[0].mxu0
        %5606 = vmatprep.mubr.bf16.mxu0 0
        %5607 = vmatmul.mubr.bf16.gmra.mrb[0].mxu0 %v5417
        %v5608 = vpop.f32.mrb[0].mxu0
        %v5609 = vadd.f32 0.0, %v5608
        %v5610 = vpop.f32.mrb[0].mxu0
        %v5611 = vpop.f32.mrb[0].mxu0
        %v5612 = vadd.f32 0.0, %v5611
        %v5613 = vpop.f32.mrb[0].mxu0
        %5614 = vmatprep.mubr.bf16.mxu0 0
        %5615 = vmatmul.mubr.bf16.gmra.mrb[0].mxu0 %v5418
        %v5616 = vpop.f32.mrb[0].mxu0
        %v5617 = vadd.f32 0.0, %v5616
        %v5618 = vpop.f32.mrb[0].mxu0
        %v5619 = vpop.f32.mrb[0].mxu0
        %v5620 = vadd.f32 0.0, %v5619
        %v5621 = vpop.f32.mrb[0].mxu0
        %5622 = vmatprep.mubr.bf16.mxu0 0
        %5623 = vmatmul.mubr.bf16.gmra.mrb[0].mxu0 %v5419
        %v5624 = vpop.f32.mrb[0].mxu0
        %v5625 = vadd.f32 0.0, %v5624
        %v5626 = vpop.f32.mrb[0].mxu0
        %v5627 = vpop.f32.mrb[0].mxu0
        %v5628 = vadd.f32 0.0, %v5627
        %v5629 = vpop.f32.mrb[0].mxu0
        %5630 = vmatprep.mubr.bf16.mxu0 0
        %5631 = vmatmul.mubr.bf16.gmra.mrb[0].mxu0 %v5420
        %v5632 = vpop.f32.mrb[0].mxu0
        %v5633 = vadd.f32 0.0, %v5632
        %v5634 = vpop.f32.mrb[0].mxu0
        %v5635 = vpop.f32.mrb[0].mxu0
        %v5636 = vadd.f32 0.0, %v5635
        %v5637 = vpop.f32.mrb[0].mxu0
        %5638 = vmatprep.mubr.bf16.mxu0 0
        %5639 = vmatmul.mubr.bf16.gmra.mrb[0].mxu0 %v5421
        %v5640 = vpop.f32.mrb[0].mxu0
        %v5641 = vadd.f32 0.0, %v5640
        %v5642 = vpop.f32.mrb[0].mxu0
        %v5643 = vpop.f32.mrb[0].mxu0
        %v5644 = vadd.f32 0.0, %v5643
        %v5645 = vpop.f32.mrb[0].mxu0
        %5646 = vdwg.mxu0
        %v5647 = vadd.f32 %v5149, %v5521
        %v5648 = vadd.f32 %v5150, %v5524
        %v5649 = vadd.f32 %v5151, %v5529
        %v5650 = vadd.f32 %v5152, %v5532
        %v5651 = vadd.f32 %v5153, %v5537
        %v5652 = vadd.f32 %v5154, %v5540
        %v5653 = vadd.f32 %v5155, %v5545
        %v5654 = vadd.f32 %v5156, %v5548
        %v5655 = vadd.f32 %v5157, %v5553
        %v5656 = vadd.f32 %v5158, %v5556
        %v5657 = vadd.f32 %v5159, %v5561
        %v5658 = vadd.f32 %v5160, %v5564
        %v5659 = vadd.f32 %v5161, %v5569
        %v5660 = vadd.f32 %v5162, %v5572
        %v5661 = vadd.f32 %v5163, %v5577
        %v5662 = vadd.f32 %v5164, %v5580
        %v5663 = vadd.f32 %v5165, %v5585
        %v5664 = vadd.f32 %v5166, %v5588
        %v5665 = vadd.f32 %v5167, %v5593
        %v5666 = vadd.f32 %v5168, %v5596
        %v5667 = vadd.f32 %v5169, %v5601
        %v5668 = vadd.f32 %v5170, %v5604
        %v5669 = vadd.f32 %v5171, %v5609
        %v5670 = vadd.f32 %v5172, %v5612
        %v5671 = vadd.f32 %v5173, %v5617
        %v5672 = vadd.f32 %v5174, %v5620
        %v5673 = vadd.f32 %v5175, %v5625
        %v5674 = vadd.f32 %v5176, %v5628
        %v5675 = vadd.f32 %v5177, %v5633
        %v5676 = vadd.f32 %v5178, %v5636
        %v5677 = vadd.f32 %v5179, %v5641
        %v5678 = vadd.f32 %v5180, %v5644
        %5679 = vst [vmem:[%s234] sm:$0xff] %v5647
        %5680 = vst [vmem:[%s234 + $0x8] sm:$0xff] %v5648
        %5681 = vst [vmem:[%s234 + $0x10] sm:$0xff] %v5649
        %5682 = vst [vmem:[%s234 + $0x18] sm:$0xff] %v5650
        %5683 = vst [vmem:[%s234 + $0x20] sm:$0xff] %v5651
        %5684 = vst [vmem:[%s234 + $0x28] sm:$0xff] %v5652
        %5685 = vst [vmem:[%s234 + $0x30] sm:$0xff] %v5653
        %5686 = vst [vmem:[%s234 + $0x38] sm:$0xff] %v5654
        %5687 = vst [vmem:[%s234 + $0x40] sm:$0xff] %v5655
        %5688 = vst [vmem:[%s234 + $0x48] sm:$0xff] %v5656
        %5689 = vst [vmem:[%s234 + $0x50] sm:$0xff] %v5657
        %5690 = vst [vmem:[%s234 + $0x58] sm:$0xff] %v5658
        %5691 = vst [vmem:[%s234 + $0x60] sm:$0xff] %v5659
        %5692 = vst [vmem:[%s234 + $0x68] sm:$0xff] %v5660
        %5693 = vst [vmem:[%s234 + $0x70] sm:$0xff] %v5661
        %5694 = vst [vmem:[%s234 + $0x78] sm:$0xff] %v5662
        %5695 = vst [vmem:[%s234 + $0x80] sm:$0xff] %v5663
        %5696 = vst [vmem:[%s234 + $0x88] sm:$0xff] %v5664
        %5697 = vst [vmem:[%s234 + $0x90] sm:$0xff] %v5665
        %5698 = vst [vmem:[%s234 + $0x98] sm:$0xff] %v5666
        %5699 = vst [vmem:[%s234 + $0xa0] sm:$0xff] %v5667
        %5700 = vst [vmem:[%s234 + $0xa8] sm:$0xff] %v5668
        %5701 = vst [vmem:[%s234 + $0xb0] sm:$0xff] %v5669
        %5702 = vst [vmem:[%s234 + $0xb8] sm:$0xff] %v5670
        %5703 = vst [vmem:[%s234 + $0xc0] sm:$0xff] %v5671
        %5704 = vst [vmem:[%s234 + $0xc8] sm:$0xff] %v5672
        %5705 = vst [vmem:[%s234 + $0xd0] sm:$0xff] %v5673
        %5706 = vst [vmem:[%s234 + $0xd8] sm:$0xff] %v5674
        %5707 = vst [vmem:[%s234 + $0xe0] sm:$0xff] %v5675
        %5708 = vst [vmem:[%s234 + $0xe8] sm:$0xff] %v5676
        %5709 = vst [vmem:[%s234 + $0xf0] sm:$0xff] %v5677
        %5710 = vst [vmem:[%s234 + $0xf8] sm:$0xff] %v5678
        %v5711 = vadd.f32 %v5647, %v5648
        %v5712 = vadd.f32 %v5711, %v5649
        %v5713 = vadd.f32 %v5712, %v5650
        %v5714 = vadd.f32 %v5713, %v5651
        %v5715 = vadd.f32 %v5714, %v5652
        %v5716 = vadd.f32 %v5715, %v5653
        %v5717 = vadd.f32 %v5716, %v5654
        %v5718 = vadd.f32 %v5717, %v5655
        %v5719 = vadd.f32 %v5718, %v5656
        %v5720 = vadd.f32 %v5719, %v5657
        %v5721 = vadd.f32 %v5720, %v5658
        %v5722 = vadd.f32 %v5721, %v5659
        %v5723 = vadd.f32 %v5722, %v5660
        %v5724 = vadd.f32 %v5723, %v5661
        %v5725 = vadd.f32 %v5724, %v5662
        %v5726 = vadd.f32 %v5725, %v5663
        %v5727 = vadd.f32 %v5726, %v5664
        %v5728 = vadd.f32 %v5727, %v5665
        %v5729 = vadd.f32 %v5728, %v5666
        %v5730 = vadd.f32 %v5729, %v5667
        %v5731 = vadd.f32 %v5730, %v5668
        %v5732 = vadd.f32 %v5731, %v5669
        %v5733 = vadd.f32 %v5732, %v5670
        %v5734 = vadd.f32 %v5733, %v5671
        %v5735 = vadd.f32 %v5734, %v5672
        %v5736 = vadd.f32 %v5735, %v5673
        %v5737 = vadd.f32 %v5736, %v5674
        %v5738 = vadd.f32 %v5737, %v5675
        %v5739 = vadd.f32 %v5738, %v5676
        %v5740 = vadd.f32 %v5739, %v5677
        %v5741 = vadd.f32 %v5740, %v5678
        %v5742 = vrot.slane %v5741, 4
        %v5743 = vadd.f32 %v5741, %v5742
        %v5744 = vrot.slane %v5743, 2
        %v5745 = vadd.f32 %v5743, %v5744
        %v5746 = vrot.slane %v5745, 1
        %v5747 = vadd.f32 %v5745, %v5746
        %5748 = vst [vmem:[%s240] sm:$0x1] %v5747
        %v5749 = vmul.f32 %v5647, %v5647
        %v5750 = vmul.f32 %v5648, %v5648
        %v5751 = vmul.f32 %v5649, %v5649
        %v5752 = vmul.f32 %v5650, %v5650
        %v5753 = vmul.f32 %v5651, %v5651
        %v5754 = vmul.f32 %v5652, %v5652
        %v5755 = vmul.f32 %v5653, %v5653
        %v5756 = vmul.f32 %v5654, %v5654
        %v5757 = vmul.f32 %v5655, %v5655
        %v5758 = vmul.f32 %v5656, %v5656
        %v5759 = vmul.f32 %v5657, %v5657
        %v5760 = vmul.f32 %v5658, %v5658
        %v5761 = vmul.f32 %v5659, %v5659
        %v5762 = vmul.f32 %v5660, %v5660
        %v5763 = vmul.f32 %v5661, %v5661
        %v5764 = vmul.f32 %v5662, %v5662
        %v5765 = vmul.f32 %v5663, %v5663
        %v5766 = vmul.f32 %v5664, %v5664
        %v5767 = vmul.f32 %v5665, %v5665
        %v5768 = vmul.f32 %v5666, %v5666
        %v5769 = vmul.f32 %v5667, %v5667
        %v5770 = vmul.f32 %v5668, %v5668
        %v5771 = vmul.f32 %v5669, %v5669
        %v5772 = vmul.f32 %v5670, %v5670
        %v5773 = vmul.f32 %v5671, %v5671
        %v5774 = vmul.f32 %v5672, %v5672
        %v5775 = vmul.f32 %v5673, %v5673
        %v5776 = vmul.f32 %v5674, %v5674
        %v5777 = vmul.f32 %v5675, %v5675
        %v5778 = vmul.f32 %v5676, %v5676
        %v5779 = vmul.f32 %v5677, %v5677
        %v5780 = vmul.f32 %v5678, %v5678
        %v5781 = vadd.f32 %v5749, %v5750
        %v5782 = vadd.f32 %v5781, %v5751
        %v5783 = vadd.f32 %v5782, %v5752
        %v5784 = vadd.f32 %v5783, %v5753
        %v5785 = vadd.f32 %v5784, %v5754
        %v5786 = vadd.f32 %v5785, %v5755
        %v5787 = vadd.f32 %v5786, %v5756
        %v5788 = vadd.f32 %v5787, %v5757
        %v5789 = vadd.f32 %v5788, %v5758
        %v5790 = vadd.f32 %v5789, %v5759
        %v5791 = vadd.f32 %v5790, %v5760
        %v5792 = vadd.f32 %v5791, %v5761
        %v5793 = vadd.f32 %v5792, %v5762
        %v5794 = vadd.f32 %v5793, %v5763
        %v5795 = vadd.f32 %v5794, %v5764
        %v5796 = vadd.f32 %v5795, %v5765
        %v5797 = vadd.f32 %v5796, %v5766
        %v5798 = vadd.f32 %v5797, %v5767
        %v5799 = vadd.f32 %v5798, %v5768
        %v5800 = vadd.f32 %v5799, %v5769
        %v5801 = vadd.f32 %v5800, %v5770
        %v5802 = vadd.f32 %v5801, %v5771
        %v5803 = vadd.f32 %v5802, %v5772
        %v5804 = vadd.f32 %v5803, %v5773
        %v5805 = vadd.f32 %v5804, %v5774
        %v5806 = vadd.f32 %v5805, %v5775
        %v5807 = vadd.f32 %v5806, %v5776
        %v5808 = vadd.f32 %v5807, %v5777
        %v5809 = vadd.f32 %v5808, %v5778
        %v5810 = vadd.f32 %v5809, %v5779
        %v5811 = vadd.f32 %v5810, %v5780
        %v5812 = vrot.slane %v5811, 4
        %v5813 = vadd.f32 %v5811, %v5812
        %v5814 = vrot.slane %v5813, 2
        %v5815 = vadd.f32 %v5813, %v5814
        %v5816 = vrot.slane %v5815, 1
        %v5817 = vadd.f32 %v5815, %v5816
        %5818 = vst [vmem:[%s246] sm:$0x1] %v5817
        %s5819 = sand.u32 %s81, 1
        %s5820 = scalar_lea.sflag [#allocation5], %s5819
        %s5821 = sand.u32 %s81, 1
        %s5822 = smul.addr %s5821, 256
        %s5823 = scalar_lea.vmem [#allocation8], %s5822
        %s5824 = sand.u32 %s26, 1
        %s5825 = scalar_lea.sflag [#allocation10], %s5824
        %s5826 = sand.u32 %s107, 1
        %s5827 = scalar_lea.vmem [#allocation9], %s5826
        %s5828 = sand.u32 %s26, 1
        %s5829 = scalar_lea.sflag [#allocation10], %s5828
        %s5830 = sand.u32 %s133, 1
        %s5831 = scalar_lea.vmem [#allocation11], %s5830
        // Predicated region
        $region37: #{tpu_custom_call.1} parent=27 // pred_check
          %p5832 = pneg %p91
        $region38: #{tpu_custom_call.1} parent=27 // pred_check_branch
          %5834 = sbr.rel (%p5832) target = $region40
        $region39: #{tpu_custom_call.1} parent=27 // pred_region
          %s5836 = ssub.s32 4096, 4096
          %5837 = vsyncadd %s5820, %s5836
          %s5838 = smul.addr %s26, 32
          %s5839 = smul.addr %s5838, 128
          %s5840 = scalar_lea.hbm %s2, %s5839
          %s5841 = sshll.u32 %s5823, 4
          %s5842 = int_to_ptr.vmem [resolvable:$true] %s5841
          %5847 = dma.vmem_to_hbm [thread:$0]  %s5842, 4096, %s5840, %s5820, 128, 128, 8
        $region40: #{tpu_custom_call.1} parent=27 // pred_fallthru
          _
        // Predicated region
        $region41: #{tpu_custom_call.1} parent=27 // pred_check
          %p5848 = pneg %p117
        $region42: #{tpu_custom_call.1} parent=27 // pred_check_branch
          %5850 = sbr.rel (%p5848) target = $region44
        $region43: #{tpu_custom_call.1} parent=27 // pred_region
          %s5852 = ssub.s32 16, 16
          %5853 = vsyncadd %s5825, %s5852
          %s5854 = smul.addr %s26, 16
          %s5855 = scalar_lea.hbm %s3, %s5854
          %s5857 = sshll.u32 %s5827, 4
          %s5858 = int_to_ptr.vmem [resolvable:$true] %s5857
          %5860 = dma.vmem_to_hbm [thread:$0]  %s5858, 16, %s5855, %s5825
        $region44: #{tpu_custom_call.1} parent=27 // pred_fallthru
          _
        // Predicated region
        $region45: #{tpu_custom_call.1} parent=27 // pred_check
          %p5861 = pneg %p143
        $region46: #{tpu_custom_call.1} parent=27 // pred_check_branch
          %5863 = sbr.rel (%p5861) target = $region48
        $region47: #{tpu_custom_call.1} parent=27 // pred_region
          %s5865 = ssub.s32 16, 16
          %5866 = vsyncadd %s5829, %s5865
          %s5867 = smul.addr %s26, 16
          %s5868 = scalar_lea.hbm %s4, %s5867
          %s5870 = sshll.u32 %s5831, 4
          %s5871 = int_to_ptr.vmem [resolvable:$true] %s5870
          %5873 = dma.vmem_to_hbm [thread:$0]  %s5871, 16, %s5868, %s5829
        $region48: #{tpu_custom_call.1} parent=27 // pred_fallthru
          _
      $region28: #{tpu_custom_call.1} parent=5 // pred_fallthru
        _
      %p5874 = scmp.le.s32.totalorder 2, %s21
      // Predicated region
      $region49: #{tpu_custom_call.1} parent=5 // pred_check
        %p5875 = pneg %p5874
      $region50: #{tpu_custom_call.1} parent=5 // pred_check_branch
        %5877 = sbr.rel (%p5875) target = $region52
      $region51: #{tpu_custom_call.1} parent=5 // pred_region
        %s5878 = ssub.s32 %s21, 2
        // Predicated region
        $region53: #{tpu_custom_call.1} parent=51 // pred_check
          %p5879 = pneg %p97
        $region54: #{tpu_custom_call.1} parent=51 // pred_check_branch
          %5881 = sbr.rel (%p5879) target = $region56
        $region55: #{tpu_custom_call.1} parent=51 // pred_region
          %s5882 = sand.u32 %s82, 1
          %s5883 = scalar_lea.sflag [#allocation5], %s5882
          %s5884 = sand.u32 %s82, 1
          %s5885 = smul.addr %s5884, 256
          %s5886 = scalar_lea.vmem [#allocation8], %s5885
          %5887 = dma.done %s5883, 4096
        $region56: #{tpu_custom_call.1} parent=51 // pred_fallthru
          _
        // Predicated region
        $region57: #{tpu_custom_call.1} parent=51 // pred_check
          %p5888 = pneg %p123
        $region58: #{tpu_custom_call.1} parent=51 // pred_check_branch
          %5890 = sbr.rel (%p5888) target = $region60
        $region59: #{tpu_custom_call.1} parent=51 // pred_region
          %s5891 = sand.u32 %s27, 1
          %s5892 = scalar_lea.sflag [#allocation10], %s5891
          %s5893 = sand.u32 %s108, 1
          %s5894 = scalar_lea.vmem [#allocation9], %s5893
          %5895 = dma.done %s5892, 16
        $region60: #{tpu_custom_call.1} parent=51 // pred_fallthru
          _
        // Predicated region
        $region61: #{tpu_custom_call.1} parent=51 // pred_check
          %p5896 = pneg %p149
        $region62: #{tpu_custom_call.1} parent=51 // pred_check_branch
          %5898 = sbr.rel (%p5896) target = $region64
        $region63: #{tpu_custom_call.1} parent=51 // pred_region
          %s5899 = sand.u32 %s27, 1
          %s5900 = scalar_lea.sflag [#allocation10], %s5899
          %s5901 = sand.u32 %s134, 1
          %s5902 = scalar_lea.vmem [#allocation11], %s5901
          %5903 = dma.done %s5900, 16
        $region64: #{tpu_custom_call.1} parent=51 // pred_fallthru
          _
      $region52: #{tpu_custom_call.1} parent=5 // pred_fallthru
        _
    $region6: #{tpu_custom_call.1} parent=1 // loop_footer
      %s25 = sadd.s32 1, %s21
    $region7: #{tpu_custom_call.1} parent=1 // loop_footer_branch
      %20 = sbr.rel target = $region3
    $region8: #{tpu_custom_call.1} parent=1 // loop_exit
      _
    %5904 = vsyncpa [#allocation4], 1
    %s5905 = scalar_lea.sflag [#allocation4], 1
    %5906 = vsyncpa %s5905, 1
    %5907 = vsyncpa [#allocation7], 1
    %5908 = vsyncpa [#allocation5], 1
    %s5909 = scalar_lea.sflag [#allocation5], 1
    %5910 = vsyncpa %s5909, 1
    %5911 = vsyncpa [#allocation10], 1
    %s5912 = scalar_lea.sflag [#allocation10], 1
    %5913 = vsyncpa %s5912, 1

</llo_original>
